<compile_context>
chip_gen: v6e
topology: v6e:2x2x1
jax: 0.10.0
libtpu: 0.0.40
codegen_flags: <defaults>
</compile_context>

<pallas_src>
import functools

import jax
import jax.numpy as jnp
from jax import lax
from jax.experimental import pallas as pl
from jax.experimental.pallas import tpu as pltpu

K = 7          # kernel size
PAD = 3        # padding
CIN = 3        # in channels
COUT = 3       # out channels


def _round_up(v, m):
    return (v + m - 1) // m * m


def _roll(x, shift, axis):
    """jnp.roll-style static rotate on the XLU; skips no-op shifts."""
    size = x.shape[axis]
    shift = shift % size
    if shift == 0:
        return x
    return pltpu.roll(x, shift, axis=axis)


def _conv_tanh_kernel(w_ref, b_ref, x_ref, o_ref, *, TS, WPL):
    # w_ref : SMEM (COUT*CIN*K*K,)        conv weights, OIHW row-major, flat
    # b_ref : SMEM (COUT,)                bias
    # x_ref : VMEM (1, CIN, HALLOC, WPL)  zero-padded input, one image
    # o_ref : VMEM (1, COUT, TS, WPL)     one lane-dense output row strip
    #
    # out[r, j] = sum_{ci,kh,kw} w[co,ci,kh,kw] * xpad[ci, r + kh, j + kw]
    # Lane wrap of the kw roll only touches columns >= W (pad / junk, sliced
    # off by the wrapper); sublane wrap never reaches rows < TS because the
    # loaded strip has TS + 8 >= TS + (K - 1) rows.
    s = pl.program_id(1)
    row0 = pl.multiple_of(s * TS, 8)          # sublane-aligned strip start

    acc = [None] * COUT
    for ci in range(CIN):
        # Aligned (TS+8, WPL) load of this channel's strip (rows row0..row0+TS+7).
        xs = x_ref[0, ci, pl.ds(row0, TS + 8), :]
        # 7 kh sublane shifts, sliced to the TS output rows (free aligned slice).
        xrow = [_roll(xs, -kh, axis=0)[:TS] for kh in range(K)]
        for co in range(COUT):
            wbase = co * CIN * K * K + ci * K * K
            for kw in range(K):
                # Partial over kh: scalar * plane FMAs on exactly TS rows.
                q = w_ref[wbase + kw] * xrow[0]
                for kh in range(1, K):
                    q = q + w_ref[wbase + kh * K + kw] * xrow[kh]
                contrib = _roll(q, -kw, axis=1)          # kw lane shift (XLU)
                acc[co] = contrib if acc[co] is None else acc[co] + contrib

    # Epilogue: bias + tanh (EUP), full lane-dense stores.
    for co in range(COUT):
        o_ref[0, co] = jnp.tanh(acc[co] + b_ref[co])


def conv2d_tanh(x, w, b, *, ts=16):
    """x: (N, CIN, H, W) f32, w: (COUT, CIN, K, K) f32, b: (COUT,) f32."""
    assert ts % 8 == 0 and ts >= 8
    N, C, H, W = x.shape
    assert C == CIN

    ns = pl.cdiv(H, ts)                 # number of output row strips
    hout = ns * ts                      # strip-aligned output rows
    halloc = hout + 8                   # padded-input rows (>= H + 2*PAD)
    wpl = _round_up(W + 2 * PAD, 128)   # lane-aligned padded width

    # One-shot zero padding in the wrapper: the kernel sees a dense block.
    x_pad = jnp.pad(
        x.astype(jnp.float32),
        ((0, 0), (0, 0), (PAD, halloc - H - PAD), (PAD, wpl - W - PAD)))
    w_flat = w.astype(jnp.float32).reshape(-1)          # (COUT*CIN*K*K,)
    b = b.astype(jnp.float32)

    kernel = functools.partial(_conv_tanh_kernel, TS=ts, WPL=wpl)
    out_full = pl.pallas_call(
        kernel,
        out_shape=jax.ShapeDtypeStruct((N, COUT, hout, wpl), jnp.float32),
        grid=(N, ns),
        in_specs=[
            pl.BlockSpec(memory_space=pltpu.MemorySpace.SMEM),   # weights
            pl.BlockSpec(memory_space=pltpu.MemorySpace.SMEM),   # bias
            # Whole padded image per batch element; index ignores the strip
            # axis so it is fetched once per image and revisited per strip.
            pl.BlockSpec((1, CIN, halloc, wpl), lambda n, s: (n, 0, 0, 0)),
        ],
        out_specs=pl.BlockSpec((1, COUT, ts, wpl), lambda n, s: (n, 0, s, 0)),
        compiler_params=pltpu.CompilerParams(
            dimension_semantics=("parallel", "parallel")),
    )(w_flat, b, x_pad)

    # Slice the valid window back out of the lane-dense padded output.
    # TODO(synk): drop this slice if the consumer can take the padded layout.
    return out_full[:, :, :H, :W]


if __name__ == "__main__":
    key = jax.random.PRNGKey(0)
    kx, kwt, kb = jax.random.split(key, 3)

    # Small shapes consistent with the module (module uses 1x3x100x100).
    # H=24 exercises the multi-strip path (2 strips of 16) and junk-row slice.
    N, H, W = 2, 24, 20
    x = jax.random.normal(kx, (N, CIN, H, W), dtype=jnp.float32)
    # Deterministic synthetic parameters (not a checkpoint load).
    w = 0.1 * jax.random.normal(kwt, (COUT, CIN, K, K), dtype=jnp.float32)
    b = 0.1 * jax.random.normal(kb, (COUT,), dtype=jnp.float32)

    out = conv2d_tanh(x, w, b)
    out = jax.block_until_ready(out)

    # Pure-JAX reference for correctness.
    ref = lax.conv_general_dilated(
        x, w, window_strides=(1, 1),
        padding=[(PAD, PAD), (PAD, PAD)],
        dimension_numbers=("NCHW", "OIHW", "NCHW"),
        precision=lax.Precision.HIGHEST)
    ref = jnp.tanh(ref + b[None, :, None, None])

    assert out.shape == (N, COUT, H, W)
    err = float(jnp.max(jnp.abs(out - ref)))
    assert err < 1e-4, f"mismatch vs reference conv: {err}"

    print("KERNEL_OK")
</pallas_src>

<mosaic_0001>
module attributes {stable_mosaic.version = 11 : i64} {
  func.func @_conv_tanh_kernel(%arg0: i32, %arg1: i32, %arg2: memref<441xf32, #tpu.memory_space<smem>>, %arg3: memref<3xf32, #tpu.memory_space<smem>>, %arg4: memref<1x3x40x128xf32, #tpu.memory_space<vmem>>, %arg5: memref<1x3x16x128xf32, #tpu.memory_space<vmem>>) attributes {dimension_semantics = [#tpu.dimension_semantics<parallel>, #tpu.dimension_semantics<parallel>], iteration_bounds = array<i64: 2, 2>, scalar_prefetch = 0 : i64, scratch_operands = 0 : i64, tpu.core_type = #tpu.core_type<tc>, window_params = [{transform_indices = @transform_0, window_bounds = array<i64: 441>}, {transform_indices = @transform_1, window_bounds = array<i64: 3>}, {transform_indices = @transform_2, window_bounds = array<i64: 1, 3, 40, 128>}, {transform_indices = @transform_3, window_bounds = array<i64: 1, 3, 16, 128>}]} {
    %c16_i32 = arith.constant 16 : i32
    %0 = arith.muli %arg1, %c16_i32 : i32
    %1 = tpu.assume_multiple %0, 8 : i32
    %c0 = arith.constant 0 : index
    %c0_0 = arith.constant 0 : index
    %2 = arith.index_cast %1 : i32 to index
    %c0_1 = arith.constant 0 : index
    %3 = vector.load %arg4[%c0, %c0_0, %2, %c0_1] : memref<1x3x40x128xf32, #tpu.memory_space<vmem>>, vector<1x1x24x128xf32>
    %4 = vector.shape_cast %3 : vector<1x1x24x128xf32> to vector<24x128xf32>
    %5 = vector.extract_strided_slice %4 {offsets = [0, 0], sizes = [16, 128], strides = [1, 1]} : vector<24x128xf32> to vector<16x128xf32>
    %c23_i32 = arith.constant 23 : i32
    %6 = tpu.dynamic_rotate %4 by %c23_i32 dim 0 : vector<24x128xf32>, i32 -> vector<24x128xf32>
    %7 = vector.extract_strided_slice %6 {offsets = [0, 0], sizes = [16, 128], strides = [1, 1]} : vector<24x128xf32> to vector<16x128xf32>
    %c22_i32 = arith.constant 22 : i32
    %8 = tpu.dynamic_rotate %4 by %c22_i32 dim 0 : vector<24x128xf32>, i32 -> vector<24x128xf32>
    %9 = vector.extract_strided_slice %8 {offsets = [0, 0], sizes = [16, 128], strides = [1, 1]} : vector<24x128xf32> to vector<16x128xf32>
    %c21_i32 = arith.constant 21 : i32
    %10 = tpu.dynamic_rotate %4 by %c21_i32 dim 0 : vector<24x128xf32>, i32 -> vector<24x128xf32>
    %11 = vector.extract_strided_slice %10 {offsets = [0, 0], sizes = [16, 128], strides = [1, 1]} : vector<24x128xf32> to vector<16x128xf32>
    %c20_i32 = arith.constant 20 : i32
    %12 = tpu.dynamic_rotate %4 by %c20_i32 dim 0 : vector<24x128xf32>, i32 -> vector<24x128xf32>
    %13 = vector.extract_strided_slice %12 {offsets = [0, 0], sizes = [16, 128], strides = [1, 1]} : vector<24x128xf32> to vector<16x128xf32>
    %c19_i32 = arith.constant 19 : i32
    %14 = tpu.dynamic_rotate %4 by %c19_i32 dim 0 : vector<24x128xf32>, i32 -> vector<24x128xf32>
    %15 = vector.extract_strided_slice %14 {offsets = [0, 0], sizes = [16, 128], strides = [1, 1]} : vector<24x128xf32> to vector<16x128xf32>
    %c18_i32 = arith.constant 18 : i32
    %16 = tpu.dynamic_rotate %4 by %c18_i32 dim 0 : vector<24x128xf32>, i32 -> vector<24x128xf32>
    %17 = vector.extract_strided_slice %16 {offsets = [0, 0], sizes = [16, 128], strides = [1, 1]} : vector<24x128xf32> to vector<16x128xf32>
    %c0_2 = arith.constant 0 : index
    %18 = memref.load %arg2[%c0_2] : memref<441xf32, #tpu.memory_space<smem>>
    %19 = vector.broadcast %18 : f32 to vector<16x128xf32>
    %20 = arith.mulf %19, %5 : vector<16x128xf32>
    %c7 = arith.constant 7 : index
    %21 = memref.load %arg2[%c7] : memref<441xf32, #tpu.memory_space<smem>>
    %22 = vector.broadcast %21 : f32 to vector<16x128xf32>
    %23 = arith.mulf %22, %7 : vector<16x128xf32>
    %24 = arith.addf %20, %23 : vector<16x128xf32>
    %c14 = arith.constant 14 : index
    %25 = memref.load %arg2[%c14] : memref<441xf32, #tpu.memory_space<smem>>
    %26 = vector.broadcast %25 : f32 to vector<16x128xf32>
    %27 = arith.mulf %26, %9 : vector<16x128xf32>
    %28 = arith.addf %24, %27 : vector<16x128xf32>
    %c21 = arith.constant 21 : index
    %29 = memref.load %arg2[%c21] : memref<441xf32, #tpu.memory_space<smem>>
    %30 = vector.broadcast %29 : f32 to vector<16x128xf32>
    %31 = arith.mulf %30, %11 : vector<16x128xf32>
    %32 = arith.addf %28, %31 : vector<16x128xf32>
    %c28 = arith.constant 28 : index
    %33 = memref.load %arg2[%c28] : memref<441xf32, #tpu.memory_space<smem>>
    %34 = vector.broadcast %33 : f32 to vector<16x128xf32>
    %35 = arith.mulf %34, %13 : vector<16x128xf32>
    %36 = arith.addf %32, %35 : vector<16x128xf32>
    %c35 = arith.constant 35 : index
    %37 = memref.load %arg2[%c35] : memref<441xf32, #tpu.memory_space<smem>>
    %38 = vector.broadcast %37 : f32 to vector<16x128xf32>
    %39 = arith.mulf %38, %15 : vector<16x128xf32>
    %40 = arith.addf %36, %39 : vector<16x128xf32>
    %c42 = arith.constant 42 : index
    %41 = memref.load %arg2[%c42] : memref<441xf32, #tpu.memory_space<smem>>
    %42 = vector.broadcast %41 : f32 to vector<16x128xf32>
    %43 = arith.mulf %42, %17 : vector<16x128xf32>
    %44 = arith.addf %40, %43 : vector<16x128xf32>
    %c1 = arith.constant 1 : index
    %45 = memref.load %arg2[%c1] : memref<441xf32, #tpu.memory_space<smem>>
    %46 = vector.broadcast %45 : f32 to vector<16x128xf32>
    %47 = arith.mulf %46, %5 : vector<16x128xf32>
    %c8 = arith.constant 8 : index
    %48 = memref.load %arg2[%c8] : memref<441xf32, #tpu.memory_space<smem>>
    %49 = vector.broadcast %48 : f32 to vector<16x128xf32>
    %50 = arith.mulf %49, %7 : vector<16x128xf32>
    %51 = arith.addf %47, %50 : vector<16x128xf32>
    %c15 = arith.constant 15 : index
    %52 = memref.load %arg2[%c15] : memref<441xf32, #tpu.memory_space<smem>>
    %53 = vector.broadcast %52 : f32 to vector<16x128xf32>
    %54 = arith.mulf %53, %9 : vector<16x128xf32>
    %55 = arith.addf %51, %54 : vector<16x128xf32>
    %c22 = arith.constant 22 : index
    %56 = memref.load %arg2[%c22] : memref<441xf32, #tpu.memory_space<smem>>
    %57 = vector.broadcast %56 : f32 to vector<16x128xf32>
    %58 = arith.mulf %57, %11 : vector<16x128xf32>
    %59 = arith.addf %55, %58 : vector<16x128xf32>
    %c29 = arith.constant 29 : index
    %60 = memref.load %arg2[%c29] : memref<441xf32, #tpu.memory_space<smem>>
    %61 = vector.broadcast %60 : f32 to vector<16x128xf32>
    %62 = arith.mulf %61, %13 : vector<16x128xf32>
    %63 = arith.addf %59, %62 : vector<16x128xf32>
    %c36 = arith.constant 36 : index
    %64 = memref.load %arg2[%c36] : memref<441xf32, #tpu.memory_space<smem>>
    %65 = vector.broadcast %64 : f32 to vector<16x128xf32>
    %66 = arith.mulf %65, %15 : vector<16x128xf32>
    %67 = arith.addf %63, %66 : vector<16x128xf32>
    %c43 = arith.constant 43 : index
    %68 = memref.load %arg2[%c43] : memref<441xf32, #tpu.memory_space<smem>>
    %69 = vector.broadcast %68 : f32 to vector<16x128xf32>
    %70 = arith.mulf %69, %17 : vector<16x128xf32>
    %71 = arith.addf %67, %70 : vector<16x128xf32>
    %c127_i32 = arith.constant 127 : i32
    %72 = tpu.dynamic_rotate %71 by %c127_i32 dim 1 : vector<16x128xf32>, i32 -> vector<16x128xf32>
    %73 = arith.addf %44, %72 : vector<16x128xf32>
    %c2 = arith.constant 2 : index
    %74 = memref.load %arg2[%c2] : memref<441xf32, #tpu.memory_space<smem>>
    %75 = vector.broadcast %74 : f32 to vector<16x128xf32>
    %76 = arith.mulf %75, %5 : vector<16x128xf32>
    %c9 = arith.constant 9 : index
    %77 = memref.load %arg2[%c9] : memref<441xf32, #tpu.memory_space<smem>>
    %78 = vector.broadcast %77 : f32 to vector<16x128xf32>
    %79 = arith.mulf %78, %7 : vector<16x128xf32>
    %80 = arith.addf %76, %79 : vector<16x128xf32>
    %c16 = arith.constant 16 : index
    %81 = memref.load %arg2[%c16] : memref<441xf32, #tpu.memory_space<smem>>
    %82 = vector.broadcast %81 : f32 to vector<16x128xf32>
    %83 = arith.mulf %82, %9 : vector<16x128xf32>
    %84 = arith.addf %80, %83 : vector<16x128xf32>
    %c23 = arith.constant 23 : index
    %85 = memref.load %arg2[%c23] : memref<441xf32, #tpu.memory_space<smem>>
    %86 = vector.broadcast %85 : f32 to vector<16x128xf32>
    %87 = arith.mulf %86, %11 : vector<16x128xf32>
    %88 = arith.addf %84, %87 : vector<16x128xf32>
    %c30 = arith.constant 30 : index
    %89 = memref.load %arg2[%c30] : memref<441xf32, #tpu.memory_space<smem>>
    %90 = vector.broadcast %89 : f32 to vector<16x128xf32>
    %91 = arith.mulf %90, %13 : vector<16x128xf32>
    %92 = arith.addf %88, %91 : vector<16x128xf32>
    %c37 = arith.constant 37 : index
    %93 = memref.load %arg2[%c37] : memref<441xf32, #tpu.memory_space<smem>>
    %94 = vector.broadcast %93 : f32 to vector<16x128xf32>
    %95 = arith.mulf %94, %15 : vector<16x128xf32>
    %96 = arith.addf %92, %95 : vector<16x128xf32>
    %c44 = arith.constant 44 : index
    %97 = memref.load %arg2[%c44] : memref<441xf32, #tpu.memory_space<smem>>
    %98 = vector.broadcast %97 : f32 to vector<16x128xf32>
    %99 = arith.mulf %98, %17 : vector<16x128xf32>
    %100 = arith.addf %96, %99 : vector<16x128xf32>
    %c126_i32 = arith.constant 126 : i32
    %101 = tpu.dynamic_rotate %100 by %c126_i32 dim 1 : vector<16x128xf32>, i32 -> vector<16x128xf32>
    %102 = arith.addf %73, %101 : vector<16x128xf32>
    %c3 = arith.constant 3 : index
    %103 = memref.load %arg2[%c3] : memref<441xf32, #tpu.memory_space<smem>>
    %104 = vector.broadcast %103 : f32 to vector<16x128xf32>
    %105 = arith.mulf %104, %5 : vector<16x128xf32>
    %c10 = arith.constant 10 : index
    %106 = memref.load %arg2[%c10] : memref<441xf32, #tpu.memory_space<smem>>
    %107 = vector.broadcast %106 : f32 to vector<16x128xf32>
    %108 = arith.mulf %107, %7 : vector<16x128xf32>
    %109 = arith.addf %105, %108 : vector<16x128xf32>
    %c17 = arith.constant 17 : index
    %110 = memref.load %arg2[%c17] : memref<441xf32, #tpu.memory_space<smem>>
    %111 = vector.broadcast %110 : f32 to vector<16x128xf32>
    %112 = arith.mulf %111, %9 : vector<16x128xf32>
    %113 = arith.addf %109, %112 : vector<16x128xf32>
    %c24 = arith.constant 24 : index
    %114 = memref.load %arg2[%c24] : memref<441xf32, #tpu.memory_space<smem>>
    %115 = vector.broadcast %114 : f32 to vector<16x128xf32>
    %116 = arith.mulf %115, %11 : vector<16x128xf32>
    %117 = arith.addf %113, %116 : vector<16x128xf32>
    %c31 = arith.constant 31 : index
    %118 = memref.load %arg2[%c31] : memref<441xf32, #tpu.memory_space<smem>>
    %119 = vector.broadcast %118 : f32 to vector<16x128xf32>
    %120 = arith.mulf %119, %13 : vector<16x128xf32>
    %121 = arith.addf %117, %120 : vector<16x128xf32>
    %c38 = arith.constant 38 : index
    %122 = memref.load %arg2[%c38] : memref<441xf32, #tpu.memory_space<smem>>
    %123 = vector.broadcast %122 : f32 to vector<16x128xf32>
    %124 = arith.mulf %123, %15 : vector<16x128xf32>
    %125 = arith.addf %121, %124 : vector<16x128xf32>
    %c45 = arith.constant 45 : index
    %126 = memref.load %arg2[%c45] : memref<441xf32, #tpu.memory_space<smem>>
    %127 = vector.broadcast %126 : f32 to vector<16x128xf32>
    %128 = arith.mulf %127, %17 : vector<16x128xf32>
    %129 = arith.addf %125, %128 : vector<16x128xf32>
    %c125_i32 = arith.constant 125 : i32
    %130 = tpu.dynamic_rotate %129 by %c125_i32 dim 1 : vector<16x128xf32>, i32 -> vector<16x128xf32>
    %131 = arith.addf %102, %130 : vector<16x128xf32>
    %c4 = arith.constant 4 : index
    %132 = memref.load %arg2[%c4] : memref<441xf32, #tpu.memory_space<smem>>
    %133 = vector.broadcast %132 : f32 to vector<16x128xf32>
    %134 = arith.mulf %133, %5 : vector<16x128xf32>
    %c11 = arith.constant 11 : index
    %135 = memref.load %arg2[%c11] : memref<441xf32, #tpu.memory_space<smem>>
    %136 = vector.broadcast %135 : f32 to vector<16x128xf32>
    %137 = arith.mulf %136, %7 : vector<16x128xf32>
    %138 = arith.addf %134, %137 : vector<16x128xf32>
    %c18 = arith.constant 18 : index
    %139 = memref.load %arg2[%c18] : memref<441xf32, #tpu.memory_space<smem>>
    %140 = vector.broadcast %139 : f32 to vector<16x128xf32>
    %141 = arith.mulf %140, %9 : vector<16x128xf32>
    %142 = arith.addf %138, %141 : vector<16x128xf32>
    %c25 = arith.constant 25 : index
    %143 = memref.load %arg2[%c25] : memref<441xf32, #tpu.memory_space<smem>>
    %144 = vector.broadcast %143 : f32 to vector<16x128xf32>
    %145 = arith.mulf %144, %11 : vector<16x128xf32>
    %146 = arith.addf %142, %145 : vector<16x128xf32>
    %c32 = arith.constant 32 : index
    %147 = memref.load %arg2[%c32] : memref<441xf32, #tpu.memory_space<smem>>
    %148 = vector.broadcast %147 : f32 to vector<16x128xf32>
    %149 = arith.mulf %148, %13 : vector<16x128xf32>
    %150 = arith.addf %146, %149 : vector<16x128xf32>
    %c39 = arith.constant 39 : index
    %151 = memref.load %arg2[%c39] : memref<441xf32, #tpu.memory_space<smem>>
    %152 = vector.broadcast %151 : f32 to vector<16x128xf32>
    %153 = arith.mulf %152, %15 : vector<16x128xf32>
    %154 = arith.addf %150, %153 : vector<16x128xf32>
    %c46 = arith.constant 46 : index
    %155 = memref.load %arg2[%c46] : memref<441xf32, #tpu.memory_space<smem>>
    %156 = vector.broadcast %155 : f32 to vector<16x128xf32>
    %157 = arith.mulf %156, %17 : vector<16x128xf32>
    %158 = arith.addf %154, %157 : vector<16x128xf32>
    %c124_i32 = arith.constant 124 : i32
    %159 = tpu.dynamic_rotate %158 by %c124_i32 dim 1 : vector<16x128xf32>, i32 -> vector<16x128xf32>
    %160 = arith.addf %131, %159 : vector<16x128xf32>
    %c5 = arith.constant 5 : index
    %161 = memref.load %arg2[%c5] : memref<441xf32, #tpu.memory_space<smem>>
    %162 = vector.broadcast %161 : f32 to vector<16x128xf32>
    %163 = arith.mulf %162, %5 : vector<16x128xf32>
    %c12 = arith.constant 12 : index
    %164 = memref.load %arg2[%c12] : memref<441xf32, #tpu.memory_space<smem>>
    %165 = vector.broadcast %164 : f32 to vector<16x128xf32>
    %166 = arith.mulf %165, %7 : vector<16x128xf32>
    %167 = arith.addf %163, %166 : vector<16x128xf32>
    %c19 = arith.constant 19 : index
    %168 = memref.load %arg2[%c19] : memref<441xf32, #tpu.memory_space<smem>>
    %169 = vector.broadcast %168 : f32 to vector<16x128xf32>
    %170 = arith.mulf %169, %9 : vector<16x128xf32>
    %171 = arith.addf %167, %170 : vector<16x128xf32>
    %c26 = arith.constant 26 : index
    %172 = memref.load %arg2[%c26] : memref<441xf32, #tpu.memory_space<smem>>
    %173 = vector.broadcast %172 : f32 to vector<16x128xf32>
    %174 = arith.mulf %173, %11 : vector<16x128xf32>
    %175 = arith.addf %171, %174 : vector<16x128xf32>
    %c33 = arith.constant 33 : index
    %176 = memref.load %arg2[%c33] : memref<441xf32, #tpu.memory_space<smem>>
    %177 = vector.broadcast %176 : f32 to vector<16x128xf32>
    %178 = arith.mulf %177, %13 : vector<16x128xf32>
    %179 = arith.addf %175, %178 : vector<16x128xf32>
    %c40 = arith.constant 40 : index
    %180 = memref.load %arg2[%c40] : memref<441xf32, #tpu.memory_space<smem>>
    %181 = vector.broadcast %180 : f32 to vector<16x128xf32>
    %182 = arith.mulf %181, %15 : vector<16x128xf32>
    %183 = arith.addf %179, %182 : vector<16x128xf32>
    %c47 = arith.constant 47 : index
    %184 = memref.load %arg2[%c47] : memref<441xf32, #tpu.memory_space<smem>>
    %185 = vector.broadcast %184 : f32 to vector<16x128xf32>
    %186 = arith.mulf %185, %17 : vector<16x128xf32>
    %187 = arith.addf %183, %186 : vector<16x128xf32>
    %c123_i32 = arith.constant 123 : i32
    %188 = tpu.dynamic_rotate %187 by %c123_i32 dim 1 : vector<16x128xf32>, i32 -> vector<16x128xf32>
    %189 = arith.addf %160, %188 : vector<16x128xf32>
    %c6 = arith.constant 6 : index
    %190 = memref.load %arg2[%c6] : memref<441xf32, #tpu.memory_space<smem>>
    %191 = vector.broadcast %190 : f32 to vector<16x128xf32>
    %192 = arith.mulf %191, %5 : vector<16x128xf32>
    %c13 = arith.constant 13 : index
    %193 = memref.load %arg2[%c13] : memref<441xf32, #tpu.memory_space<smem>>
    %194 = vector.broadcast %193 : f32 to vector<16x128xf32>
    %195 = arith.mulf %194, %7 : vector<16x128xf32>
    %196 = arith.addf %192, %195 : vector<16x128xf32>
    %c20 = arith.constant 20 : index
    %197 = memref.load %arg2[%c20] : memref<441xf32, #tpu.memory_space<smem>>
    %198 = vector.broadcast %197 : f32 to vector<16x128xf32>
    %199 = arith.mulf %198, %9 : vector<16x128xf32>
    %200 = arith.addf %196, %199 : vector<16x128xf32>
    %c27 = arith.constant 27 : index
    %201 = memref.load %arg2[%c27] : memref<441xf32, #tpu.memory_space<smem>>
    %202 = vector.broadcast %201 : f32 to vector<16x128xf32>
    %203 = arith.mulf %202, %11 : vector<16x128xf32>
    %204 = arith.addf %200, %203 : vector<16x128xf32>
    %c34 = arith.constant 34 : index
    %205 = memref.load %arg2[%c34] : memref<441xf32, #tpu.memory_space<smem>>
    %206 = vector.broadcast %205 : f32 to vector<16x128xf32>
    %207 = arith.mulf %206, %13 : vector<16x128xf32>
    %208 = arith.addf %204, %207 : vector<16x128xf32>
    %c41 = arith.constant 41 : index
    %209 = memref.load %arg2[%c41] : memref<441xf32, #tpu.memory_space<smem>>
    %210 = vector.broadcast %209 : f32 to vector<16x128xf32>
    %211 = arith.mulf %210, %15 : vector<16x128xf32>
    %212 = arith.addf %208, %211 : vector<16x128xf32>
    %c48 = arith.constant 48 : index
    %213 = memref.load %arg2[%c48] : memref<441xf32, #tpu.memory_space<smem>>
    %214 = vector.broadcast %213 : f32 to vector<16x128xf32>
    %215 = arith.mulf %214, %17 : vector<16x128xf32>
    %216 = arith.addf %212, %215 : vector<16x128xf32>
    %c122_i32 = arith.constant 122 : i32
    %217 = tpu.dynamic_rotate %216 by %c122_i32 dim 1 : vector<16x128xf32>, i32 -> vector<16x128xf32>
    %218 = arith.addf %189, %217 : vector<16x128xf32>
    %c147 = arith.constant 147 : index
    %219 = memref.load %arg2[%c147] : memref<441xf32, #tpu.memory_space<smem>>
    %220 = vector.broadcast %219 : f32 to vector<16x128xf32>
    %221 = arith.mulf %220, %5 : vector<16x128xf32>
    %c154 = arith.constant 154 : index
    %222 = memref.load %arg2[%c154] : memref<441xf32, #tpu.memory_space<smem>>
    %223 = vector.broadcast %222 : f32 to vector<16x128xf32>
    %224 = arith.mulf %223, %7 : vector<16x128xf32>
    %225 = arith.addf %221, %224 : vector<16x128xf32>
    %c161 = arith.constant 161 : index
    %226 = memref.load %arg2[%c161] : memref<441xf32, #tpu.memory_space<smem>>
    %227 = vector.broadcast %226 : f32 to vector<16x128xf32>
    %228 = arith.mulf %227, %9 : vector<16x128xf32>
    %229 = arith.addf %225, %228 : vector<16x128xf32>
    %c168 = arith.constant 168 : index
    %230 = memref.load %arg2[%c168] : memref<441xf32, #tpu.memory_space<smem>>
    %231 = vector.broadcast %230 : f32 to vector<16x128xf32>
    %232 = arith.mulf %231, %11 : vector<16x128xf32>
    %233 = arith.addf %229, %232 : vector<16x128xf32>
    %c175 = arith.constant 175 : index
    %234 = memref.load %arg2[%c175] : memref<441xf32, #tpu.memory_space<smem>>
    %235 = vector.broadcast %234 : f32 to vector<16x128xf32>
    %236 = arith.mulf %235, %13 : vector<16x128xf32>
    %237 = arith.addf %233, %236 : vector<16x128xf32>
    %c182 = arith.constant 182 : index
    %238 = memref.load %arg2[%c182] : memref<441xf32, #tpu.memory_space<smem>>
    %239 = vector.broadcast %238 : f32 to vector<16x128xf32>
    %240 = arith.mulf %239, %15 : vector<16x128xf32>
    %241 = arith.addf %237, %240 : vector<16x128xf32>
    %c189 = arith.constant 189 : index
    %242 = memref.load %arg2[%c189] : memref<441xf32, #tpu.memory_space<smem>>
    %243 = vector.broadcast %242 : f32 to vector<16x128xf32>
    %244 = arith.mulf %243, %17 : vector<16x128xf32>
    %245 = arith.addf %241, %244 : vector<16x128xf32>
    %c148 = arith.constant 148 : index
    %246 = memref.load %arg2[%c148] : memref<441xf32, #tpu.memory_space<smem>>
    %247 = vector.broadcast %246 : f32 to vector<16x128xf32>
    %248 = arith.mulf %247, %5 : vector<16x128xf32>
    %c155 = arith.constant 155 : index
    %249 = memref.load %arg2[%c155] : memref<441xf32, #tpu.memory_space<smem>>
    %250 = vector.broadcast %249 : f32 to vector<16x128xf32>
    %251 = arith.mulf %250, %7 : vector<16x128xf32>
    %252 = arith.addf %248, %251 : vector<16x128xf32>
    %c162 = arith.constant 162 : index
    %253 = memref.load %arg2[%c162] : memref<441xf32, #tpu.memory_space<smem>>
    %254 = vector.broadcast %253 : f32 to vector<16x128xf32>
    %255 = arith.mulf %254, %9 : vector<16x128xf32>
    %256 = arith.addf %252, %255 : vector<16x128xf32>
    %c169 = arith.constant 169 : index
    %257 = memref.load %arg2[%c169] : memref<441xf32, #tpu.memory_space<smem>>
    %258 = vector.broadcast %257 : f32 to vector<16x128xf32>
    %259 = arith.mulf %258, %11 : vector<16x128xf32>
    %260 = arith.addf %256, %259 : vector<16x128xf32>
    %c176 = arith.constant 176 : index
    %261 = memref.load %arg2[%c176] : memref<441xf32, #tpu.memory_space<smem>>
    %262 = vector.broadcast %261 : f32 to vector<16x128xf32>
    %263 = arith.mulf %262, %13 : vector<16x128xf32>
    %264 = arith.addf %260, %263 : vector<16x128xf32>
    %c183 = arith.constant 183 : index
    %265 = memref.load %arg2[%c183] : memref<441xf32, #tpu.memory_space<smem>>
    %266 = vector.broadcast %265 : f32 to vector<16x128xf32>
    %267 = arith.mulf %266, %15 : vector<16x128xf32>
    %268 = arith.addf %264, %267 : vector<16x128xf32>
    %c190 = arith.constant 190 : index
    %269 = memref.load %arg2[%c190] : memref<441xf32, #tpu.memory_space<smem>>
    %270 = vector.broadcast %269 : f32 to vector<16x128xf32>
    %271 = arith.mulf %270, %17 : vector<16x128xf32>
    %272 = arith.addf %268, %271 : vector<16x128xf32>
    %c127_i32_3 = arith.constant 127 : i32
    %273 = tpu.dynamic_rotate %272 by %c127_i32_3 dim 1 : vector<16x128xf32>, i32 -> vector<16x128xf32>
    %274 = arith.addf %245, %273 : vector<16x128xf32>
    %c149 = arith.constant 149 : index
    %275 = memref.load %arg2[%c149] : memref<441xf32, #tpu.memory_space<smem>>
    %276 = vector.broadcast %275 : f32 to vector<16x128xf32>
    %277 = arith.mulf %276, %5 : vector<16x128xf32>
    %c156 = arith.constant 156 : index
    %278 = memref.load %arg2[%c156] : memref<441xf32, #tpu.memory_space<smem>>
    %279 = vector.broadcast %278 : f32 to vector<16x128xf32>
    %280 = arith.mulf %279, %7 : vector<16x128xf32>
    %281 = arith.addf %277, %280 : vector<16x128xf32>
    %c163 = arith.constant 163 : index
    %282 = memref.load %arg2[%c163] : memref<441xf32, #tpu.memory_space<smem>>
    %283 = vector.broadcast %282 : f32 to vector<16x128xf32>
    %284 = arith.mulf %283, %9 : vector<16x128xf32>
    %285 = arith.addf %281, %284 : vector<16x128xf32>
    %c170 = arith.constant 170 : index
    %286 = memref.load %arg2[%c170] : memref<441xf32, #tpu.memory_space<smem>>
    %287 = vector.broadcast %286 : f32 to vector<16x128xf32>
    %288 = arith.mulf %287, %11 : vector<16x128xf32>
    %289 = arith.addf %285, %288 : vector<16x128xf32>
    %c177 = arith.constant 177 : index
    %290 = memref.load %arg2[%c177] : memref<441xf32, #tpu.memory_space<smem>>
    %291 = vector.broadcast %290 : f32 to vector<16x128xf32>
    %292 = arith.mulf %291, %13 : vector<16x128xf32>
    %293 = arith.addf %289, %292 : vector<16x128xf32>
    %c184 = arith.constant 184 : index
    %294 = memref.load %arg2[%c184] : memref<441xf32, #tpu.memory_space<smem>>
    %295 = vector.broadcast %294 : f32 to vector<16x128xf32>
    %296 = arith.mulf %295, %15 : vector<16x128xf32>
    %297 = arith.addf %293, %296 : vector<16x128xf32>
    %c191 = arith.constant 191 : index
    %298 = memref.load %arg2[%c191] : memref<441xf32, #tpu.memory_space<smem>>
    %299 = vector.broadcast %298 : f32 to vector<16x128xf32>
    %300 = arith.mulf %299, %17 : vector<16x128xf32>
    %301 = arith.addf %297, %300 : vector<16x128xf32>
    %c126_i32_4 = arith.constant 126 : i32
    %302 = tpu.dynamic_rotate %301 by %c126_i32_4 dim 1 : vector<16x128xf32>, i32 -> vector<16x128xf32>
    %303 = arith.addf %274, %302 : vector<16x128xf32>
    %c150 = arith.constant 150 : index
    %304 = memref.load %arg2[%c150] : memref<441xf32, #tpu.memory_space<smem>>
    %305 = vector.broadcast %304 : f32 to vector<16x128xf32>
    %306 = arith.mulf %305, %5 : vector<16x128xf32>
    %c157 = arith.constant 157 : index
    %307 = memref.load %arg2[%c157] : memref<441xf32, #tpu.memory_space<smem>>
    %308 = vector.broadcast %307 : f32 to vector<16x128xf32>
    %309 = arith.mulf %308, %7 : vector<16x128xf32>
    %310 = arith.addf %306, %309 : vector<16x128xf32>
    %c164 = arith.constant 164 : index
    %311 = memref.load %arg2[%c164] : memref<441xf32, #tpu.memory_space<smem>>
    %312 = vector.broadcast %311 : f32 to vector<16x128xf32>
    %313 = arith.mulf %312, %9 : vector<16x128xf32>
    %314 = arith.addf %310, %313 : vector<16x128xf32>
    %c171 = arith.constant 171 : index
    %315 = memref.load %arg2[%c171] : memref<441xf32, #tpu.memory_space<smem>>
    %316 = vector.broadcast %315 : f32 to vector<16x128xf32>
    %317 = arith.mulf %316, %11 : vector<16x128xf32>
    %318 = arith.addf %314, %317 : vector<16x128xf32>
    %c178 = arith.constant 178 : index
    %319 = memref.load %arg2[%c178] : memref<441xf32, #tpu.memory_space<smem>>
    %320 = vector.broadcast %319 : f32 to vector<16x128xf32>
    %321 = arith.mulf %320, %13 : vector<16x128xf32>
    %322 = arith.addf %318, %321 : vector<16x128xf32>
    %c185 = arith.constant 185 : index
    %323 = memref.load %arg2[%c185] : memref<441xf32, #tpu.memory_space<smem>>
    %324 = vector.broadcast %323 : f32 to vector<16x128xf32>
    %325 = arith.mulf %324, %15 : vector<16x128xf32>
    %326 = arith.addf %322, %325 : vector<16x128xf32>
    %c192 = arith.constant 192 : index
    %327 = memref.load %arg2[%c192] : memref<441xf32, #tpu.memory_space<smem>>
    %328 = vector.broadcast %327 : f32 to vector<16x128xf32>
    %329 = arith.mulf %328, %17 : vector<16x128xf32>
    %330 = arith.addf %326, %329 : vector<16x128xf32>
    %c125_i32_5 = arith.constant 125 : i32
    %331 = tpu.dynamic_rotate %330 by %c125_i32_5 dim 1 : vector<16x128xf32>, i32 -> vector<16x128xf32>
    %332 = arith.addf %303, %331 : vector<16x128xf32>
    %c151 = arith.constant 151 : index
    %333 = memref.load %arg2[%c151] : memref<441xf32, #tpu.memory_space<smem>>
    %334 = vector.broadcast %333 : f32 to vector<16x128xf32>
    %335 = arith.mulf %334, %5 : vector<16x128xf32>
    %c158 = arith.constant 158 : index
    %336 = memref.load %arg2[%c158] : memref<441xf32, #tpu.memory_space<smem>>
    %337 = vector.broadcast %336 : f32 to vector<16x128xf32>
    %338 = arith.mulf %337, %7 : vector<16x128xf32>
    %339 = arith.addf %335, %338 : vector<16x128xf32>
    %c165 = arith.constant 165 : index
    %340 = memref.load %arg2[%c165] : memref<441xf32, #tpu.memory_space<smem>>
    %341 = vector.broadcast %340 : f32 to vector<16x128xf32>
    %342 = arith.mulf %341, %9 : vector<16x128xf32>
    %343 = arith.addf %339, %342 : vector<16x128xf32>
    %c172 = arith.constant 172 : index
    %344 = memref.load %arg2[%c172] : memref<441xf32, #tpu.memory_space<smem>>
    %345 = vector.broadcast %344 : f32 to vector<16x128xf32>
    %346 = arith.mulf %345, %11 : vector<16x128xf32>
    %347 = arith.addf %343, %346 : vector<16x128xf32>
    %c179 = arith.constant 179 : index
    %348 = memref.load %arg2[%c179] : memref<441xf32, #tpu.memory_space<smem>>
    %349 = vector.broadcast %348 : f32 to vector<16x128xf32>
    %350 = arith.mulf %349, %13 : vector<16x128xf32>
    %351 = arith.addf %347, %350 : vector<16x128xf32>
    %c186 = arith.constant 186 : index
    %352 = memref.load %arg2[%c186] : memref<441xf32, #tpu.memory_space<smem>>
    %353 = vector.broadcast %352 : f32 to vector<16x128xf32>
    %354 = arith.mulf %353, %15 : vector<16x128xf32>
    %355 = arith.addf %351, %354 : vector<16x128xf32>
    %c193 = arith.constant 193 : index
    %356 = memref.load %arg2[%c193] : memref<441xf32, #tpu.memory_space<smem>>
    %357 = vector.broadcast %356 : f32 to vector<16x128xf32>
    %358 = arith.mulf %357, %17 : vector<16x128xf32>
    %359 = arith.addf %355, %358 : vector<16x128xf32>
    %c124_i32_6 = arith.constant 124 : i32
    %360 = tpu.dynamic_rotate %359 by %c124_i32_6 dim 1 : vector<16x128xf32>, i32 -> vector<16x128xf32>
    %361 = arith.addf %332, %360 : vector<16x128xf32>
    %c152 = arith.constant 152 : index
    %362 = memref.load %arg2[%c152] : memref<441xf32, #tpu.memory_space<smem>>
    %363 = vector.broadcast %362 : f32 to vector<16x128xf32>
    %364 = arith.mulf %363, %5 : vector<16x128xf32>
    %c159 = arith.constant 159 : index
    %365 = memref.load %arg2[%c159] : memref<441xf32, #tpu.memory_space<smem>>
    %366 = vector.broadcast %365 : f32 to vector<16x128xf32>
    %367 = arith.mulf %366, %7 : vector<16x128xf32>
    %368 = arith.addf %364, %367 : vector<16x128xf32>
    %c166 = arith.constant 166 : index
    %369 = memref.load %arg2[%c166] : memref<441xf32, #tpu.memory_space<smem>>
    %370 = vector.broadcast %369 : f32 to vector<16x128xf32>
    %371 = arith.mulf %370, %9 : vector<16x128xf32>
    %372 = arith.addf %368, %371 : vector<16x128xf32>
    %c173 = arith.constant 173 : index
    %373 = memref.load %arg2[%c173] : memref<441xf32, #tpu.memory_space<smem>>
    %374 = vector.broadcast %373 : f32 to vector<16x128xf32>
    %375 = arith.mulf %374, %11 : vector<16x128xf32>
    %376 = arith.addf %372, %375 : vector<16x128xf32>
    %c180 = arith.constant 180 : index
    %377 = memref.load %arg2[%c180] : memref<441xf32, #tpu.memory_space<smem>>
    %378 = vector.broadcast %377 : f32 to vector<16x128xf32>
    %379 = arith.mulf %378, %13 : vector<16x128xf32>
    %380 = arith.addf %376, %379 : vector<16x128xf32>
    %c187 = arith.constant 187 : index
    %381 = memref.load %arg2[%c187] : memref<441xf32, #tpu.memory_space<smem>>
    %382 = vector.broadcast %381 : f32 to vector<16x128xf32>
    %383 = arith.mulf %382, %15 : vector<16x128xf32>
    %384 = arith.addf %380, %383 : vector<16x128xf32>
    %c194 = arith.constant 194 : index
    %385 = memref.load %arg2[%c194] : memref<441xf32, #tpu.memory_space<smem>>
    %386 = vector.broadcast %385 : f32 to vector<16x128xf32>
    %387 = arith.mulf %386, %17 : vector<16x128xf32>
    %388 = arith.addf %384, %387 : vector<16x128xf32>
    %c123_i32_7 = arith.constant 123 : i32
    %389 = tpu.dynamic_rotate %388 by %c123_i32_7 dim 1 : vector<16x128xf32>, i32 -> vector<16x128xf32>
    %390 = arith.addf %361, %389 : vector<16x128xf32>
    %c153 = arith.constant 153 : index
    %391 = memref.load %arg2[%c153] : memref<441xf32, #tpu.memory_space<smem>>
    %392 = vector.broadcast %391 : f32 to vector<16x128xf32>
    %393 = arith.mulf %392, %5 : vector<16x128xf32>
    %c160 = arith.constant 160 : index
    %394 = memref.load %arg2[%c160] : memref<441xf32, #tpu.memory_space<smem>>
    %395 = vector.broadcast %394 : f32 to vector<16x128xf32>
    %396 = arith.mulf %395, %7 : vector<16x128xf32>
    %397 = arith.addf %393, %396 : vector<16x128xf32>
    %c167 = arith.constant 167 : index
    %398 = memref.load %arg2[%c167] : memref<441xf32, #tpu.memory_space<smem>>
    %399 = vector.broadcast %398 : f32 to vector<16x128xf32>
    %400 = arith.mulf %399, %9 : vector<16x128xf32>
    %401 = arith.addf %397, %400 : vector<16x128xf32>
    %c174 = arith.constant 174 : index
    %402 = memref.load %arg2[%c174] : memref<441xf32, #tpu.memory_space<smem>>
    %403 = vector.broadcast %402 : f32 to vector<16x128xf32>
    %404 = arith.mulf %403, %11 : vector<16x128xf32>
    %405 = arith.addf %401, %404 : vector<16x128xf32>
    %c181 = arith.constant 181 : index
    %406 = memref.load %arg2[%c181] : memref<441xf32, #tpu.memory_space<smem>>
    %407 = vector.broadcast %406 : f32 to vector<16x128xf32>
    %408 = arith.mulf %407, %13 : vector<16x128xf32>
    %409 = arith.addf %405, %408 : vector<16x128xf32>
    %c188 = arith.constant 188 : index
    %410 = memref.load %arg2[%c188] : memref<441xf32, #tpu.memory_space<smem>>
    %411 = vector.broadcast %410 : f32 to vector<16x128xf32>
    %412 = arith.mulf %411, %15 : vector<16x128xf32>
    %413 = arith.addf %409, %412 : vector<16x128xf32>
    %c195 = arith.constant 195 : index
    %414 = memref.load %arg2[%c195] : memref<441xf32, #tpu.memory_space<smem>>
    %415 = vector.broadcast %414 : f32 to vector<16x128xf32>
    %416 = arith.mulf %415, %17 : vector<16x128xf32>
    %417 = arith.addf %413, %416 : vector<16x128xf32>
    %c122_i32_8 = arith.constant 122 : i32
    %418 = tpu.dynamic_rotate %417 by %c122_i32_8 dim 1 : vector<16x128xf32>, i32 -> vector<16x128xf32>
    %419 = arith.addf %390, %418 : vector<16x128xf32>
    %c294 = arith.constant 294 : index
    %420 = memref.load %arg2[%c294] : memref<441xf32, #tpu.memory_space<smem>>
    %421 = vector.broadcast %420 : f32 to vector<16x128xf32>
    %422 = arith.mulf %421, %5 : vector<16x128xf32>
    %c301 = arith.constant 301 : index
    %423 = memref.load %arg2[%c301] : memref<441xf32, #tpu.memory_space<smem>>
    %424 = vector.broadcast %423 : f32 to vector<16x128xf32>
    %425 = arith.mulf %424, %7 : vector<16x128xf32>
    %426 = arith.addf %422, %425 : vector<16x128xf32>
    %c308 = arith.constant 308 : index
    %427 = memref.load %arg2[%c308] : memref<441xf32, #tpu.memory_space<smem>>
    %428 = vector.broadcast %427 : f32 to vector<16x128xf32>
    %429 = arith.mulf %428, %9 : vector<16x128xf32>
    %430 = arith.addf %426, %429 : vector<16x128xf32>
    %c315 = arith.constant 315 : index
    %431 = memref.load %arg2[%c315] : memref<441xf32, #tpu.memory_space<smem>>
    %432 = vector.broadcast %431 : f32 to vector<16x128xf32>
    %433 = arith.mulf %432, %11 : vector<16x128xf32>
    %434 = arith.addf %430, %433 : vector<16x128xf32>
    %c322 = arith.constant 322 : index
    %435 = memref.load %arg2[%c322] : memref<441xf32, #tpu.memory_space<smem>>
    %436 = vector.broadcast %435 : f32 to vector<16x128xf32>
    %437 = arith.mulf %436, %13 : vector<16x128xf32>
    %438 = arith.addf %434, %437 : vector<16x128xf32>
    %c329 = arith.constant 329 : index
    %439 = memref.load %arg2[%c329] : memref<441xf32, #tpu.memory_space<smem>>
    %440 = vector.broadcast %439 : f32 to vector<16x128xf32>
    %441 = arith.mulf %440, %15 : vector<16x128xf32>
    %442 = arith.addf %438, %441 : vector<16x128xf32>
    %c336 = arith.constant 336 : index
    %443 = memref.load %arg2[%c336] : memref<441xf32, #tpu.memory_space<smem>>
    %444 = vector.broadcast %443 : f32 to vector<16x128xf32>
    %445 = arith.mulf %444, %17 : vector<16x128xf32>
    %446 = arith.addf %442, %445 : vector<16x128xf32>
    %c295 = arith.constant 295 : index
    %447 = memref.load %arg2[%c295] : memref<441xf32, #tpu.memory_space<smem>>
    %448 = vector.broadcast %447 : f32 to vector<16x128xf32>
    %449 = arith.mulf %448, %5 : vector<16x128xf32>
    %c302 = arith.constant 302 : index
    %450 = memref.load %arg2[%c302] : memref<441xf32, #tpu.memory_space<smem>>
    %451 = vector.broadcast %450 : f32 to vector<16x128xf32>
    %452 = arith.mulf %451, %7 : vector<16x128xf32>
    %453 = arith.addf %449, %452 : vector<16x128xf32>
    %c309 = arith.constant 309 : index
    %454 = memref.load %arg2[%c309] : memref<441xf32, #tpu.memory_space<smem>>
    %455 = vector.broadcast %454 : f32 to vector<16x128xf32>
    %456 = arith.mulf %455, %9 : vector<16x128xf32>
    %457 = arith.addf %453, %456 : vector<16x128xf32>
    %c316 = arith.constant 316 : index
    %458 = memref.load %arg2[%c316] : memref<441xf32, #tpu.memory_space<smem>>
    %459 = vector.broadcast %458 : f32 to vector<16x128xf32>
    %460 = arith.mulf %459, %11 : vector<16x128xf32>
    %461 = arith.addf %457, %460 : vector<16x128xf32>
    %c323 = arith.constant 323 : index
    %462 = memref.load %arg2[%c323] : memref<441xf32, #tpu.memory_space<smem>>
    %463 = vector.broadcast %462 : f32 to vector<16x128xf32>
    %464 = arith.mulf %463, %13 : vector<16x128xf32>
    %465 = arith.addf %461, %464 : vector<16x128xf32>
    %c330 = arith.constant 330 : index
    %466 = memref.load %arg2[%c330] : memref<441xf32, #tpu.memory_space<smem>>
    %467 = vector.broadcast %466 : f32 to vector<16x128xf32>
    %468 = arith.mulf %467, %15 : vector<16x128xf32>
    %469 = arith.addf %465, %468 : vector<16x128xf32>
    %c337 = arith.constant 337 : index
    %470 = memref.load %arg2[%c337] : memref<441xf32, #tpu.memory_space<smem>>
    %471 = vector.broadcast %470 : f32 to vector<16x128xf32>
    %472 = arith.mulf %471, %17 : vector<16x128xf32>
    %473 = arith.addf %469, %472 : vector<16x128xf32>
    %c127_i32_9 = arith.constant 127 : i32
    %474 = tpu.dynamic_rotate %473 by %c127_i32_9 dim 1 : vector<16x128xf32>, i32 -> vector<16x128xf32>
    %475 = arith.addf %446, %474 : vector<16x128xf32>
    %c296 = arith.constant 296 : index
    %476 = memref.load %arg2[%c296] : memref<441xf32, #tpu.memory_space<smem>>
    %477 = vector.broadcast %476 : f32 to vector<16x128xf32>
    %478 = arith.mulf %477, %5 : vector<16x128xf32>
    %c303 = arith.constant 303 : index
    %479 = memref.load %arg2[%c303] : memref<441xf32, #tpu.memory_space<smem>>
    %480 = vector.broadcast %479 : f32 to vector<16x128xf32>
    %481 = arith.mulf %480, %7 : vector<16x128xf32>
    %482 = arith.addf %478, %481 : vector<16x128xf32>
    %c310 = arith.constant 310 : index
    %483 = memref.load %arg2[%c310] : memref<441xf32, #tpu.memory_space<smem>>
    %484 = vector.broadcast %483 : f32 to vector<16x128xf32>
    %485 = arith.mulf %484, %9 : vector<16x128xf32>
    %486 = arith.addf %482, %485 : vector<16x128xf32>
    %c317 = arith.constant 317 : index
    %487 = memref.load %arg2[%c317] : memref<441xf32, #tpu.memory_space<smem>>
    %488 = vector.broadcast %487 : f32 to vector<16x128xf32>
    %489 = arith.mulf %488, %11 : vector<16x128xf32>
    %490 = arith.addf %486, %489 : vector<16x128xf32>
    %c324 = arith.constant 324 : index
    %491 = memref.load %arg2[%c324] : memref<441xf32, #tpu.memory_space<smem>>
    %492 = vector.broadcast %491 : f32 to vector<16x128xf32>
    %493 = arith.mulf %492, %13 : vector<16x128xf32>
    %494 = arith.addf %490, %493 : vector<16x128xf32>
    %c331 = arith.constant 331 : index
    %495 = memref.load %arg2[%c331] : memref<441xf32, #tpu.memory_space<smem>>
    %496 = vector.broadcast %495 : f32 to vector<16x128xf32>
    %497 = arith.mulf %496, %15 : vector<16x128xf32>
    %498 = arith.addf %494, %497 : vector<16x128xf32>
    %c338 = arith.constant 338 : index
    %499 = memref.load %arg2[%c338] : memref<441xf32, #tpu.memory_space<smem>>
    %500 = vector.broadcast %499 : f32 to vector<16x128xf32>
    %501 = arith.mulf %500, %17 : vector<16x128xf32>
    %502 = arith.addf %498, %501 : vector<16x128xf32>
    %c126_i32_10 = arith.constant 126 : i32
    %503 = tpu.dynamic_rotate %502 by %c126_i32_10 dim 1 : vector<16x128xf32>, i32 -> vector<16x128xf32>
    %504 = arith.addf %475, %503 : vector<16x128xf32>
    %c297 = arith.constant 297 : index
    %505 = memref.load %arg2[%c297] : memref<441xf32, #tpu.memory_space<smem>>
    %506 = vector.broadcast %505 : f32 to vector<16x128xf32>
    %507 = arith.mulf %506, %5 : vector<16x128xf32>
    %c304 = arith.constant 304 : index
    %508 = memref.load %arg2[%c304] : memref<441xf32, #tpu.memory_space<smem>>
    %509 = vector.broadcast %508 : f32 to vector<16x128xf32>
    %510 = arith.mulf %509, %7 : vector<16x128xf32>
    %511 = arith.addf %507, %510 : vector<16x128xf32>
    %c311 = arith.constant 311 : index
    %512 = memref.load %arg2[%c311] : memref<441xf32, #tpu.memory_space<smem>>
    %513 = vector.broadcast %512 : f32 to vector<16x128xf32>
    %514 = arith.mulf %513, %9 : vector<16x128xf32>
    %515 = arith.addf %511, %514 : vector<16x128xf32>
    %c318 = arith.constant 318 : index
    %516 = memref.load %arg2[%c318] : memref<441xf32, #tpu.memory_space<smem>>
    %517 = vector.broadcast %516 : f32 to vector<16x128xf32>
    %518 = arith.mulf %517, %11 : vector<16x128xf32>
    %519 = arith.addf %515, %518 : vector<16x128xf32>
    %c325 = arith.constant 325 : index
    %520 = memref.load %arg2[%c325] : memref<441xf32, #tpu.memory_space<smem>>
    %521 = vector.broadcast %520 : f32 to vector<16x128xf32>
    %522 = arith.mulf %521, %13 : vector<16x128xf32>
    %523 = arith.addf %519, %522 : vector<16x128xf32>
    %c332 = arith.constant 332 : index
    %524 = memref.load %arg2[%c332] : memref<441xf32, #tpu.memory_space<smem>>
    %525 = vector.broadcast %524 : f32 to vector<16x128xf32>
    %526 = arith.mulf %525, %15 : vector<16x128xf32>
    %527 = arith.addf %523, %526 : vector<16x128xf32>
    %c339 = arith.constant 339 : index
    %528 = memref.load %arg2[%c339] : memref<441xf32, #tpu.memory_space<smem>>
    %529 = vector.broadcast %528 : f32 to vector<16x128xf32>
    %530 = arith.mulf %529, %17 : vector<16x128xf32>
    %531 = arith.addf %527, %530 : vector<16x128xf32>
    %c125_i32_11 = arith.constant 125 : i32
    %532 = tpu.dynamic_rotate %531 by %c125_i32_11 dim 1 : vector<16x128xf32>, i32 -> vector<16x128xf32>
    %533 = arith.addf %504, %532 : vector<16x128xf32>
    %c298 = arith.constant 298 : index
    %534 = memref.load %arg2[%c298] : memref<441xf32, #tpu.memory_space<smem>>
    %535 = vector.broadcast %534 : f32 to vector<16x128xf32>
    %536 = arith.mulf %535, %5 : vector<16x128xf32>
    %c305 = arith.constant 305 : index
    %537 = memref.load %arg2[%c305] : memref<441xf32, #tpu.memory_space<smem>>
    %538 = vector.broadcast %537 : f32 to vector<16x128xf32>
    %539 = arith.mulf %538, %7 : vector<16x128xf32>
    %540 = arith.addf %536, %539 : vector<16x128xf32>
    %c312 = arith.constant 312 : index
    %541 = memref.load %arg2[%c312] : memref<441xf32, #tpu.memory_space<smem>>
    %542 = vector.broadcast %541 : f32 to vector<16x128xf32>
    %543 = arith.mulf %542, %9 : vector<16x128xf32>
    %544 = arith.addf %540, %543 : vector<16x128xf32>
    %c319 = arith.constant 319 : index
    %545 = memref.load %arg2[%c319] : memref<441xf32, #tpu.memory_space<smem>>
    %546 = vector.broadcast %545 : f32 to vector<16x128xf32>
    %547 = arith.mulf %546, %11 : vector<16x128xf32>
    %548 = arith.addf %544, %547 : vector<16x128xf32>
    %c326 = arith.constant 326 : index
    %549 = memref.load %arg2[%c326] : memref<441xf32, #tpu.memory_space<smem>>
    %550 = vector.broadcast %549 : f32 to vector<16x128xf32>
    %551 = arith.mulf %550, %13 : vector<16x128xf32>
    %552 = arith.addf %548, %551 : vector<16x128xf32>
    %c333 = arith.constant 333 : index
    %553 = memref.load %arg2[%c333] : memref<441xf32, #tpu.memory_space<smem>>
    %554 = vector.broadcast %553 : f32 to vector<16x128xf32>
    %555 = arith.mulf %554, %15 : vector<16x128xf32>
    %556 = arith.addf %552, %555 : vector<16x128xf32>
    %c340 = arith.constant 340 : index
    %557 = memref.load %arg2[%c340] : memref<441xf32, #tpu.memory_space<smem>>
    %558 = vector.broadcast %557 : f32 to vector<16x128xf32>
    %559 = arith.mulf %558, %17 : vector<16x128xf32>
    %560 = arith.addf %556, %559 : vector<16x128xf32>
    %c124_i32_12 = arith.constant 124 : i32
    %561 = tpu.dynamic_rotate %560 by %c124_i32_12 dim 1 : vector<16x128xf32>, i32 -> vector<16x128xf32>
    %562 = arith.addf %533, %561 : vector<16x128xf32>
    %c299 = arith.constant 299 : index
    %563 = memref.load %arg2[%c299] : memref<441xf32, #tpu.memory_space<smem>>
    %564 = vector.broadcast %563 : f32 to vector<16x128xf32>
    %565 = arith.mulf %564, %5 : vector<16x128xf32>
    %c306 = arith.constant 306 : index
    %566 = memref.load %arg2[%c306] : memref<441xf32, #tpu.memory_space<smem>>
    %567 = vector.broadcast %566 : f32 to vector<16x128xf32>
    %568 = arith.mulf %567, %7 : vector<16x128xf32>
    %569 = arith.addf %565, %568 : vector<16x128xf32>
    %c313 = arith.constant 313 : index
    %570 = memref.load %arg2[%c313] : memref<441xf32, #tpu.memory_space<smem>>
    %571 = vector.broadcast %570 : f32 to vector<16x128xf32>
    %572 = arith.mulf %571, %9 : vector<16x128xf32>
    %573 = arith.addf %569, %572 : vector<16x128xf32>
    %c320 = arith.constant 320 : index
    %574 = memref.load %arg2[%c320] : memref<441xf32, #tpu.memory_space<smem>>
    %575 = vector.broadcast %574 : f32 to vector<16x128xf32>
    %576 = arith.mulf %575, %11 : vector<16x128xf32>
    %577 = arith.addf %573, %576 : vector<16x128xf32>
    %c327 = arith.constant 327 : index
    %578 = memref.load %arg2[%c327] : memref<441xf32, #tpu.memory_space<smem>>
    %579 = vector.broadcast %578 : f32 to vector<16x128xf32>
    %580 = arith.mulf %579, %13 : vector<16x128xf32>
    %581 = arith.addf %577, %580 : vector<16x128xf32>
    %c334 = arith.constant 334 : index
    %582 = memref.load %arg2[%c334] : memref<441xf32, #tpu.memory_space<smem>>
    %583 = vector.broadcast %582 : f32 to vector<16x128xf32>
    %584 = arith.mulf %583, %15 : vector<16x128xf32>
    %585 = arith.addf %581, %584 : vector<16x128xf32>
    %c341 = arith.constant 341 : index
    %586 = memref.load %arg2[%c341] : memref<441xf32, #tpu.memory_space<smem>>
    %587 = vector.broadcast %586 : f32 to vector<16x128xf32>
    %588 = arith.mulf %587, %17 : vector<16x128xf32>
    %589 = arith.addf %585, %588 : vector<16x128xf32>
    %c123_i32_13 = arith.constant 123 : i32
    %590 = tpu.dynamic_rotate %589 by %c123_i32_13 dim 1 : vector<16x128xf32>, i32 -> vector<16x128xf32>
    %591 = arith.addf %562, %590 : vector<16x128xf32>
    %c300 = arith.constant 300 : index
    %592 = memref.load %arg2[%c300] : memref<441xf32, #tpu.memory_space<smem>>
    %593 = vector.broadcast %592 : f32 to vector<16x128xf32>
    %594 = arith.mulf %593, %5 : vector<16x128xf32>
    %c307 = arith.constant 307 : index
    %595 = memref.load %arg2[%c307] : memref<441xf32, #tpu.memory_space<smem>>
    %596 = vector.broadcast %595 : f32 to vector<16x128xf32>
    %597 = arith.mulf %596, %7 : vector<16x128xf32>
    %598 = arith.addf %594, %597 : vector<16x128xf32>
    %c314 = arith.constant 314 : index
    %599 = memref.load %arg2[%c314] : memref<441xf32, #tpu.memory_space<smem>>
    %600 = vector.broadcast %599 : f32 to vector<16x128xf32>
    %601 = arith.mulf %600, %9 : vector<16x128xf32>
    %602 = arith.addf %598, %601 : vector<16x128xf32>
    %c321 = arith.constant 321 : index
    %603 = memref.load %arg2[%c321] : memref<441xf32, #tpu.memory_space<smem>>
    %604 = vector.broadcast %603 : f32 to vector<16x128xf32>
    %605 = arith.mulf %604, %11 : vector<16x128xf32>
    %606 = arith.addf %602, %605 : vector<16x128xf32>
    %c328 = arith.constant 328 : index
    %607 = memref.load %arg2[%c328] : memref<441xf32, #tpu.memory_space<smem>>
    %608 = vector.broadcast %607 : f32 to vector<16x128xf32>
    %609 = arith.mulf %608, %13 : vector<16x128xf32>
    %610 = arith.addf %606, %609 : vector<16x128xf32>
    %c335 = arith.constant 335 : index
    %611 = memref.load %arg2[%c335] : memref<441xf32, #tpu.memory_space<smem>>
    %612 = vector.broadcast %611 : f32 to vector<16x128xf32>
    %613 = arith.mulf %612, %15 : vector<16x128xf32>
    %614 = arith.addf %610, %613 : vector<16x128xf32>
    %c342 = arith.constant 342 : index
    %615 = memref.load %arg2[%c342] : memref<441xf32, #tpu.memory_space<smem>>
    %616 = vector.broadcast %615 : f32 to vector<16x128xf32>
    %617 = arith.mulf %616, %17 : vector<16x128xf32>
    %618 = arith.addf %614, %617 : vector<16x128xf32>
    %c122_i32_14 = arith.constant 122 : i32
    %619 = tpu.dynamic_rotate %618 by %c122_i32_14 dim 1 : vector<16x128xf32>, i32 -> vector<16x128xf32>
    %620 = arith.addf %591, %619 : vector<16x128xf32>
    %c0_15 = arith.constant 0 : index
    %c1_16 = arith.constant 1 : index
    %621 = arith.index_cast %1 : i32 to index
    %c0_17 = arith.constant 0 : index
    %622 = vector.load %arg4[%c0_15, %c1_16, %621, %c0_17] : memref<1x3x40x128xf32, #tpu.memory_space<vmem>>, vector<1x1x24x128xf32>
    %623 = vector.shape_cast %622 : vector<1x1x24x128xf32> to vector<24x128xf32>
    %624 = vector.extract_strided_slice %623 {offsets = [0, 0], sizes = [16, 128], strides = [1, 1]} : vector<24x128xf32> to vector<16x128xf32>
    %c23_i32_18 = arith.constant 23 : i32
    %625 = tpu.dynamic_rotate %623 by %c23_i32_18 dim 0 : vector<24x128xf32>, i32 -> vector<24x128xf32>
    %626 = vector.extract_strided_slice %625 {offsets = [0, 0], sizes = [16, 128], strides = [1, 1]} : vector<24x128xf32> to vector<16x128xf32>
    %c22_i32_19 = arith.constant 22 : i32
    %627 = tpu.dynamic_rotate %623 by %c22_i32_19 dim 0 : vector<24x128xf32>, i32 -> vector<24x128xf32>
    %628 = vector.extract_strided_slice %627 {offsets = [0, 0], sizes = [16, 128], strides = [1, 1]} : vector<24x128xf32> to vector<16x128xf32>
    %c21_i32_20 = arith.constant 21 : i32
    %629 = tpu.dynamic_rotate %623 by %c21_i32_20 dim 0 : vector<24x128xf32>, i32 -> vector<24x128xf32>
    %630 = vector.extract_strided_slice %629 {offsets = [0, 0], sizes = [16, 128], strides = [1, 1]} : vector<24x128xf32> to vector<16x128xf32>
    %c20_i32_21 = arith.constant 20 : i32
    %631 = tpu.dynamic_rotate %623 by %c20_i32_21 dim 0 : vector<24x128xf32>, i32 -> vector<24x128xf32>
    %632 = vector.extract_strided_slice %631 {offsets = [0, 0], sizes = [16, 128], strides = [1, 1]} : vector<24x128xf32> to vector<16x128xf32>
    %c19_i32_22 = arith.constant 19 : i32
    %633 = tpu.dynamic_rotate %623 by %c19_i32_22 dim 0 : vector<24x128xf32>, i32 -> vector<24x128xf32>
    %634 = vector.extract_strided_slice %633 {offsets = [0, 0], sizes = [16, 128], strides = [1, 1]} : vector<24x128xf32> to vector<16x128xf32>
    %c18_i32_23 = arith.constant 18 : i32
    %635 = tpu.dynamic_rotate %623 by %c18_i32_23 dim 0 : vector<24x128xf32>, i32 -> vector<24x128xf32>
    %636 = vector.extract_strided_slice %635 {offsets = [0, 0], sizes = [16, 128], strides = [1, 1]} : vector<24x128xf32> to vector<16x128xf32>
    %c49 = arith.constant 49 : index
    %637 = memref.load %arg2[%c49] : memref<441xf32, #tpu.memory_space<smem>>
    %638 = vector.broadcast %637 : f32 to vector<16x128xf32>
    %639 = arith.mulf %638, %624 : vector<16x128xf32>
    %c56 = arith.constant 56 : index
    %640 = memref.load %arg2[%c56] : memref<441xf32, #tpu.memory_space<smem>>
    %641 = vector.broadcast %640 : f32 to vector<16x128xf32>
    %642 = arith.mulf %641, %626 : vector<16x128xf32>
    %643 = arith.addf %639, %642 : vector<16x128xf32>
    %c63 = arith.constant 63 : index
    %644 = memref.load %arg2[%c63] : memref<441xf32, #tpu.memory_space<smem>>
    %645 = vector.broadcast %644 : f32 to vector<16x128xf32>
    %646 = arith.mulf %645, %628 : vector<16x128xf32>
    %647 = arith.addf %643, %646 : vector<16x128xf32>
    %c70 = arith.constant 70 : index
    %648 = memref.load %arg2[%c70] : memref<441xf32, #tpu.memory_space<smem>>
    %649 = vector.broadcast %648 : f32 to vector<16x128xf32>
    %650 = arith.mulf %649, %630 : vector<16x128xf32>
    %651 = arith.addf %647, %650 : vector<16x128xf32>
    %c77 = arith.constant 77 : index
    %652 = memref.load %arg2[%c77] : memref<441xf32, #tpu.memory_space<smem>>
    %653 = vector.broadcast %652 : f32 to vector<16x128xf32>
    %654 = arith.mulf %653, %632 : vector<16x128xf32>
    %655 = arith.addf %651, %654 : vector<16x128xf32>
    %c84 = arith.constant 84 : index
    %656 = memref.load %arg2[%c84] : memref<441xf32, #tpu.memory_space<smem>>
    %657 = vector.broadcast %656 : f32 to vector<16x128xf32>
    %658 = arith.mulf %657, %634 : vector<16x128xf32>
    %659 = arith.addf %655, %658 : vector<16x128xf32>
    %c91 = arith.constant 91 : index
    %660 = memref.load %arg2[%c91] : memref<441xf32, #tpu.memory_space<smem>>
    %661 = vector.broadcast %660 : f32 to vector<16x128xf32>
    %662 = arith.mulf %661, %636 : vector<16x128xf32>
    %663 = arith.addf %659, %662 : vector<16x128xf32>
    %664 = arith.addf %218, %663 : vector<16x128xf32>
    %c50 = arith.constant 50 : index
    %665 = memref.load %arg2[%c50] : memref<441xf32, #tpu.memory_space<smem>>
    %666 = vector.broadcast %665 : f32 to vector<16x128xf32>
    %667 = arith.mulf %666, %624 : vector<16x128xf32>
    %c57 = arith.constant 57 : index
    %668 = memref.load %arg2[%c57] : memref<441xf32, #tpu.memory_space<smem>>
    %669 = vector.broadcast %668 : f32 to vector<16x128xf32>
    %670 = arith.mulf %669, %626 : vector<16x128xf32>
    %671 = arith.addf %667, %670 : vector<16x128xf32>
    %c64 = arith.constant 64 : index
    %672 = memref.load %arg2[%c64] : memref<441xf32, #tpu.memory_space<smem>>
    %673 = vector.broadcast %672 : f32 to vector<16x128xf32>
    %674 = arith.mulf %673, %628 : vector<16x128xf32>
    %675 = arith.addf %671, %674 : vector<16x128xf32>
    %c71 = arith.constant 71 : index
    %676 = memref.load %arg2[%c71] : memref<441xf32, #tpu.memory_space<smem>>
    %677 = vector.broadcast %676 : f32 to vector<16x128xf32>
    %678 = arith.mulf %677, %630 : vector<16x128xf32>
    %679 = arith.addf %675, %678 : vector<16x128xf32>
    %c78 = arith.constant 78 : index
    %680 = memref.load %arg2[%c78] : memref<441xf32, #tpu.memory_space<smem>>
    %681 = vector.broadcast %680 : f32 to vector<16x128xf32>
    %682 = arith.mulf %681, %632 : vector<16x128xf32>
    %683 = arith.addf %679, %682 : vector<16x128xf32>
    %c85 = arith.constant 85 : index
    %684 = memref.load %arg2[%c85] : memref<441xf32, #tpu.memory_space<smem>>
    %685 = vector.broadcast %684 : f32 to vector<16x128xf32>
    %686 = arith.mulf %685, %634 : vector<16x128xf32>
    %687 = arith.addf %683, %686 : vector<16x128xf32>
    %c92 = arith.constant 92 : index
    %688 = memref.load %arg2[%c92] : memref<441xf32, #tpu.memory_space<smem>>
    %689 = vector.broadcast %688 : f32 to vector<16x128xf32>
    %690 = arith.mulf %689, %636 : vector<16x128xf32>
    %691 = arith.addf %687, %690 : vector<16x128xf32>
    %c127_i32_24 = arith.constant 127 : i32
    %692 = tpu.dynamic_rotate %691 by %c127_i32_24 dim 1 : vector<16x128xf32>, i32 -> vector<16x128xf32>
    %693 = arith.addf %664, %692 : vector<16x128xf32>
    %c51 = arith.constant 51 : index
    %694 = memref.load %arg2[%c51] : memref<441xf32, #tpu.memory_space<smem>>
    %695 = vector.broadcast %694 : f32 to vector<16x128xf32>
    %696 = arith.mulf %695, %624 : vector<16x128xf32>
    %c58 = arith.constant 58 : index
    %697 = memref.load %arg2[%c58] : memref<441xf32, #tpu.memory_space<smem>>
    %698 = vector.broadcast %697 : f32 to vector<16x128xf32>
    %699 = arith.mulf %698, %626 : vector<16x128xf32>
    %700 = arith.addf %696, %699 : vector<16x128xf32>
    %c65 = arith.constant 65 : index
    %701 = memref.load %arg2[%c65] : memref<441xf32, #tpu.memory_space<smem>>
    %702 = vector.broadcast %701 : f32 to vector<16x128xf32>
    %703 = arith.mulf %702, %628 : vector<16x128xf32>
    %704 = arith.addf %700, %703 : vector<16x128xf32>
    %c72 = arith.constant 72 : index
    %705 = memref.load %arg2[%c72] : memref<441xf32, #tpu.memory_space<smem>>
    %706 = vector.broadcast %705 : f32 to vector<16x128xf32>
    %707 = arith.mulf %706, %630 : vector<16x128xf32>
    %708 = arith.addf %704, %707 : vector<16x128xf32>
    %c79 = arith.constant 79 : index
    %709 = memref.load %arg2[%c79] : memref<441xf32, #tpu.memory_space<smem>>
    %710 = vector.broadcast %709 : f32 to vector<16x128xf32>
    %711 = arith.mulf %710, %632 : vector<16x128xf32>
    %712 = arith.addf %708, %711 : vector<16x128xf32>
    %c86 = arith.constant 86 : index
    %713 = memref.load %arg2[%c86] : memref<441xf32, #tpu.memory_space<smem>>
    %714 = vector.broadcast %713 : f32 to vector<16x128xf32>
    %715 = arith.mulf %714, %634 : vector<16x128xf32>
    %716 = arith.addf %712, %715 : vector<16x128xf32>
    %c93 = arith.constant 93 : index
    %717 = memref.load %arg2[%c93] : memref<441xf32, #tpu.memory_space<smem>>
    %718 = vector.broadcast %717 : f32 to vector<16x128xf32>
    %719 = arith.mulf %718, %636 : vector<16x128xf32>
    %720 = arith.addf %716, %719 : vector<16x128xf32>
    %c126_i32_25 = arith.constant 126 : i32
    %721 = tpu.dynamic_rotate %720 by %c126_i32_25 dim 1 : vector<16x128xf32>, i32 -> vector<16x128xf32>
    %722 = arith.addf %693, %721 : vector<16x128xf32>
    %c52 = arith.constant 52 : index
    %723 = memref.load %arg2[%c52] : memref<441xf32, #tpu.memory_space<smem>>
    %724 = vector.broadcast %723 : f32 to vector<16x128xf32>
    %725 = arith.mulf %724, %624 : vector<16x128xf32>
    %c59 = arith.constant 59 : index
    %726 = memref.load %arg2[%c59] : memref<441xf32, #tpu.memory_space<smem>>
    %727 = vector.broadcast %726 : f32 to vector<16x128xf32>
    %728 = arith.mulf %727, %626 : vector<16x128xf32>
    %729 = arith.addf %725, %728 : vector<16x128xf32>
    %c66 = arith.constant 66 : index
    %730 = memref.load %arg2[%c66] : memref<441xf32, #tpu.memory_space<smem>>
    %731 = vector.broadcast %730 : f32 to vector<16x128xf32>
    %732 = arith.mulf %731, %628 : vector<16x128xf32>
    %733 = arith.addf %729, %732 : vector<16x128xf32>
    %c73 = arith.constant 73 : index
    %734 = memref.load %arg2[%c73] : memref<441xf32, #tpu.memory_space<smem>>
    %735 = vector.broadcast %734 : f32 to vector<16x128xf32>
    %736 = arith.mulf %735, %630 : vector<16x128xf32>
    %737 = arith.addf %733, %736 : vector<16x128xf32>
    %c80 = arith.constant 80 : index
    %738 = memref.load %arg2[%c80] : memref<441xf32, #tpu.memory_space<smem>>
    %739 = vector.broadcast %738 : f32 to vector<16x128xf32>
    %740 = arith.mulf %739, %632 : vector<16x128xf32>
    %741 = arith.addf %737, %740 : vector<16x128xf32>
    %c87 = arith.constant 87 : index
    %742 = memref.load %arg2[%c87] : memref<441xf32, #tpu.memory_space<smem>>
    %743 = vector.broadcast %742 : f32 to vector<16x128xf32>
    %744 = arith.mulf %743, %634 : vector<16x128xf32>
    %745 = arith.addf %741, %744 : vector<16x128xf32>
    %c94 = arith.constant 94 : index
    %746 = memref.load %arg2[%c94] : memref<441xf32, #tpu.memory_space<smem>>
    %747 = vector.broadcast %746 : f32 to vector<16x128xf32>
    %748 = arith.mulf %747, %636 : vector<16x128xf32>
    %749 = arith.addf %745, %748 : vector<16x128xf32>
    %c125_i32_26 = arith.constant 125 : i32
    %750 = tpu.dynamic_rotate %749 by %c125_i32_26 dim 1 : vector<16x128xf32>, i32 -> vector<16x128xf32>
    %751 = arith.addf %722, %750 : vector<16x128xf32>
    %c53 = arith.constant 53 : index
    %752 = memref.load %arg2[%c53] : memref<441xf32, #tpu.memory_space<smem>>
    %753 = vector.broadcast %752 : f32 to vector<16x128xf32>
    %754 = arith.mulf %753, %624 : vector<16x128xf32>
    %c60 = arith.constant 60 : index
    %755 = memref.load %arg2[%c60] : memref<441xf32, #tpu.memory_space<smem>>
    %756 = vector.broadcast %755 : f32 to vector<16x128xf32>
    %757 = arith.mulf %756, %626 : vector<16x128xf32>
    %758 = arith.addf %754, %757 : vector<16x128xf32>
    %c67 = arith.constant 67 : index
    %759 = memref.load %arg2[%c67] : memref<441xf32, #tpu.memory_space<smem>>
    %760 = vector.broadcast %759 : f32 to vector<16x128xf32>
    %761 = arith.mulf %760, %628 : vector<16x128xf32>
    %762 = arith.addf %758, %761 : vector<16x128xf32>
    %c74 = arith.constant 74 : index
    %763 = memref.load %arg2[%c74] : memref<441xf32, #tpu.memory_space<smem>>
    %764 = vector.broadcast %763 : f32 to vector<16x128xf32>
    %765 = arith.mulf %764, %630 : vector<16x128xf32>
    %766 = arith.addf %762, %765 : vector<16x128xf32>
    %c81 = arith.constant 81 : index
    %767 = memref.load %arg2[%c81] : memref<441xf32, #tpu.memory_space<smem>>
    %768 = vector.broadcast %767 : f32 to vector<16x128xf32>
    %769 = arith.mulf %768, %632 : vector<16x128xf32>
    %770 = arith.addf %766, %769 : vector<16x128xf32>
    %c88 = arith.constant 88 : index
    %771 = memref.load %arg2[%c88] : memref<441xf32, #tpu.memory_space<smem>>
    %772 = vector.broadcast %771 : f32 to vector<16x128xf32>
    %773 = arith.mulf %772, %634 : vector<16x128xf32>
    %774 = arith.addf %770, %773 : vector<16x128xf32>
    %c95 = arith.constant 95 : index
    %775 = memref.load %arg2[%c95] : memref<441xf32, #tpu.memory_space<smem>>
    %776 = vector.broadcast %775 : f32 to vector<16x128xf32>
    %777 = arith.mulf %776, %636 : vector<16x128xf32>
    %778 = arith.addf %774, %777 : vector<16x128xf32>
    %c124_i32_27 = arith.constant 124 : i32
    %779 = tpu.dynamic_rotate %778 by %c124_i32_27 dim 1 : vector<16x128xf32>, i32 -> vector<16x128xf32>
    %780 = arith.addf %751, %779 : vector<16x128xf32>
    %c54 = arith.constant 54 : index
    %781 = memref.load %arg2[%c54] : memref<441xf32, #tpu.memory_space<smem>>
    %782 = vector.broadcast %781 : f32 to vector<16x128xf32>
    %783 = arith.mulf %782, %624 : vector<16x128xf32>
    %c61 = arith.constant 61 : index
    %784 = memref.load %arg2[%c61] : memref<441xf32, #tpu.memory_space<smem>>
    %785 = vector.broadcast %784 : f32 to vector<16x128xf32>
    %786 = arith.mulf %785, %626 : vector<16x128xf32>
    %787 = arith.addf %783, %786 : vector<16x128xf32>
    %c68 = arith.constant 68 : index
    %788 = memref.load %arg2[%c68] : memref<441xf32, #tpu.memory_space<smem>>
    %789 = vector.broadcast %788 : f32 to vector<16x128xf32>
    %790 = arith.mulf %789, %628 : vector<16x128xf32>
    %791 = arith.addf %787, %790 : vector<16x128xf32>
    %c75 = arith.constant 75 : index
    %792 = memref.load %arg2[%c75] : memref<441xf32, #tpu.memory_space<smem>>
    %793 = vector.broadcast %792 : f32 to vector<16x128xf32>
    %794 = arith.mulf %793, %630 : vector<16x128xf32>
    %795 = arith.addf %791, %794 : vector<16x128xf32>
    %c82 = arith.constant 82 : index
    %796 = memref.load %arg2[%c82] : memref<441xf32, #tpu.memory_space<smem>>
    %797 = vector.broadcast %796 : f32 to vector<16x128xf32>
    %798 = arith.mulf %797, %632 : vector<16x128xf32>
    %799 = arith.addf %795, %798 : vector<16x128xf32>
    %c89 = arith.constant 89 : index
    %800 = memref.load %arg2[%c89] : memref<441xf32, #tpu.memory_space<smem>>
    %801 = vector.broadcast %800 : f32 to vector<16x128xf32>
    %802 = arith.mulf %801, %634 : vector<16x128xf32>
    %803 = arith.addf %799, %802 : vector<16x128xf32>
    %c96 = arith.constant 96 : index
    %804 = memref.load %arg2[%c96] : memref<441xf32, #tpu.memory_space<smem>>
    %805 = vector.broadcast %804 : f32 to vector<16x128xf32>
    %806 = arith.mulf %805, %636 : vector<16x128xf32>
    %807 = arith.addf %803, %806 : vector<16x128xf32>
    %c123_i32_28 = arith.constant 123 : i32
    %808 = tpu.dynamic_rotate %807 by %c123_i32_28 dim 1 : vector<16x128xf32>, i32 -> vector<16x128xf32>
    %809 = arith.addf %780, %808 : vector<16x128xf32>
    %c55 = arith.constant 55 : index
    %810 = memref.load %arg2[%c55] : memref<441xf32, #tpu.memory_space<smem>>
    %811 = vector.broadcast %810 : f32 to vector<16x128xf32>
    %812 = arith.mulf %811, %624 : vector<16x128xf32>
    %c62 = arith.constant 62 : index
    %813 = memref.load %arg2[%c62] : memref<441xf32, #tpu.memory_space<smem>>
    %814 = vector.broadcast %813 : f32 to vector<16x128xf32>
    %815 = arith.mulf %814, %626 : vector<16x128xf32>
    %816 = arith.addf %812, %815 : vector<16x128xf32>
    %c69 = arith.constant 69 : index
    %817 = memref.load %arg2[%c69] : memref<441xf32, #tpu.memory_space<smem>>
    %818 = vector.broadcast %817 : f32 to vector<16x128xf32>
    %819 = arith.mulf %818, %628 : vector<16x128xf32>
    %820 = arith.addf %816, %819 : vector<16x128xf32>
    %c76 = arith.constant 76 : index
    %821 = memref.load %arg2[%c76] : memref<441xf32, #tpu.memory_space<smem>>
    %822 = vector.broadcast %821 : f32 to vector<16x128xf32>
    %823 = arith.mulf %822, %630 : vector<16x128xf32>
    %824 = arith.addf %820, %823 : vector<16x128xf32>
    %c83 = arith.constant 83 : index
    %825 = memref.load %arg2[%c83] : memref<441xf32, #tpu.memory_space<smem>>
    %826 = vector.broadcast %825 : f32 to vector<16x128xf32>
    %827 = arith.mulf %826, %632 : vector<16x128xf32>
    %828 = arith.addf %824, %827 : vector<16x128xf32>
    %c90 = arith.constant 90 : index
    %829 = memref.load %arg2[%c90] : memref<441xf32, #tpu.memory_space<smem>>
    %830 = vector.broadcast %829 : f32 to vector<16x128xf32>
    %831 = arith.mulf %830, %634 : vector<16x128xf32>
    %832 = arith.addf %828, %831 : vector<16x128xf32>
    %c97 = arith.constant 97 : index
    %833 = memref.load %arg2[%c97] : memref<441xf32, #tpu.memory_space<smem>>
    %834 = vector.broadcast %833 : f32 to vector<16x128xf32>
    %835 = arith.mulf %834, %636 : vector<16x128xf32>
    %836 = arith.addf %832, %835 : vector<16x128xf32>
    %c122_i32_29 = arith.constant 122 : i32
    %837 = tpu.dynamic_rotate %836 by %c122_i32_29 dim 1 : vector<16x128xf32>, i32 -> vector<16x128xf32>
    %838 = arith.addf %809, %837 : vector<16x128xf32>
    %c196 = arith.constant 196 : index
    %839 = memref.load %arg2[%c196] : memref<441xf32, #tpu.memory_space<smem>>
    %840 = vector.broadcast %839 : f32 to vector<16x128xf32>
    %841 = arith.mulf %840, %624 : vector<16x128xf32>
    %c203 = arith.constant 203 : index
    %842 = memref.load %arg2[%c203] : memref<441xf32, #tpu.memory_space<smem>>
    %843 = vector.broadcast %842 : f32 to vector<16x128xf32>
    %844 = arith.mulf %843, %626 : vector<16x128xf32>
    %845 = arith.addf %841, %844 : vector<16x128xf32>
    %c210 = arith.constant 210 : index
    %846 = memref.load %arg2[%c210] : memref<441xf32, #tpu.memory_space<smem>>
    %847 = vector.broadcast %846 : f32 to vector<16x128xf32>
    %848 = arith.mulf %847, %628 : vector<16x128xf32>
    %849 = arith.addf %845, %848 : vector<16x128xf32>
    %c217 = arith.constant 217 : index
    %850 = memref.load %arg2[%c217] : memref<441xf32, #tpu.memory_space<smem>>
    %851 = vector.broadcast %850 : f32 to vector<16x128xf32>
    %852 = arith.mulf %851, %630 : vector<16x128xf32>
    %853 = arith.addf %849, %852 : vector<16x128xf32>
    %c224 = arith.constant 224 : index
    %854 = memref.load %arg2[%c224] : memref<441xf32, #tpu.memory_space<smem>>
    %855 = vector.broadcast %854 : f32 to vector<16x128xf32>
    %856 = arith.mulf %855, %632 : vector<16x128xf32>
    %857 = arith.addf %853, %856 : vector<16x128xf32>
    %c231 = arith.constant 231 : index
    %858 = memref.load %arg2[%c231] : memref<441xf32, #tpu.memory_space<smem>>
    %859 = vector.broadcast %858 : f32 to vector<16x128xf32>
    %860 = arith.mulf %859, %634 : vector<16x128xf32>
    %861 = arith.addf %857, %860 : vector<16x128xf32>
    %c238 = arith.constant 238 : index
    %862 = memref.load %arg2[%c238] : memref<441xf32, #tpu.memory_space<smem>>
    %863 = vector.broadcast %862 : f32 to vector<16x128xf32>
    %864 = arith.mulf %863, %636 : vector<16x128xf32>
    %865 = arith.addf %861, %864 : vector<16x128xf32>
    %866 = arith.addf %419, %865 : vector<16x128xf32>
    %c197 = arith.constant 197 : index
    %867 = memref.load %arg2[%c197] : memref<441xf32, #tpu.memory_space<smem>>
    %868 = vector.broadcast %867 : f32 to vector<16x128xf32>
    %869 = arith.mulf %868, %624 : vector<16x128xf32>
    %c204 = arith.constant 204 : index
    %870 = memref.load %arg2[%c204] : memref<441xf32, #tpu.memory_space<smem>>
    %871 = vector.broadcast %870 : f32 to vector<16x128xf32>
    %872 = arith.mulf %871, %626 : vector<16x128xf32>
    %873 = arith.addf %869, %872 : vector<16x128xf32>
    %c211 = arith.constant 211 : index
    %874 = memref.load %arg2[%c211] : memref<441xf32, #tpu.memory_space<smem>>
    %875 = vector.broadcast %874 : f32 to vector<16x128xf32>
    %876 = arith.mulf %875, %628 : vector<16x128xf32>
    %877 = arith.addf %873, %876 : vector<16x128xf32>
    %c218 = arith.constant 218 : index
    %878 = memref.load %arg2[%c218] : memref<441xf32, #tpu.memory_space<smem>>
    %879 = vector.broadcast %878 : f32 to vector<16x128xf32>
    %880 = arith.mulf %879, %630 : vector<16x128xf32>
    %881 = arith.addf %877, %880 : vector<16x128xf32>
    %c225 = arith.constant 225 : index
    %882 = memref.load %arg2[%c225] : memref<441xf32, #tpu.memory_space<smem>>
    %883 = vector.broadcast %882 : f32 to vector<16x128xf32>
    %884 = arith.mulf %883, %632 : vector<16x128xf32>
    %885 = arith.addf %881, %884 : vector<16x128xf32>
    %c232 = arith.constant 232 : index
    %886 = memref.load %arg2[%c232] : memref<441xf32, #tpu.memory_space<smem>>
    %887 = vector.broadcast %886 : f32 to vector<16x128xf32>
    %888 = arith.mulf %887, %634 : vector<16x128xf32>
    %889 = arith.addf %885, %888 : vector<16x128xf32>
    %c239 = arith.constant 239 : index
    %890 = memref.load %arg2[%c239] : memref<441xf32, #tpu.memory_space<smem>>
    %891 = vector.broadcast %890 : f32 to vector<16x128xf32>
    %892 = arith.mulf %891, %636 : vector<16x128xf32>
    %893 = arith.addf %889, %892 : vector<16x128xf32>
    %c127_i32_30 = arith.constant 127 : i32
    %894 = tpu.dynamic_rotate %893 by %c127_i32_30 dim 1 : vector<16x128xf32>, i32 -> vector<16x128xf32>
    %895 = arith.addf %866, %894 : vector<16x128xf32>
    %c198 = arith.constant 198 : index
    %896 = memref.load %arg2[%c198] : memref<441xf32, #tpu.memory_space<smem>>
    %897 = vector.broadcast %896 : f32 to vector<16x128xf32>
    %898 = arith.mulf %897, %624 : vector<16x128xf32>
    %c205 = arith.constant 205 : index
    %899 = memref.load %arg2[%c205] : memref<441xf32, #tpu.memory_space<smem>>
    %900 = vector.broadcast %899 : f32 to vector<16x128xf32>
    %901 = arith.mulf %900, %626 : vector<16x128xf32>
    %902 = arith.addf %898, %901 : vector<16x128xf32>
    %c212 = arith.constant 212 : index
    %903 = memref.load %arg2[%c212] : memref<441xf32, #tpu.memory_space<smem>>
    %904 = vector.broadcast %903 : f32 to vector<16x128xf32>
    %905 = arith.mulf %904, %628 : vector<16x128xf32>
    %906 = arith.addf %902, %905 : vector<16x128xf32>
    %c219 = arith.constant 219 : index
    %907 = memref.load %arg2[%c219] : memref<441xf32, #tpu.memory_space<smem>>
    %908 = vector.broadcast %907 : f32 to vector<16x128xf32>
    %909 = arith.mulf %908, %630 : vector<16x128xf32>
    %910 = arith.addf %906, %909 : vector<16x128xf32>
    %c226 = arith.constant 226 : index
    %911 = memref.load %arg2[%c226] : memref<441xf32, #tpu.memory_space<smem>>
    %912 = vector.broadcast %911 : f32 to vector<16x128xf32>
    %913 = arith.mulf %912, %632 : vector<16x128xf32>
    %914 = arith.addf %910, %913 : vector<16x128xf32>
    %c233 = arith.constant 233 : index
    %915 = memref.load %arg2[%c233] : memref<441xf32, #tpu.memory_space<smem>>
    %916 = vector.broadcast %915 : f32 to vector<16x128xf32>
    %917 = arith.mulf %916, %634 : vector<16x128xf32>
    %918 = arith.addf %914, %917 : vector<16x128xf32>
    %c240 = arith.constant 240 : index
    %919 = memref.load %arg2[%c240] : memref<441xf32, #tpu.memory_space<smem>>
    %920 = vector.broadcast %919 : f32 to vector<16x128xf32>
    %921 = arith.mulf %920, %636 : vector<16x128xf32>
    %922 = arith.addf %918, %921 : vector<16x128xf32>
    %c126_i32_31 = arith.constant 126 : i32
    %923 = tpu.dynamic_rotate %922 by %c126_i32_31 dim 1 : vector<16x128xf32>, i32 -> vector<16x128xf32>
    %924 = arith.addf %895, %923 : vector<16x128xf32>
    %c199 = arith.constant 199 : index
    %925 = memref.load %arg2[%c199] : memref<441xf32, #tpu.memory_space<smem>>
    %926 = vector.broadcast %925 : f32 to vector<16x128xf32>
    %927 = arith.mulf %926, %624 : vector<16x128xf32>
    %c206 = arith.constant 206 : index
    %928 = memref.load %arg2[%c206] : memref<441xf32, #tpu.memory_space<smem>>
    %929 = vector.broadcast %928 : f32 to vector<16x128xf32>
    %930 = arith.mulf %929, %626 : vector<16x128xf32>
    %931 = arith.addf %927, %930 : vector<16x128xf32>
    %c213 = arith.constant 213 : index
    %932 = memref.load %arg2[%c213] : memref<441xf32, #tpu.memory_space<smem>>
    %933 = vector.broadcast %932 : f32 to vector<16x128xf32>
    %934 = arith.mulf %933, %628 : vector<16x128xf32>
    %935 = arith.addf %931, %934 : vector<16x128xf32>
    %c220 = arith.constant 220 : index
    %936 = memref.load %arg2[%c220] : memref<441xf32, #tpu.memory_space<smem>>
    %937 = vector.broadcast %936 : f32 to vector<16x128xf32>
    %938 = arith.mulf %937, %630 : vector<16x128xf32>
    %939 = arith.addf %935, %938 : vector<16x128xf32>
    %c227 = arith.constant 227 : index
    %940 = memref.load %arg2[%c227] : memref<441xf32, #tpu.memory_space<smem>>
    %941 = vector.broadcast %940 : f32 to vector<16x128xf32>
    %942 = arith.mulf %941, %632 : vector<16x128xf32>
    %943 = arith.addf %939, %942 : vector<16x128xf32>
    %c234 = arith.constant 234 : index
    %944 = memref.load %arg2[%c234] : memref<441xf32, #tpu.memory_space<smem>>
    %945 = vector.broadcast %944 : f32 to vector<16x128xf32>
    %946 = arith.mulf %945, %634 : vector<16x128xf32>
    %947 = arith.addf %943, %946 : vector<16x128xf32>
    %c241 = arith.constant 241 : index
    %948 = memref.load %arg2[%c241] : memref<441xf32, #tpu.memory_space<smem>>
    %949 = vector.broadcast %948 : f32 to vector<16x128xf32>
    %950 = arith.mulf %949, %636 : vector<16x128xf32>
    %951 = arith.addf %947, %950 : vector<16x128xf32>
    %c125_i32_32 = arith.constant 125 : i32
    %952 = tpu.dynamic_rotate %951 by %c125_i32_32 dim 1 : vector<16x128xf32>, i32 -> vector<16x128xf32>
    %953 = arith.addf %924, %952 : vector<16x128xf32>
    %c200 = arith.constant 200 : index
    %954 = memref.load %arg2[%c200] : memref<441xf32, #tpu.memory_space<smem>>
    %955 = vector.broadcast %954 : f32 to vector<16x128xf32>
    %956 = arith.mulf %955, %624 : vector<16x128xf32>
    %c207 = arith.constant 207 : index
    %957 = memref.load %arg2[%c207] : memref<441xf32, #tpu.memory_space<smem>>
    %958 = vector.broadcast %957 : f32 to vector<16x128xf32>
    %959 = arith.mulf %958, %626 : vector<16x128xf32>
    %960 = arith.addf %956, %959 : vector<16x128xf32>
    %c214 = arith.constant 214 : index
    %961 = memref.load %arg2[%c214] : memref<441xf32, #tpu.memory_space<smem>>
    %962 = vector.broadcast %961 : f32 to vector<16x128xf32>
    %963 = arith.mulf %962, %628 : vector<16x128xf32>
    %964 = arith.addf %960, %963 : vector<16x128xf32>
    %c221 = arith.constant 221 : index
    %965 = memref.load %arg2[%c221] : memref<441xf32, #tpu.memory_space<smem>>
    %966 = vector.broadcast %965 : f32 to vector<16x128xf32>
    %967 = arith.mulf %966, %630 : vector<16x128xf32>
    %968 = arith.addf %964, %967 : vector<16x128xf32>
    %c228 = arith.constant 228 : index
    %969 = memref.load %arg2[%c228] : memref<441xf32, #tpu.memory_space<smem>>
    %970 = vector.broadcast %969 : f32 to vector<16x128xf32>
    %971 = arith.mulf %970, %632 : vector<16x128xf32>
    %972 = arith.addf %968, %971 : vector<16x128xf32>
    %c235 = arith.constant 235 : index
    %973 = memref.load %arg2[%c235] : memref<441xf32, #tpu.memory_space<smem>>
    %974 = vector.broadcast %973 : f32 to vector<16x128xf32>
    %975 = arith.mulf %974, %634 : vector<16x128xf32>
    %976 = arith.addf %972, %975 : vector<16x128xf32>
    %c242 = arith.constant 242 : index
    %977 = memref.load %arg2[%c242] : memref<441xf32, #tpu.memory_space<smem>>
    %978 = vector.broadcast %977 : f32 to vector<16x128xf32>
    %979 = arith.mulf %978, %636 : vector<16x128xf32>
    %980 = arith.addf %976, %979 : vector<16x128xf32>
    %c124_i32_33 = arith.constant 124 : i32
    %981 = tpu.dynamic_rotate %980 by %c124_i32_33 dim 1 : vector<16x128xf32>, i32 -> vector<16x128xf32>
    %982 = arith.addf %953, %981 : vector<16x128xf32>
    %c201 = arith.constant 201 : index
    %983 = memref.load %arg2[%c201] : memref<441xf32, #tpu.memory_space<smem>>
    %984 = vector.broadcast %983 : f32 to vector<16x128xf32>
    %985 = arith.mulf %984, %624 : vector<16x128xf32>
    %c208 = arith.constant 208 : index
    %986 = memref.load %arg2[%c208] : memref<441xf32, #tpu.memory_space<smem>>
    %987 = vector.broadcast %986 : f32 to vector<16x128xf32>
    %988 = arith.mulf %987, %626 : vector<16x128xf32>
    %989 = arith.addf %985, %988 : vector<16x128xf32>
    %c215 = arith.constant 215 : index
    %990 = memref.load %arg2[%c215] : memref<441xf32, #tpu.memory_space<smem>>
    %991 = vector.broadcast %990 : f32 to vector<16x128xf32>
    %992 = arith.mulf %991, %628 : vector<16x128xf32>
    %993 = arith.addf %989, %992 : vector<16x128xf32>
    %c222 = arith.constant 222 : index
    %994 = memref.load %arg2[%c222] : memref<441xf32, #tpu.memory_space<smem>>
    %995 = vector.broadcast %994 : f32 to vector<16x128xf32>
    %996 = arith.mulf %995, %630 : vector<16x128xf32>
    %997 = arith.addf %993, %996 : vector<16x128xf32>
    %c229 = arith.constant 229 : index
    %998 = memref.load %arg2[%c229] : memref<441xf32, #tpu.memory_space<smem>>
    %999 = vector.broadcast %998 : f32 to vector<16x128xf32>
    %1000 = arith.mulf %999, %632 : vector<16x128xf32>
    %1001 = arith.addf %997, %1000 : vector<16x128xf32>
    %c236 = arith.constant 236 : index
    %1002 = memref.load %arg2[%c236] : memref<441xf32, #tpu.memory_space<smem>>
    %1003 = vector.broadcast %1002 : f32 to vector<16x128xf32>
    %1004 = arith.mulf %1003, %634 : vector<16x128xf32>
    %1005 = arith.addf %1001, %1004 : vector<16x128xf32>
    %c243 = arith.constant 243 : index
    %1006 = memref.load %arg2[%c243] : memref<441xf32, #tpu.memory_space<smem>>
    %1007 = vector.broadcast %1006 : f32 to vector<16x128xf32>
    %1008 = arith.mulf %1007, %636 : vector<16x128xf32>
    %1009 = arith.addf %1005, %1008 : vector<16x128xf32>
    %c123_i32_34 = arith.constant 123 : i32
    %1010 = tpu.dynamic_rotate %1009 by %c123_i32_34 dim 1 : vector<16x128xf32>, i32 -> vector<16x128xf32>
    %1011 = arith.addf %982, %1010 : vector<16x128xf32>
    %c202 = arith.constant 202 : index
    %1012 = memref.load %arg2[%c202] : memref<441xf32, #tpu.memory_space<smem>>
    %1013 = vector.broadcast %1012 : f32 to vector<16x128xf32>
    %1014 = arith.mulf %1013, %624 : vector<16x128xf32>
    %c209 = arith.constant 209 : index
    %1015 = memref.load %arg2[%c209] : memref<441xf32, #tpu.memory_space<smem>>
    %1016 = vector.broadcast %1015 : f32 to vector<16x128xf32>
    %1017 = arith.mulf %1016, %626 : vector<16x128xf32>
    %1018 = arith.addf %1014, %1017 : vector<16x128xf32>
    %c216 = arith.constant 216 : index
    %1019 = memref.load %arg2[%c216] : memref<441xf32, #tpu.memory_space<smem>>
    %1020 = vector.broadcast %1019 : f32 to vector<16x128xf32>
    %1021 = arith.mulf %1020, %628 : vector<16x128xf32>
    %1022 = arith.addf %1018, %1021 : vector<16x128xf32>
    %c223 = arith.constant 223 : index
    %1023 = memref.load %arg2[%c223] : memref<441xf32, #tpu.memory_space<smem>>
    %1024 = vector.broadcast %1023 : f32 to vector<16x128xf32>
    %1025 = arith.mulf %1024, %630 : vector<16x128xf32>
    %1026 = arith.addf %1022, %1025 : vector<16x128xf32>
    %c230 = arith.constant 230 : index
    %1027 = memref.load %arg2[%c230] : memref<441xf32, #tpu.memory_space<smem>>
    %1028 = vector.broadcast %1027 : f32 to vector<16x128xf32>
    %1029 = arith.mulf %1028, %632 : vector<16x128xf32>
    %1030 = arith.addf %1026, %1029 : vector<16x128xf32>
    %c237 = arith.constant 237 : index
    %1031 = memref.load %arg2[%c237] : memref<441xf32, #tpu.memory_space<smem>>
    %1032 = vector.broadcast %1031 : f32 to vector<16x128xf32>
    %1033 = arith.mulf %1032, %634 : vector<16x128xf32>
    %1034 = arith.addf %1030, %1033 : vector<16x128xf32>
    %c244 = arith.constant 244 : index
    %1035 = memref.load %arg2[%c244] : memref<441xf32, #tpu.memory_space<smem>>
    %1036 = vector.broadcast %1035 : f32 to vector<16x128xf32>
    %1037 = arith.mulf %1036, %636 : vector<16x128xf32>
    %1038 = arith.addf %1034, %1037 : vector<16x128xf32>
    %c122_i32_35 = arith.constant 122 : i32
    %1039 = tpu.dynamic_rotate %1038 by %c122_i32_35 dim 1 : vector<16x128xf32>, i32 -> vector<16x128xf32>
    %1040 = arith.addf %1011, %1039 : vector<16x128xf32>
    %c343 = arith.constant 343 : index
    %1041 = memref.load %arg2[%c343] : memref<441xf32, #tpu.memory_space<smem>>
    %1042 = vector.broadcast %1041 : f32 to vector<16x128xf32>
    %1043 = arith.mulf %1042, %624 : vector<16x128xf32>
    %c350 = arith.constant 350 : index
    %1044 = memref.load %arg2[%c350] : memref<441xf32, #tpu.memory_space<smem>>
    %1045 = vector.broadcast %1044 : f32 to vector<16x128xf32>
    %1046 = arith.mulf %1045, %626 : vector<16x128xf32>
    %1047 = arith.addf %1043, %1046 : vector<16x128xf32>
    %c357 = arith.constant 357 : index
    %1048 = memref.load %arg2[%c357] : memref<441xf32, #tpu.memory_space<smem>>
    %1049 = vector.broadcast %1048 : f32 to vector<16x128xf32>
    %1050 = arith.mulf %1049, %628 : vector<16x128xf32>
    %1051 = arith.addf %1047, %1050 : vector<16x128xf32>
    %c364 = arith.constant 364 : index
    %1052 = memref.load %arg2[%c364] : memref<441xf32, #tpu.memory_space<smem>>
    %1053 = vector.broadcast %1052 : f32 to vector<16x128xf32>
    %1054 = arith.mulf %1053, %630 : vector<16x128xf32>
    %1055 = arith.addf %1051, %1054 : vector<16x128xf32>
    %c371 = arith.constant 371 : index
    %1056 = memref.load %arg2[%c371] : memref<441xf32, #tpu.memory_space<smem>>
    %1057 = vector.broadcast %1056 : f32 to vector<16x128xf32>
    %1058 = arith.mulf %1057, %632 : vector<16x128xf32>
    %1059 = arith.addf %1055, %1058 : vector<16x128xf32>
    %c378 = arith.constant 378 : index
    %1060 = memref.load %arg2[%c378] : memref<441xf32, #tpu.memory_space<smem>>
    %1061 = vector.broadcast %1060 : f32 to vector<16x128xf32>
    %1062 = arith.mulf %1061, %634 : vector<16x128xf32>
    %1063 = arith.addf %1059, %1062 : vector<16x128xf32>
    %c385 = arith.constant 385 : index
    %1064 = memref.load %arg2[%c385] : memref<441xf32, #tpu.memory_space<smem>>
    %1065 = vector.broadcast %1064 : f32 to vector<16x128xf32>
    %1066 = arith.mulf %1065, %636 : vector<16x128xf32>
    %1067 = arith.addf %1063, %1066 : vector<16x128xf32>
    %1068 = arith.addf %620, %1067 : vector<16x128xf32>
    %c344 = arith.constant 344 : index
    %1069 = memref.load %arg2[%c344] : memref<441xf32, #tpu.memory_space<smem>>
    %1070 = vector.broadcast %1069 : f32 to vector<16x128xf32>
    %1071 = arith.mulf %1070, %624 : vector<16x128xf32>
    %c351 = arith.constant 351 : index
    %1072 = memref.load %arg2[%c351] : memref<441xf32, #tpu.memory_space<smem>>
    %1073 = vector.broadcast %1072 : f32 to vector<16x128xf32>
    %1074 = arith.mulf %1073, %626 : vector<16x128xf32>
    %1075 = arith.addf %1071, %1074 : vector<16x128xf32>
    %c358 = arith.constant 358 : index
    %1076 = memref.load %arg2[%c358] : memref<441xf32, #tpu.memory_space<smem>>
    %1077 = vector.broadcast %1076 : f32 to vector<16x128xf32>
    %1078 = arith.mulf %1077, %628 : vector<16x128xf32>
    %1079 = arith.addf %1075, %1078 : vector<16x128xf32>
    %c365 = arith.constant 365 : index
    %1080 = memref.load %arg2[%c365] : memref<441xf32, #tpu.memory_space<smem>>
    %1081 = vector.broadcast %1080 : f32 to vector<16x128xf32>
    %1082 = arith.mulf %1081, %630 : vector<16x128xf32>
    %1083 = arith.addf %1079, %1082 : vector<16x128xf32>
    %c372 = arith.constant 372 : index
    %1084 = memref.load %arg2[%c372] : memref<441xf32, #tpu.memory_space<smem>>
    %1085 = vector.broadcast %1084 : f32 to vector<16x128xf32>
    %1086 = arith.mulf %1085, %632 : vector<16x128xf32>
    %1087 = arith.addf %1083, %1086 : vector<16x128xf32>
    %c379 = arith.constant 379 : index
    %1088 = memref.load %arg2[%c379] : memref<441xf32, #tpu.memory_space<smem>>
    %1089 = vector.broadcast %1088 : f32 to vector<16x128xf32>
    %1090 = arith.mulf %1089, %634 : vector<16x128xf32>
    %1091 = arith.addf %1087, %1090 : vector<16x128xf32>
    %c386 = arith.constant 386 : index
    %1092 = memref.load %arg2[%c386] : memref<441xf32, #tpu.memory_space<smem>>
    %1093 = vector.broadcast %1092 : f32 to vector<16x128xf32>
    %1094 = arith.mulf %1093, %636 : vector<16x128xf32>
    %1095 = arith.addf %1091, %1094 : vector<16x128xf32>
    %c127_i32_36 = arith.constant 127 : i32
    %1096 = tpu.dynamic_rotate %1095 by %c127_i32_36 dim 1 : vector<16x128xf32>, i32 -> vector<16x128xf32>
    %1097 = arith.addf %1068, %1096 : vector<16x128xf32>
    %c345 = arith.constant 345 : index
    %1098 = memref.load %arg2[%c345] : memref<441xf32, #tpu.memory_space<smem>>
    %1099 = vector.broadcast %1098 : f32 to vector<16x128xf32>
    %1100 = arith.mulf %1099, %624 : vector<16x128xf32>
    %c352 = arith.constant 352 : index
    %1101 = memref.load %arg2[%c352] : memref<441xf32, #tpu.memory_space<smem>>
    %1102 = vector.broadcast %1101 : f32 to vector<16x128xf32>
    %1103 = arith.mulf %1102, %626 : vector<16x128xf32>
    %1104 = arith.addf %1100, %1103 : vector<16x128xf32>
    %c359 = arith.constant 359 : index
    %1105 = memref.load %arg2[%c359] : memref<441xf32, #tpu.memory_space<smem>>
    %1106 = vector.broadcast %1105 : f32 to vector<16x128xf32>
    %1107 = arith.mulf %1106, %628 : vector<16x128xf32>
    %1108 = arith.addf %1104, %1107 : vector<16x128xf32>
    %c366 = arith.constant 366 : index
    %1109 = memref.load %arg2[%c366] : memref<441xf32, #tpu.memory_space<smem>>
    %1110 = vector.broadcast %1109 : f32 to vector<16x128xf32>
    %1111 = arith.mulf %1110, %630 : vector<16x128xf32>
    %1112 = arith.addf %1108, %1111 : vector<16x128xf32>
    %c373 = arith.constant 373 : index
    %1113 = memref.load %arg2[%c373] : memref<441xf32, #tpu.memory_space<smem>>
    %1114 = vector.broadcast %1113 : f32 to vector<16x128xf32>
    %1115 = arith.mulf %1114, %632 : vector<16x128xf32>
    %1116 = arith.addf %1112, %1115 : vector<16x128xf32>
    %c380 = arith.constant 380 : index
    %1117 = memref.load %arg2[%c380] : memref<441xf32, #tpu.memory_space<smem>>
    %1118 = vector.broadcast %1117 : f32 to vector<16x128xf32>
    %1119 = arith.mulf %1118, %634 : vector<16x128xf32>
    %1120 = arith.addf %1116, %1119 : vector<16x128xf32>
    %c387 = arith.constant 387 : index
    %1121 = memref.load %arg2[%c387] : memref<441xf32, #tpu.memory_space<smem>>
    %1122 = vector.broadcast %1121 : f32 to vector<16x128xf32>
    %1123 = arith.mulf %1122, %636 : vector<16x128xf32>
    %1124 = arith.addf %1120, %1123 : vector<16x128xf32>
    %c126_i32_37 = arith.constant 126 : i32
    %1125 = tpu.dynamic_rotate %1124 by %c126_i32_37 dim 1 : vector<16x128xf32>, i32 -> vector<16x128xf32>
    %1126 = arith.addf %1097, %1125 : vector<16x128xf32>
    %c346 = arith.constant 346 : index
    %1127 = memref.load %arg2[%c346] : memref<441xf32, #tpu.memory_space<smem>>
    %1128 = vector.broadcast %1127 : f32 to vector<16x128xf32>
    %1129 = arith.mulf %1128, %624 : vector<16x128xf32>
    %c353 = arith.constant 353 : index
    %1130 = memref.load %arg2[%c353] : memref<441xf32, #tpu.memory_space<smem>>
    %1131 = vector.broadcast %1130 : f32 to vector<16x128xf32>
    %1132 = arith.mulf %1131, %626 : vector<16x128xf32>
    %1133 = arith.addf %1129, %1132 : vector<16x128xf32>
    %c360 = arith.constant 360 : index
    %1134 = memref.load %arg2[%c360] : memref<441xf32, #tpu.memory_space<smem>>
    %1135 = vector.broadcast %1134 : f32 to vector<16x128xf32>
    %1136 = arith.mulf %1135, %628 : vector<16x128xf32>
    %1137 = arith.addf %1133, %1136 : vector<16x128xf32>
    %c367 = arith.constant 367 : index
    %1138 = memref.load %arg2[%c367] : memref<441xf32, #tpu.memory_space<smem>>
    %1139 = vector.broadcast %1138 : f32 to vector<16x128xf32>
    %1140 = arith.mulf %1139, %630 : vector<16x128xf32>
    %1141 = arith.addf %1137, %1140 : vector<16x128xf32>
    %c374 = arith.constant 374 : index
    %1142 = memref.load %arg2[%c374] : memref<441xf32, #tpu.memory_space<smem>>
    %1143 = vector.broadcast %1142 : f32 to vector<16x128xf32>
    %1144 = arith.mulf %1143, %632 : vector<16x128xf32>
    %1145 = arith.addf %1141, %1144 : vector<16x128xf32>
    %c381 = arith.constant 381 : index
    %1146 = memref.load %arg2[%c381] : memref<441xf32, #tpu.memory_space<smem>>
    %1147 = vector.broadcast %1146 : f32 to vector<16x128xf32>
    %1148 = arith.mulf %1147, %634 : vector<16x128xf32>
    %1149 = arith.addf %1145, %1148 : vector<16x128xf32>
    %c388 = arith.constant 388 : index
    %1150 = memref.load %arg2[%c388] : memref<441xf32, #tpu.memory_space<smem>>
    %1151 = vector.broadcast %1150 : f32 to vector<16x128xf32>
    %1152 = arith.mulf %1151, %636 : vector<16x128xf32>
    %1153 = arith.addf %1149, %1152 : vector<16x128xf32>
    %c125_i32_38 = arith.constant 125 : i32
    %1154 = tpu.dynamic_rotate %1153 by %c125_i32_38 dim 1 : vector<16x128xf32>, i32 -> vector<16x128xf32>
    %1155 = arith.addf %1126, %1154 : vector<16x128xf32>
    %c347 = arith.constant 347 : index
    %1156 = memref.load %arg2[%c347] : memref<441xf32, #tpu.memory_space<smem>>
    %1157 = vector.broadcast %1156 : f32 to vector<16x128xf32>
    %1158 = arith.mulf %1157, %624 : vector<16x128xf32>
    %c354 = arith.constant 354 : index
    %1159 = memref.load %arg2[%c354] : memref<441xf32, #tpu.memory_space<smem>>
    %1160 = vector.broadcast %1159 : f32 to vector<16x128xf32>
    %1161 = arith.mulf %1160, %626 : vector<16x128xf32>
    %1162 = arith.addf %1158, %1161 : vector<16x128xf32>
    %c361 = arith.constant 361 : index
    %1163 = memref.load %arg2[%c361] : memref<441xf32, #tpu.memory_space<smem>>
    %1164 = vector.broadcast %1163 : f32 to vector<16x128xf32>
    %1165 = arith.mulf %1164, %628 : vector<16x128xf32>
    %1166 = arith.addf %1162, %1165 : vector<16x128xf32>
    %c368 = arith.constant 368 : index
    %1167 = memref.load %arg2[%c368] : memref<441xf32, #tpu.memory_space<smem>>
    %1168 = vector.broadcast %1167 : f32 to vector<16x128xf32>
    %1169 = arith.mulf %1168, %630 : vector<16x128xf32>
    %1170 = arith.addf %1166, %1169 : vector<16x128xf32>
    %c375 = arith.constant 375 : index
    %1171 = memref.load %arg2[%c375] : memref<441xf32, #tpu.memory_space<smem>>
    %1172 = vector.broadcast %1171 : f32 to vector<16x128xf32>
    %1173 = arith.mulf %1172, %632 : vector<16x128xf32>
    %1174 = arith.addf %1170, %1173 : vector<16x128xf32>
    %c382 = arith.constant 382 : index
    %1175 = memref.load %arg2[%c382] : memref<441xf32, #tpu.memory_space<smem>>
    %1176 = vector.broadcast %1175 : f32 to vector<16x128xf32>
    %1177 = arith.mulf %1176, %634 : vector<16x128xf32>
    %1178 = arith.addf %1174, %1177 : vector<16x128xf32>
    %c389 = arith.constant 389 : index
    %1179 = memref.load %arg2[%c389] : memref<441xf32, #tpu.memory_space<smem>>
    %1180 = vector.broadcast %1179 : f32 to vector<16x128xf32>
    %1181 = arith.mulf %1180, %636 : vector<16x128xf32>
    %1182 = arith.addf %1178, %1181 : vector<16x128xf32>
    %c124_i32_39 = arith.constant 124 : i32
    %1183 = tpu.dynamic_rotate %1182 by %c124_i32_39 dim 1 : vector<16x128xf32>, i32 -> vector<16x128xf32>
    %1184 = arith.addf %1155, %1183 : vector<16x128xf32>
    %c348 = arith.constant 348 : index
    %1185 = memref.load %arg2[%c348] : memref<441xf32, #tpu.memory_space<smem>>
    %1186 = vector.broadcast %1185 : f32 to vector<16x128xf32>
    %1187 = arith.mulf %1186, %624 : vector<16x128xf32>
    %c355 = arith.constant 355 : index
    %1188 = memref.load %arg2[%c355] : memref<441xf32, #tpu.memory_space<smem>>
    %1189 = vector.broadcast %1188 : f32 to vector<16x128xf32>
    %1190 = arith.mulf %1189, %626 : vector<16x128xf32>
    %1191 = arith.addf %1187, %1190 : vector<16x128xf32>
    %c362 = arith.constant 362 : index
    %1192 = memref.load %arg2[%c362] : memref<441xf32, #tpu.memory_space<smem>>
    %1193 = vector.broadcast %1192 : f32 to vector<16x128xf32>
    %1194 = arith.mulf %1193, %628 : vector<16x128xf32>
    %1195 = arith.addf %1191, %1194 : vector<16x128xf32>
    %c369 = arith.constant 369 : index
    %1196 = memref.load %arg2[%c369] : memref<441xf32, #tpu.memory_space<smem>>
    %1197 = vector.broadcast %1196 : f32 to vector<16x128xf32>
    %1198 = arith.mulf %1197, %630 : vector<16x128xf32>
    %1199 = arith.addf %1195, %1198 : vector<16x128xf32>
    %c376 = arith.constant 376 : index
    %1200 = memref.load %arg2[%c376] : memref<441xf32, #tpu.memory_space<smem>>
    %1201 = vector.broadcast %1200 : f32 to vector<16x128xf32>
    %1202 = arith.mulf %1201, %632 : vector<16x128xf32>
    %1203 = arith.addf %1199, %1202 : vector<16x128xf32>
    %c383 = arith.constant 383 : index
    %1204 = memref.load %arg2[%c383] : memref<441xf32, #tpu.memory_space<smem>>
    %1205 = vector.broadcast %1204 : f32 to vector<16x128xf32>
    %1206 = arith.mulf %1205, %634 : vector<16x128xf32>
    %1207 = arith.addf %1203, %1206 : vector<16x128xf32>
    %c390 = arith.constant 390 : index
    %1208 = memref.load %arg2[%c390] : memref<441xf32, #tpu.memory_space<smem>>
    %1209 = vector.broadcast %1208 : f32 to vector<16x128xf32>
    %1210 = arith.mulf %1209, %636 : vector<16x128xf32>
    %1211 = arith.addf %1207, %1210 : vector<16x128xf32>
    %c123_i32_40 = arith.constant 123 : i32
    %1212 = tpu.dynamic_rotate %1211 by %c123_i32_40 dim 1 : vector<16x128xf32>, i32 -> vector<16x128xf32>
    %1213 = arith.addf %1184, %1212 : vector<16x128xf32>
    %c349 = arith.constant 349 : index
    %1214 = memref.load %arg2[%c349] : memref<441xf32, #tpu.memory_space<smem>>
    %1215 = vector.broadcast %1214 : f32 to vector<16x128xf32>
    %1216 = arith.mulf %1215, %624 : vector<16x128xf32>
    %c356 = arith.constant 356 : index
    %1217 = memref.load %arg2[%c356] : memref<441xf32, #tpu.memory_space<smem>>
    %1218 = vector.broadcast %1217 : f32 to vector<16x128xf32>
    %1219 = arith.mulf %1218, %626 : vector<16x128xf32>
    %1220 = arith.addf %1216, %1219 : vector<16x128xf32>
    %c363 = arith.constant 363 : index
    %1221 = memref.load %arg2[%c363] : memref<441xf32, #tpu.memory_space<smem>>
    %1222 = vector.broadcast %1221 : f32 to vector<16x128xf32>
    %1223 = arith.mulf %1222, %628 : vector<16x128xf32>
    %1224 = arith.addf %1220, %1223 : vector<16x128xf32>
    %c370 = arith.constant 370 : index
    %1225 = memref.load %arg2[%c370] : memref<441xf32, #tpu.memory_space<smem>>
    %1226 = vector.broadcast %1225 : f32 to vector<16x128xf32>
    %1227 = arith.mulf %1226, %630 : vector<16x128xf32>
    %1228 = arith.addf %1224, %1227 : vector<16x128xf32>
    %c377 = arith.constant 377 : index
    %1229 = memref.load %arg2[%c377] : memref<441xf32, #tpu.memory_space<smem>>
    %1230 = vector.broadcast %1229 : f32 to vector<16x128xf32>
    %1231 = arith.mulf %1230, %632 : vector<16x128xf32>
    %1232 = arith.addf %1228, %1231 : vector<16x128xf32>
    %c384 = arith.constant 384 : index
    %1233 = memref.load %arg2[%c384] : memref<441xf32, #tpu.memory_space<smem>>
    %1234 = vector.broadcast %1233 : f32 to vector<16x128xf32>
    %1235 = arith.mulf %1234, %634 : vector<16x128xf32>
    %1236 = arith.addf %1232, %1235 : vector<16x128xf32>
    %c391 = arith.constant 391 : index
    %1237 = memref.load %arg2[%c391] : memref<441xf32, #tpu.memory_space<smem>>
    %1238 = vector.broadcast %1237 : f32 to vector<16x128xf32>
    %1239 = arith.mulf %1238, %636 : vector<16x128xf32>
    %1240 = arith.addf %1236, %1239 : vector<16x128xf32>
    %c122_i32_41 = arith.constant 122 : i32
    %1241 = tpu.dynamic_rotate %1240 by %c122_i32_41 dim 1 : vector<16x128xf32>, i32 -> vector<16x128xf32>
    %1242 = arith.addf %1213, %1241 : vector<16x128xf32>
    %c0_42 = arith.constant 0 : index
    %c2_43 = arith.constant 2 : index
    %1243 = arith.index_cast %1 : i32 to index
    %c0_44 = arith.constant 0 : index
    %1244 = vector.load %arg4[%c0_42, %c2_43, %1243, %c0_44] : memref<1x3x40x128xf32, #tpu.memory_space<vmem>>, vector<1x1x24x128xf32>
    %1245 = vector.shape_cast %1244 : vector<1x1x24x128xf32> to vector<24x128xf32>
    %1246 = vector.extract_strided_slice %1245 {offsets = [0, 0], sizes = [16, 128], strides = [1, 1]} : vector<24x128xf32> to vector<16x128xf32>
    %c23_i32_45 = arith.constant 23 : i32
    %1247 = tpu.dynamic_rotate %1245 by %c23_i32_45 dim 0 : vector<24x128xf32>, i32 -> vector<24x128xf32>
    %1248 = vector.extract_strided_slice %1247 {offsets = [0, 0], sizes = [16, 128], strides = [1, 1]} : vector<24x128xf32> to vector<16x128xf32>
    %c22_i32_46 = arith.constant 22 : i32
    %1249 = tpu.dynamic_rotate %1245 by %c22_i32_46 dim 0 : vector<24x128xf32>, i32 -> vector<24x128xf32>
    %1250 = vector.extract_strided_slice %1249 {offsets = [0, 0], sizes = [16, 128], strides = [1, 1]} : vector<24x128xf32> to vector<16x128xf32>
    %c21_i32_47 = arith.constant 21 : i32
    %1251 = tpu.dynamic_rotate %1245 by %c21_i32_47 dim 0 : vector<24x128xf32>, i32 -> vector<24x128xf32>
    %1252 = vector.extract_strided_slice %1251 {offsets = [0, 0], sizes = [16, 128], strides = [1, 1]} : vector<24x128xf32> to vector<16x128xf32>
    %c20_i32_48 = arith.constant 20 : i32
    %1253 = tpu.dynamic_rotate %1245 by %c20_i32_48 dim 0 : vector<24x128xf32>, i32 -> vector<24x128xf32>
    %1254 = vector.extract_strided_slice %1253 {offsets = [0, 0], sizes = [16, 128], strides = [1, 1]} : vector<24x128xf32> to vector<16x128xf32>
    %c19_i32_49 = arith.constant 19 : i32
    %1255 = tpu.dynamic_rotate %1245 by %c19_i32_49 dim 0 : vector<24x128xf32>, i32 -> vector<24x128xf32>
    %1256 = vector.extract_strided_slice %1255 {offsets = [0, 0], sizes = [16, 128], strides = [1, 1]} : vector<24x128xf32> to vector<16x128xf32>
    %c18_i32_50 = arith.constant 18 : i32
    %1257 = tpu.dynamic_rotate %1245 by %c18_i32_50 dim 0 : vector<24x128xf32>, i32 -> vector<24x128xf32>
    %1258 = vector.extract_strided_slice %1257 {offsets = [0, 0], sizes = [16, 128], strides = [1, 1]} : vector<24x128xf32> to vector<16x128xf32>
    %c98 = arith.constant 98 : index
    %1259 = memref.load %arg2[%c98] : memref<441xf32, #tpu.memory_space<smem>>
    %1260 = vector.broadcast %1259 : f32 to vector<16x128xf32>
    %1261 = arith.mulf %1260, %1246 : vector<16x128xf32>
    %c105 = arith.constant 105 : index
    %1262 = memref.load %arg2[%c105] : memref<441xf32, #tpu.memory_space<smem>>
    %1263 = vector.broadcast %1262 : f32 to vector<16x128xf32>
    %1264 = arith.mulf %1263, %1248 : vector<16x128xf32>
    %1265 = arith.addf %1261, %1264 : vector<16x128xf32>
    %c112 = arith.constant 112 : index
    %1266 = memref.load %arg2[%c112] : memref<441xf32, #tpu.memory_space<smem>>
    %1267 = vector.broadcast %1266 : f32 to vector<16x128xf32>
    %1268 = arith.mulf %1267, %1250 : vector<16x128xf32>
    %1269 = arith.addf %1265, %1268 : vector<16x128xf32>
    %c119 = arith.constant 119 : index
    %1270 = memref.load %arg2[%c119] : memref<441xf32, #tpu.memory_space<smem>>
    %1271 = vector.broadcast %1270 : f32 to vector<16x128xf32>
    %1272 = arith.mulf %1271, %1252 : vector<16x128xf32>
    %1273 = arith.addf %1269, %1272 : vector<16x128xf32>
    %c126 = arith.constant 126 : index
    %1274 = memref.load %arg2[%c126] : memref<441xf32, #tpu.memory_space<smem>>
    %1275 = vector.broadcast %1274 : f32 to vector<16x128xf32>
    %1276 = arith.mulf %1275, %1254 : vector<16x128xf32>
    %1277 = arith.addf %1273, %1276 : vector<16x128xf32>
    %c133 = arith.constant 133 : index
    %1278 = memref.load %arg2[%c133] : memref<441xf32, #tpu.memory_space<smem>>
    %1279 = vector.broadcast %1278 : f32 to vector<16x128xf32>
    %1280 = arith.mulf %1279, %1256 : vector<16x128xf32>
    %1281 = arith.addf %1277, %1280 : vector<16x128xf32>
    %c140 = arith.constant 140 : index
    %1282 = memref.load %arg2[%c140] : memref<441xf32, #tpu.memory_space<smem>>
    %1283 = vector.broadcast %1282 : f32 to vector<16x128xf32>
    %1284 = arith.mulf %1283, %1258 : vector<16x128xf32>
    %1285 = arith.addf %1281, %1284 : vector<16x128xf32>
    %1286 = arith.addf %838, %1285 : vector<16x128xf32>
    %c99 = arith.constant 99 : index
    %1287 = memref.load %arg2[%c99] : memref<441xf32, #tpu.memory_space<smem>>
    %1288 = vector.broadcast %1287 : f32 to vector<16x128xf32>
    %1289 = arith.mulf %1288, %1246 : vector<16x128xf32>
    %c106 = arith.constant 106 : index
    %1290 = memref.load %arg2[%c106] : memref<441xf32, #tpu.memory_space<smem>>
    %1291 = vector.broadcast %1290 : f32 to vector<16x128xf32>
    %1292 = arith.mulf %1291, %1248 : vector<16x128xf32>
    %1293 = arith.addf %1289, %1292 : vector<16x128xf32>
    %c113 = arith.constant 113 : index
    %1294 = memref.load %arg2[%c113] : memref<441xf32, #tpu.memory_space<smem>>
    %1295 = vector.broadcast %1294 : f32 to vector<16x128xf32>
    %1296 = arith.mulf %1295, %1250 : vector<16x128xf32>
    %1297 = arith.addf %1293, %1296 : vector<16x128xf32>
    %c120 = arith.constant 120 : index
    %1298 = memref.load %arg2[%c120] : memref<441xf32, #tpu.memory_space<smem>>
    %1299 = vector.broadcast %1298 : f32 to vector<16x128xf32>
    %1300 = arith.mulf %1299, %1252 : vector<16x128xf32>
    %1301 = arith.addf %1297, %1300 : vector<16x128xf32>
    %c127 = arith.constant 127 : index
    %1302 = memref.load %arg2[%c127] : memref<441xf32, #tpu.memory_space<smem>>
    %1303 = vector.broadcast %1302 : f32 to vector<16x128xf32>
    %1304 = arith.mulf %1303, %1254 : vector<16x128xf32>
    %1305 = arith.addf %1301, %1304 : vector<16x128xf32>
    %c134 = arith.constant 134 : index
    %1306 = memref.load %arg2[%c134] : memref<441xf32, #tpu.memory_space<smem>>
    %1307 = vector.broadcast %1306 : f32 to vector<16x128xf32>
    %1308 = arith.mulf %1307, %1256 : vector<16x128xf32>
    %1309 = arith.addf %1305, %1308 : vector<16x128xf32>
    %c141 = arith.constant 141 : index
    %1310 = memref.load %arg2[%c141] : memref<441xf32, #tpu.memory_space<smem>>
    %1311 = vector.broadcast %1310 : f32 to vector<16x128xf32>
    %1312 = arith.mulf %1311, %1258 : vector<16x128xf32>
    %1313 = arith.addf %1309, %1312 : vector<16x128xf32>
    %c127_i32_51 = arith.constant 127 : i32
    %1314 = tpu.dynamic_rotate %1313 by %c127_i32_51 dim 1 : vector<16x128xf32>, i32 -> vector<16x128xf32>
    %1315 = arith.addf %1286, %1314 : vector<16x128xf32>
    %c100 = arith.constant 100 : index
    %1316 = memref.load %arg2[%c100] : memref<441xf32, #tpu.memory_space<smem>>
    %1317 = vector.broadcast %1316 : f32 to vector<16x128xf32>
    %1318 = arith.mulf %1317, %1246 : vector<16x128xf32>
    %c107 = arith.constant 107 : index
    %1319 = memref.load %arg2[%c107] : memref<441xf32, #tpu.memory_space<smem>>
    %1320 = vector.broadcast %1319 : f32 to vector<16x128xf32>
    %1321 = arith.mulf %1320, %1248 : vector<16x128xf32>
    %1322 = arith.addf %1318, %1321 : vector<16x128xf32>
    %c114 = arith.constant 114 : index
    %1323 = memref.load %arg2[%c114] : memref<441xf32, #tpu.memory_space<smem>>
    %1324 = vector.broadcast %1323 : f32 to vector<16x128xf32>
    %1325 = arith.mulf %1324, %1250 : vector<16x128xf32>
    %1326 = arith.addf %1322, %1325 : vector<16x128xf32>
    %c121 = arith.constant 121 : index
    %1327 = memref.load %arg2[%c121] : memref<441xf32, #tpu.memory_space<smem>>
    %1328 = vector.broadcast %1327 : f32 to vector<16x128xf32>
    %1329 = arith.mulf %1328, %1252 : vector<16x128xf32>
    %1330 = arith.addf %1326, %1329 : vector<16x128xf32>
    %c128 = arith.constant 128 : index
    %1331 = memref.load %arg2[%c128] : memref<441xf32, #tpu.memory_space<smem>>
    %1332 = vector.broadcast %1331 : f32 to vector<16x128xf32>
    %1333 = arith.mulf %1332, %1254 : vector<16x128xf32>
    %1334 = arith.addf %1330, %1333 : vector<16x128xf32>
    %c135 = arith.constant 135 : index
    %1335 = memref.load %arg2[%c135] : memref<441xf32, #tpu.memory_space<smem>>
    %1336 = vector.broadcast %1335 : f32 to vector<16x128xf32>
    %1337 = arith.mulf %1336, %1256 : vector<16x128xf32>
    %1338 = arith.addf %1334, %1337 : vector<16x128xf32>
    %c142 = arith.constant 142 : index
    %1339 = memref.load %arg2[%c142] : memref<441xf32, #tpu.memory_space<smem>>
    %1340 = vector.broadcast %1339 : f32 to vector<16x128xf32>
    %1341 = arith.mulf %1340, %1258 : vector<16x128xf32>
    %1342 = arith.addf %1338, %1341 : vector<16x128xf32>
    %c126_i32_52 = arith.constant 126 : i32
    %1343 = tpu.dynamic_rotate %1342 by %c126_i32_52 dim 1 : vector<16x128xf32>, i32 -> vector<16x128xf32>
    %1344 = arith.addf %1315, %1343 : vector<16x128xf32>
    %c101 = arith.constant 101 : index
    %1345 = memref.load %arg2[%c101] : memref<441xf32, #tpu.memory_space<smem>>
    %1346 = vector.broadcast %1345 : f32 to vector<16x128xf32>
    %1347 = arith.mulf %1346, %1246 : vector<16x128xf32>
    %c108 = arith.constant 108 : index
    %1348 = memref.load %arg2[%c108] : memref<441xf32, #tpu.memory_space<smem>>
    %1349 = vector.broadcast %1348 : f32 to vector<16x128xf32>
    %1350 = arith.mulf %1349, %1248 : vector<16x128xf32>
    %1351 = arith.addf %1347, %1350 : vector<16x128xf32>
    %c115 = arith.constant 115 : index
    %1352 = memref.load %arg2[%c115] : memref<441xf32, #tpu.memory_space<smem>>
    %1353 = vector.broadcast %1352 : f32 to vector<16x128xf32>
    %1354 = arith.mulf %1353, %1250 : vector<16x128xf32>
    %1355 = arith.addf %1351, %1354 : vector<16x128xf32>
    %c122 = arith.constant 122 : index
    %1356 = memref.load %arg2[%c122] : memref<441xf32, #tpu.memory_space<smem>>
    %1357 = vector.broadcast %1356 : f32 to vector<16x128xf32>
    %1358 = arith.mulf %1357, %1252 : vector<16x128xf32>
    %1359 = arith.addf %1355, %1358 : vector<16x128xf32>
    %c129 = arith.constant 129 : index
    %1360 = memref.load %arg2[%c129] : memref<441xf32, #tpu.memory_space<smem>>
    %1361 = vector.broadcast %1360 : f32 to vector<16x128xf32>
    %1362 = arith.mulf %1361, %1254 : vector<16x128xf32>
    %1363 = arith.addf %1359, %1362 : vector<16x128xf32>
    %c136 = arith.constant 136 : index
    %1364 = memref.load %arg2[%c136] : memref<441xf32, #tpu.memory_space<smem>>
    %1365 = vector.broadcast %1364 : f32 to vector<16x128xf32>
    %1366 = arith.mulf %1365, %1256 : vector<16x128xf32>
    %1367 = arith.addf %1363, %1366 : vector<16x128xf32>
    %c143 = arith.constant 143 : index
    %1368 = memref.load %arg2[%c143] : memref<441xf32, #tpu.memory_space<smem>>
    %1369 = vector.broadcast %1368 : f32 to vector<16x128xf32>
    %1370 = arith.mulf %1369, %1258 : vector<16x128xf32>
    %1371 = arith.addf %1367, %1370 : vector<16x128xf32>
    %c125_i32_53 = arith.constant 125 : i32
    %1372 = tpu.dynamic_rotate %1371 by %c125_i32_53 dim 1 : vector<16x128xf32>, i32 -> vector<16x128xf32>
    %1373 = arith.addf %1344, %1372 : vector<16x128xf32>
    %c102 = arith.constant 102 : index
    %1374 = memref.load %arg2[%c102] : memref<441xf32, #tpu.memory_space<smem>>
    %1375 = vector.broadcast %1374 : f32 to vector<16x128xf32>
    %1376 = arith.mulf %1375, %1246 : vector<16x128xf32>
    %c109 = arith.constant 109 : index
    %1377 = memref.load %arg2[%c109] : memref<441xf32, #tpu.memory_space<smem>>
    %1378 = vector.broadcast %1377 : f32 to vector<16x128xf32>
    %1379 = arith.mulf %1378, %1248 : vector<16x128xf32>
    %1380 = arith.addf %1376, %1379 : vector<16x128xf32>
    %c116 = arith.constant 116 : index
    %1381 = memref.load %arg2[%c116] : memref<441xf32, #tpu.memory_space<smem>>
    %1382 = vector.broadcast %1381 : f32 to vector<16x128xf32>
    %1383 = arith.mulf %1382, %1250 : vector<16x128xf32>
    %1384 = arith.addf %1380, %1383 : vector<16x128xf32>
    %c123 = arith.constant 123 : index
    %1385 = memref.load %arg2[%c123] : memref<441xf32, #tpu.memory_space<smem>>
    %1386 = vector.broadcast %1385 : f32 to vector<16x128xf32>
    %1387 = arith.mulf %1386, %1252 : vector<16x128xf32>
    %1388 = arith.addf %1384, %1387 : vector<16x128xf32>
    %c130 = arith.constant 130 : index
    %1389 = memref.load %arg2[%c130] : memref<441xf32, #tpu.memory_space<smem>>
    %1390 = vector.broadcast %1389 : f32 to vector<16x128xf32>
    %1391 = arith.mulf %1390, %1254 : vector<16x128xf32>
    %1392 = arith.addf %1388, %1391 : vector<16x128xf32>
    %c137 = arith.constant 137 : index
    %1393 = memref.load %arg2[%c137] : memref<441xf32, #tpu.memory_space<smem>>
    %1394 = vector.broadcast %1393 : f32 to vector<16x128xf32>
    %1395 = arith.mulf %1394, %1256 : vector<16x128xf32>
    %1396 = arith.addf %1392, %1395 : vector<16x128xf32>
    %c144 = arith.constant 144 : index
    %1397 = memref.load %arg2[%c144] : memref<441xf32, #tpu.memory_space<smem>>
    %1398 = vector.broadcast %1397 : f32 to vector<16x128xf32>
    %1399 = arith.mulf %1398, %1258 : vector<16x128xf32>
    %1400 = arith.addf %1396, %1399 : vector<16x128xf32>
    %c124_i32_54 = arith.constant 124 : i32
    %1401 = tpu.dynamic_rotate %1400 by %c124_i32_54 dim 1 : vector<16x128xf32>, i32 -> vector<16x128xf32>
    %1402 = arith.addf %1373, %1401 : vector<16x128xf32>
    %c103 = arith.constant 103 : index
    %1403 = memref.load %arg2[%c103] : memref<441xf32, #tpu.memory_space<smem>>
    %1404 = vector.broadcast %1403 : f32 to vector<16x128xf32>
    %1405 = arith.mulf %1404, %1246 : vector<16x128xf32>
    %c110 = arith.constant 110 : index
    %1406 = memref.load %arg2[%c110] : memref<441xf32, #tpu.memory_space<smem>>
    %1407 = vector.broadcast %1406 : f32 to vector<16x128xf32>
    %1408 = arith.mulf %1407, %1248 : vector<16x128xf32>
    %1409 = arith.addf %1405, %1408 : vector<16x128xf32>
    %c117 = arith.constant 117 : index
    %1410 = memref.load %arg2[%c117] : memref<441xf32, #tpu.memory_space<smem>>
    %1411 = vector.broadcast %1410 : f32 to vector<16x128xf32>
    %1412 = arith.mulf %1411, %1250 : vector<16x128xf32>
    %1413 = arith.addf %1409, %1412 : vector<16x128xf32>
    %c124 = arith.constant 124 : index
    %1414 = memref.load %arg2[%c124] : memref<441xf32, #tpu.memory_space<smem>>
    %1415 = vector.broadcast %1414 : f32 to vector<16x128xf32>
    %1416 = arith.mulf %1415, %1252 : vector<16x128xf32>
    %1417 = arith.addf %1413, %1416 : vector<16x128xf32>
    %c131 = arith.constant 131 : index
    %1418 = memref.load %arg2[%c131] : memref<441xf32, #tpu.memory_space<smem>>
    %1419 = vector.broadcast %1418 : f32 to vector<16x128xf32>
    %1420 = arith.mulf %1419, %1254 : vector<16x128xf32>
    %1421 = arith.addf %1417, %1420 : vector<16x128xf32>
    %c138 = arith.constant 138 : index
    %1422 = memref.load %arg2[%c138] : memref<441xf32, #tpu.memory_space<smem>>
    %1423 = vector.broadcast %1422 : f32 to vector<16x128xf32>
    %1424 = arith.mulf %1423, %1256 : vector<16x128xf32>
    %1425 = arith.addf %1421, %1424 : vector<16x128xf32>
    %c145 = arith.constant 145 : index
    %1426 = memref.load %arg2[%c145] : memref<441xf32, #tpu.memory_space<smem>>
    %1427 = vector.broadcast %1426 : f32 to vector<16x128xf32>
    %1428 = arith.mulf %1427, %1258 : vector<16x128xf32>
    %1429 = arith.addf %1425, %1428 : vector<16x128xf32>
    %c123_i32_55 = arith.constant 123 : i32
    %1430 = tpu.dynamic_rotate %1429 by %c123_i32_55 dim 1 : vector<16x128xf32>, i32 -> vector<16x128xf32>
    %1431 = arith.addf %1402, %1430 : vector<16x128xf32>
    %c104 = arith.constant 104 : index
    %1432 = memref.load %arg2[%c104] : memref<441xf32, #tpu.memory_space<smem>>
    %1433 = vector.broadcast %1432 : f32 to vector<16x128xf32>
    %1434 = arith.mulf %1433, %1246 : vector<16x128xf32>
    %c111 = arith.constant 111 : index
    %1435 = memref.load %arg2[%c111] : memref<441xf32, #tpu.memory_space<smem>>
    %1436 = vector.broadcast %1435 : f32 to vector<16x128xf32>
    %1437 = arith.mulf %1436, %1248 : vector<16x128xf32>
    %1438 = arith.addf %1434, %1437 : vector<16x128xf32>
    %c118 = arith.constant 118 : index
    %1439 = memref.load %arg2[%c118] : memref<441xf32, #tpu.memory_space<smem>>
    %1440 = vector.broadcast %1439 : f32 to vector<16x128xf32>
    %1441 = arith.mulf %1440, %1250 : vector<16x128xf32>
    %1442 = arith.addf %1438, %1441 : vector<16x128xf32>
    %c125 = arith.constant 125 : index
    %1443 = memref.load %arg2[%c125] : memref<441xf32, #tpu.memory_space<smem>>
    %1444 = vector.broadcast %1443 : f32 to vector<16x128xf32>
    %1445 = arith.mulf %1444, %1252 : vector<16x128xf32>
    %1446 = arith.addf %1442, %1445 : vector<16x128xf32>
    %c132 = arith.constant 132 : index
    %1447 = memref.load %arg2[%c132] : memref<441xf32, #tpu.memory_space<smem>>
    %1448 = vector.broadcast %1447 : f32 to vector<16x128xf32>
    %1449 = arith.mulf %1448, %1254 : vector<16x128xf32>
    %1450 = arith.addf %1446, %1449 : vector<16x128xf32>
    %c139 = arith.constant 139 : index
    %1451 = memref.load %arg2[%c139] : memref<441xf32, #tpu.memory_space<smem>>
    %1452 = vector.broadcast %1451 : f32 to vector<16x128xf32>
    %1453 = arith.mulf %1452, %1256 : vector<16x128xf32>
    %1454 = arith.addf %1450, %1453 : vector<16x128xf32>
    %c146 = arith.constant 146 : index
    %1455 = memref.load %arg2[%c146] : memref<441xf32, #tpu.memory_space<smem>>
    %1456 = vector.broadcast %1455 : f32 to vector<16x128xf32>
    %1457 = arith.mulf %1456, %1258 : vector<16x128xf32>
    %1458 = arith.addf %1454, %1457 : vector<16x128xf32>
    %c122_i32_56 = arith.constant 122 : i32
    %1459 = tpu.dynamic_rotate %1458 by %c122_i32_56 dim 1 : vector<16x128xf32>, i32 -> vector<16x128xf32>
    %1460 = arith.addf %1431, %1459 : vector<16x128xf32>
    %c245 = arith.constant 245 : index
    %1461 = memref.load %arg2[%c245] : memref<441xf32, #tpu.memory_space<smem>>
    %1462 = vector.broadcast %1461 : f32 to vector<16x128xf32>
    %1463 = arith.mulf %1462, %1246 : vector<16x128xf32>
    %c252 = arith.constant 252 : index
    %1464 = memref.load %arg2[%c252] : memref<441xf32, #tpu.memory_space<smem>>
    %1465 = vector.broadcast %1464 : f32 to vector<16x128xf32>
    %1466 = arith.mulf %1465, %1248 : vector<16x128xf32>
    %1467 = arith.addf %1463, %1466 : vector<16x128xf32>
    %c259 = arith.constant 259 : index
    %1468 = memref.load %arg2[%c259] : memref<441xf32, #tpu.memory_space<smem>>
    %1469 = vector.broadcast %1468 : f32 to vector<16x128xf32>
    %1470 = arith.mulf %1469, %1250 : vector<16x128xf32>
    %1471 = arith.addf %1467, %1470 : vector<16x128xf32>
    %c266 = arith.constant 266 : index
    %1472 = memref.load %arg2[%c266] : memref<441xf32, #tpu.memory_space<smem>>
    %1473 = vector.broadcast %1472 : f32 to vector<16x128xf32>
    %1474 = arith.mulf %1473, %1252 : vector<16x128xf32>
    %1475 = arith.addf %1471, %1474 : vector<16x128xf32>
    %c273 = arith.constant 273 : index
    %1476 = memref.load %arg2[%c273] : memref<441xf32, #tpu.memory_space<smem>>
    %1477 = vector.broadcast %1476 : f32 to vector<16x128xf32>
    %1478 = arith.mulf %1477, %1254 : vector<16x128xf32>
    %1479 = arith.addf %1475, %1478 : vector<16x128xf32>
    %c280 = arith.constant 280 : index
    %1480 = memref.load %arg2[%c280] : memref<441xf32, #tpu.memory_space<smem>>
    %1481 = vector.broadcast %1480 : f32 to vector<16x128xf32>
    %1482 = arith.mulf %1481, %1256 : vector<16x128xf32>
    %1483 = arith.addf %1479, %1482 : vector<16x128xf32>
    %c287 = arith.constant 287 : index
    %1484 = memref.load %arg2[%c287] : memref<441xf32, #tpu.memory_space<smem>>
    %1485 = vector.broadcast %1484 : f32 to vector<16x128xf32>
    %1486 = arith.mulf %1485, %1258 : vector<16x128xf32>
    %1487 = arith.addf %1483, %1486 : vector<16x128xf32>
    %1488 = arith.addf %1040, %1487 : vector<16x128xf32>
    %c246 = arith.constant 246 : index
    %1489 = memref.load %arg2[%c246] : memref<441xf32, #tpu.memory_space<smem>>
    %1490 = vector.broadcast %1489 : f32 to vector<16x128xf32>
    %1491 = arith.mulf %1490, %1246 : vector<16x128xf32>
    %c253 = arith.constant 253 : index
    %1492 = memref.load %arg2[%c253] : memref<441xf32, #tpu.memory_space<smem>>
    %1493 = vector.broadcast %1492 : f32 to vector<16x128xf32>
    %1494 = arith.mulf %1493, %1248 : vector<16x128xf32>
    %1495 = arith.addf %1491, %1494 : vector<16x128xf32>
    %c260 = arith.constant 260 : index
    %1496 = memref.load %arg2[%c260] : memref<441xf32, #tpu.memory_space<smem>>
    %1497 = vector.broadcast %1496 : f32 to vector<16x128xf32>
    %1498 = arith.mulf %1497, %1250 : vector<16x128xf32>
    %1499 = arith.addf %1495, %1498 : vector<16x128xf32>
    %c267 = arith.constant 267 : index
    %1500 = memref.load %arg2[%c267] : memref<441xf32, #tpu.memory_space<smem>>
    %1501 = vector.broadcast %1500 : f32 to vector<16x128xf32>
    %1502 = arith.mulf %1501, %1252 : vector<16x128xf32>
    %1503 = arith.addf %1499, %1502 : vector<16x128xf32>
    %c274 = arith.constant 274 : index
    %1504 = memref.load %arg2[%c274] : memref<441xf32, #tpu.memory_space<smem>>
    %1505 = vector.broadcast %1504 : f32 to vector<16x128xf32>
    %1506 = arith.mulf %1505, %1254 : vector<16x128xf32>
    %1507 = arith.addf %1503, %1506 : vector<16x128xf32>
    %c281 = arith.constant 281 : index
    %1508 = memref.load %arg2[%c281] : memref<441xf32, #tpu.memory_space<smem>>
    %1509 = vector.broadcast %1508 : f32 to vector<16x128xf32>
    %1510 = arith.mulf %1509, %1256 : vector<16x128xf32>
    %1511 = arith.addf %1507, %1510 : vector<16x128xf32>
    %c288 = arith.constant 288 : index
    %1512 = memref.load %arg2[%c288] : memref<441xf32, #tpu.memory_space<smem>>
    %1513 = vector.broadcast %1512 : f32 to vector<16x128xf32>
    %1514 = arith.mulf %1513, %1258 : vector<16x128xf32>
    %1515 = arith.addf %1511, %1514 : vector<16x128xf32>
    %c127_i32_57 = arith.constant 127 : i32
    %1516 = tpu.dynamic_rotate %1515 by %c127_i32_57 dim 1 : vector<16x128xf32>, i32 -> vector<16x128xf32>
    %1517 = arith.addf %1488, %1516 : vector<16x128xf32>
    %c247 = arith.constant 247 : index
    %1518 = memref.load %arg2[%c247] : memref<441xf32, #tpu.memory_space<smem>>
    %1519 = vector.broadcast %1518 : f32 to vector<16x128xf32>
    %1520 = arith.mulf %1519, %1246 : vector<16x128xf32>
    %c254 = arith.constant 254 : index
    %1521 = memref.load %arg2[%c254] : memref<441xf32, #tpu.memory_space<smem>>
    %1522 = vector.broadcast %1521 : f32 to vector<16x128xf32>
    %1523 = arith.mulf %1522, %1248 : vector<16x128xf32>
    %1524 = arith.addf %1520, %1523 : vector<16x128xf32>
    %c261 = arith.constant 261 : index
    %1525 = memref.load %arg2[%c261] : memref<441xf32, #tpu.memory_space<smem>>
    %1526 = vector.broadcast %1525 : f32 to vector<16x128xf32>
    %1527 = arith.mulf %1526, %1250 : vector<16x128xf32>
    %1528 = arith.addf %1524, %1527 : vector<16x128xf32>
    %c268 = arith.constant 268 : index
    %1529 = memref.load %arg2[%c268] : memref<441xf32, #tpu.memory_space<smem>>
    %1530 = vector.broadcast %1529 : f32 to vector<16x128xf32>
    %1531 = arith.mulf %1530, %1252 : vector<16x128xf32>
    %1532 = arith.addf %1528, %1531 : vector<16x128xf32>
    %c275 = arith.constant 275 : index
    %1533 = memref.load %arg2[%c275] : memref<441xf32, #tpu.memory_space<smem>>
    %1534 = vector.broadcast %1533 : f32 to vector<16x128xf32>
    %1535 = arith.mulf %1534, %1254 : vector<16x128xf32>
    %1536 = arith.addf %1532, %1535 : vector<16x128xf32>
    %c282 = arith.constant 282 : index
    %1537 = memref.load %arg2[%c282] : memref<441xf32, #tpu.memory_space<smem>>
    %1538 = vector.broadcast %1537 : f32 to vector<16x128xf32>
    %1539 = arith.mulf %1538, %1256 : vector<16x128xf32>
    %1540 = arith.addf %1536, %1539 : vector<16x128xf32>
    %c289 = arith.constant 289 : index
    %1541 = memref.load %arg2[%c289] : memref<441xf32, #tpu.memory_space<smem>>
    %1542 = vector.broadcast %1541 : f32 to vector<16x128xf32>
    %1543 = arith.mulf %1542, %1258 : vector<16x128xf32>
    %1544 = arith.addf %1540, %1543 : vector<16x128xf32>
    %c126_i32_58 = arith.constant 126 : i32
    %1545 = tpu.dynamic_rotate %1544 by %c126_i32_58 dim 1 : vector<16x128xf32>, i32 -> vector<16x128xf32>
    %1546 = arith.addf %1517, %1545 : vector<16x128xf32>
    %c248 = arith.constant 248 : index
    %1547 = memref.load %arg2[%c248] : memref<441xf32, #tpu.memory_space<smem>>
    %1548 = vector.broadcast %1547 : f32 to vector<16x128xf32>
    %1549 = arith.mulf %1548, %1246 : vector<16x128xf32>
    %c255 = arith.constant 255 : index
    %1550 = memref.load %arg2[%c255] : memref<441xf32, #tpu.memory_space<smem>>
    %1551 = vector.broadcast %1550 : f32 to vector<16x128xf32>
    %1552 = arith.mulf %1551, %1248 : vector<16x128xf32>
    %1553 = arith.addf %1549, %1552 : vector<16x128xf32>
    %c262 = arith.constant 262 : index
    %1554 = memref.load %arg2[%c262] : memref<441xf32, #tpu.memory_space<smem>>
    %1555 = vector.broadcast %1554 : f32 to vector<16x128xf32>
    %1556 = arith.mulf %1555, %1250 : vector<16x128xf32>
    %1557 = arith.addf %1553, %1556 : vector<16x128xf32>
    %c269 = arith.constant 269 : index
    %1558 = memref.load %arg2[%c269] : memref<441xf32, #tpu.memory_space<smem>>
    %1559 = vector.broadcast %1558 : f32 to vector<16x128xf32>
    %1560 = arith.mulf %1559, %1252 : vector<16x128xf32>
    %1561 = arith.addf %1557, %1560 : vector<16x128xf32>
    %c276 = arith.constant 276 : index
    %1562 = memref.load %arg2[%c276] : memref<441xf32, #tpu.memory_space<smem>>
    %1563 = vector.broadcast %1562 : f32 to vector<16x128xf32>
    %1564 = arith.mulf %1563, %1254 : vector<16x128xf32>
    %1565 = arith.addf %1561, %1564 : vector<16x128xf32>
    %c283 = arith.constant 283 : index
    %1566 = memref.load %arg2[%c283] : memref<441xf32, #tpu.memory_space<smem>>
    %1567 = vector.broadcast %1566 : f32 to vector<16x128xf32>
    %1568 = arith.mulf %1567, %1256 : vector<16x128xf32>
    %1569 = arith.addf %1565, %1568 : vector<16x128xf32>
    %c290 = arith.constant 290 : index
    %1570 = memref.load %arg2[%c290] : memref<441xf32, #tpu.memory_space<smem>>
    %1571 = vector.broadcast %1570 : f32 to vector<16x128xf32>
    %1572 = arith.mulf %1571, %1258 : vector<16x128xf32>
    %1573 = arith.addf %1569, %1572 : vector<16x128xf32>
    %c125_i32_59 = arith.constant 125 : i32
    %1574 = tpu.dynamic_rotate %1573 by %c125_i32_59 dim 1 : vector<16x128xf32>, i32 -> vector<16x128xf32>
    %1575 = arith.addf %1546, %1574 : vector<16x128xf32>
    %c249 = arith.constant 249 : index
    %1576 = memref.load %arg2[%c249] : memref<441xf32, #tpu.memory_space<smem>>
    %1577 = vector.broadcast %1576 : f32 to vector<16x128xf32>
    %1578 = arith.mulf %1577, %1246 : vector<16x128xf32>
    %c256 = arith.constant 256 : index
    %1579 = memref.load %arg2[%c256] : memref<441xf32, #tpu.memory_space<smem>>
    %1580 = vector.broadcast %1579 : f32 to vector<16x128xf32>
    %1581 = arith.mulf %1580, %1248 : vector<16x128xf32>
    %1582 = arith.addf %1578, %1581 : vector<16x128xf32>
    %c263 = arith.constant 263 : index
    %1583 = memref.load %arg2[%c263] : memref<441xf32, #tpu.memory_space<smem>>
    %1584 = vector.broadcast %1583 : f32 to vector<16x128xf32>
    %1585 = arith.mulf %1584, %1250 : vector<16x128xf32>
    %1586 = arith.addf %1582, %1585 : vector<16x128xf32>
    %c270 = arith.constant 270 : index
    %1587 = memref.load %arg2[%c270] : memref<441xf32, #tpu.memory_space<smem>>
    %1588 = vector.broadcast %1587 : f32 to vector<16x128xf32>
    %1589 = arith.mulf %1588, %1252 : vector<16x128xf32>
    %1590 = arith.addf %1586, %1589 : vector<16x128xf32>
    %c277 = arith.constant 277 : index
    %1591 = memref.load %arg2[%c277] : memref<441xf32, #tpu.memory_space<smem>>
    %1592 = vector.broadcast %1591 : f32 to vector<16x128xf32>
    %1593 = arith.mulf %1592, %1254 : vector<16x128xf32>
    %1594 = arith.addf %1590, %1593 : vector<16x128xf32>
    %c284 = arith.constant 284 : index
    %1595 = memref.load %arg2[%c284] : memref<441xf32, #tpu.memory_space<smem>>
    %1596 = vector.broadcast %1595 : f32 to vector<16x128xf32>
    %1597 = arith.mulf %1596, %1256 : vector<16x128xf32>
    %1598 = arith.addf %1594, %1597 : vector<16x128xf32>
    %c291 = arith.constant 291 : index
    %1599 = memref.load %arg2[%c291] : memref<441xf32, #tpu.memory_space<smem>>
    %1600 = vector.broadcast %1599 : f32 to vector<16x128xf32>
    %1601 = arith.mulf %1600, %1258 : vector<16x128xf32>
    %1602 = arith.addf %1598, %1601 : vector<16x128xf32>
    %c124_i32_60 = arith.constant 124 : i32
    %1603 = tpu.dynamic_rotate %1602 by %c124_i32_60 dim 1 : vector<16x128xf32>, i32 -> vector<16x128xf32>
    %1604 = arith.addf %1575, %1603 : vector<16x128xf32>
    %c250 = arith.constant 250 : index
    %1605 = memref.load %arg2[%c250] : memref<441xf32, #tpu.memory_space<smem>>
    %1606 = vector.broadcast %1605 : f32 to vector<16x128xf32>
    %1607 = arith.mulf %1606, %1246 : vector<16x128xf32>
    %c257 = arith.constant 257 : index
    %1608 = memref.load %arg2[%c257] : memref<441xf32, #tpu.memory_space<smem>>
    %1609 = vector.broadcast %1608 : f32 to vector<16x128xf32>
    %1610 = arith.mulf %1609, %1248 : vector<16x128xf32>
    %1611 = arith.addf %1607, %1610 : vector<16x128xf32>
    %c264 = arith.constant 264 : index
    %1612 = memref.load %arg2[%c264] : memref<441xf32, #tpu.memory_space<smem>>
    %1613 = vector.broadcast %1612 : f32 to vector<16x128xf32>
    %1614 = arith.mulf %1613, %1250 : vector<16x128xf32>
    %1615 = arith.addf %1611, %1614 : vector<16x128xf32>
    %c271 = arith.constant 271 : index
    %1616 = memref.load %arg2[%c271] : memref<441xf32, #tpu.memory_space<smem>>
    %1617 = vector.broadcast %1616 : f32 to vector<16x128xf32>
    %1618 = arith.mulf %1617, %1252 : vector<16x128xf32>
    %1619 = arith.addf %1615, %1618 : vector<16x128xf32>
    %c278 = arith.constant 278 : index
    %1620 = memref.load %arg2[%c278] : memref<441xf32, #tpu.memory_space<smem>>
    %1621 = vector.broadcast %1620 : f32 to vector<16x128xf32>
    %1622 = arith.mulf %1621, %1254 : vector<16x128xf32>
    %1623 = arith.addf %1619, %1622 : vector<16x128xf32>
    %c285 = arith.constant 285 : index
    %1624 = memref.load %arg2[%c285] : memref<441xf32, #tpu.memory_space<smem>>
    %1625 = vector.broadcast %1624 : f32 to vector<16x128xf32>
    %1626 = arith.mulf %1625, %1256 : vector<16x128xf32>
    %1627 = arith.addf %1623, %1626 : vector<16x128xf32>
    %c292 = arith.constant 292 : index
    %1628 = memref.load %arg2[%c292] : memref<441xf32, #tpu.memory_space<smem>>
    %1629 = vector.broadcast %1628 : f32 to vector<16x128xf32>
    %1630 = arith.mulf %1629, %1258 : vector<16x128xf32>
    %1631 = arith.addf %1627, %1630 : vector<16x128xf32>
    %c123_i32_61 = arith.constant 123 : i32
    %1632 = tpu.dynamic_rotate %1631 by %c123_i32_61 dim 1 : vector<16x128xf32>, i32 -> vector<16x128xf32>
    %1633 = arith.addf %1604, %1632 : vector<16x128xf32>
    %c251 = arith.constant 251 : index
    %1634 = memref.load %arg2[%c251] : memref<441xf32, #tpu.memory_space<smem>>
    %1635 = vector.broadcast %1634 : f32 to vector<16x128xf32>
    %1636 = arith.mulf %1635, %1246 : vector<16x128xf32>
    %c258 = arith.constant 258 : index
    %1637 = memref.load %arg2[%c258] : memref<441xf32, #tpu.memory_space<smem>>
    %1638 = vector.broadcast %1637 : f32 to vector<16x128xf32>
    %1639 = arith.mulf %1638, %1248 : vector<16x128xf32>
    %1640 = arith.addf %1636, %1639 : vector<16x128xf32>
    %c265 = arith.constant 265 : index
    %1641 = memref.load %arg2[%c265] : memref<441xf32, #tpu.memory_space<smem>>
    %1642 = vector.broadcast %1641 : f32 to vector<16x128xf32>
    %1643 = arith.mulf %1642, %1250 : vector<16x128xf32>
    %1644 = arith.addf %1640, %1643 : vector<16x128xf32>
    %c272 = arith.constant 272 : index
    %1645 = memref.load %arg2[%c272] : memref<441xf32, #tpu.memory_space<smem>>
    %1646 = vector.broadcast %1645 : f32 to vector<16x128xf32>
    %1647 = arith.mulf %1646, %1252 : vector<16x128xf32>
    %1648 = arith.addf %1644, %1647 : vector<16x128xf32>
    %c279 = arith.constant 279 : index
    %1649 = memref.load %arg2[%c279] : memref<441xf32, #tpu.memory_space<smem>>
    %1650 = vector.broadcast %1649 : f32 to vector<16x128xf32>
    %1651 = arith.mulf %1650, %1254 : vector<16x128xf32>
    %1652 = arith.addf %1648, %1651 : vector<16x128xf32>
    %c286 = arith.constant 286 : index
    %1653 = memref.load %arg2[%c286] : memref<441xf32, #tpu.memory_space<smem>>
    %1654 = vector.broadcast %1653 : f32 to vector<16x128xf32>
    %1655 = arith.mulf %1654, %1256 : vector<16x128xf32>
    %1656 = arith.addf %1652, %1655 : vector<16x128xf32>
    %c293 = arith.constant 293 : index
    %1657 = memref.load %arg2[%c293] : memref<441xf32, #tpu.memory_space<smem>>
    %1658 = vector.broadcast %1657 : f32 to vector<16x128xf32>
    %1659 = arith.mulf %1658, %1258 : vector<16x128xf32>
    %1660 = arith.addf %1656, %1659 : vector<16x128xf32>
    %c122_i32_62 = arith.constant 122 : i32
    %1661 = tpu.dynamic_rotate %1660 by %c122_i32_62 dim 1 : vector<16x128xf32>, i32 -> vector<16x128xf32>
    %1662 = arith.addf %1633, %1661 : vector<16x128xf32>
    %c392 = arith.constant 392 : index
    %1663 = memref.load %arg2[%c392] : memref<441xf32, #tpu.memory_space<smem>>
    %1664 = vector.broadcast %1663 : f32 to vector<16x128xf32>
    %1665 = arith.mulf %1664, %1246 : vector<16x128xf32>
    %c399 = arith.constant 399 : index
    %1666 = memref.load %arg2[%c399] : memref<441xf32, #tpu.memory_space<smem>>
    %1667 = vector.broadcast %1666 : f32 to vector<16x128xf32>
    %1668 = arith.mulf %1667, %1248 : vector<16x128xf32>
    %1669 = arith.addf %1665, %1668 : vector<16x128xf32>
    %c406 = arith.constant 406 : index
    %1670 = memref.load %arg2[%c406] : memref<441xf32, #tpu.memory_space<smem>>
    %1671 = vector.broadcast %1670 : f32 to vector<16x128xf32>
    %1672 = arith.mulf %1671, %1250 : vector<16x128xf32>
    %1673 = arith.addf %1669, %1672 : vector<16x128xf32>
    %c413 = arith.constant 413 : index
    %1674 = memref.load %arg2[%c413] : memref<441xf32, #tpu.memory_space<smem>>
    %1675 = vector.broadcast %1674 : f32 to vector<16x128xf32>
    %1676 = arith.mulf %1675, %1252 : vector<16x128xf32>
    %1677 = arith.addf %1673, %1676 : vector<16x128xf32>
    %c420 = arith.constant 420 : index
    %1678 = memref.load %arg2[%c420] : memref<441xf32, #tpu.memory_space<smem>>
    %1679 = vector.broadcast %1678 : f32 to vector<16x128xf32>
    %1680 = arith.mulf %1679, %1254 : vector<16x128xf32>
    %1681 = arith.addf %1677, %1680 : vector<16x128xf32>
    %c427 = arith.constant 427 : index
    %1682 = memref.load %arg2[%c427] : memref<441xf32, #tpu.memory_space<smem>>
    %1683 = vector.broadcast %1682 : f32 to vector<16x128xf32>
    %1684 = arith.mulf %1683, %1256 : vector<16x128xf32>
    %1685 = arith.addf %1681, %1684 : vector<16x128xf32>
    %c434 = arith.constant 434 : index
    %1686 = memref.load %arg2[%c434] : memref<441xf32, #tpu.memory_space<smem>>
    %1687 = vector.broadcast %1686 : f32 to vector<16x128xf32>
    %1688 = arith.mulf %1687, %1258 : vector<16x128xf32>
    %1689 = arith.addf %1685, %1688 : vector<16x128xf32>
    %1690 = arith.addf %1242, %1689 : vector<16x128xf32>
    %c393 = arith.constant 393 : index
    %1691 = memref.load %arg2[%c393] : memref<441xf32, #tpu.memory_space<smem>>
    %1692 = vector.broadcast %1691 : f32 to vector<16x128xf32>
    %1693 = arith.mulf %1692, %1246 : vector<16x128xf32>
    %c400 = arith.constant 400 : index
    %1694 = memref.load %arg2[%c400] : memref<441xf32, #tpu.memory_space<smem>>
    %1695 = vector.broadcast %1694 : f32 to vector<16x128xf32>
    %1696 = arith.mulf %1695, %1248 : vector<16x128xf32>
    %1697 = arith.addf %1693, %1696 : vector<16x128xf32>
    %c407 = arith.constant 407 : index
    %1698 = memref.load %arg2[%c407] : memref<441xf32, #tpu.memory_space<smem>>
    %1699 = vector.broadcast %1698 : f32 to vector<16x128xf32>
    %1700 = arith.mulf %1699, %1250 : vector<16x128xf32>
    %1701 = arith.addf %1697, %1700 : vector<16x128xf32>
    %c414 = arith.constant 414 : index
    %1702 = memref.load %arg2[%c414] : memref<441xf32, #tpu.memory_space<smem>>
    %1703 = vector.broadcast %1702 : f32 to vector<16x128xf32>
    %1704 = arith.mulf %1703, %1252 : vector<16x128xf32>
    %1705 = arith.addf %1701, %1704 : vector<16x128xf32>
    %c421 = arith.constant 421 : index
    %1706 = memref.load %arg2[%c421] : memref<441xf32, #tpu.memory_space<smem>>
    %1707 = vector.broadcast %1706 : f32 to vector<16x128xf32>
    %1708 = arith.mulf %1707, %1254 : vector<16x128xf32>
    %1709 = arith.addf %1705, %1708 : vector<16x128xf32>
    %c428 = arith.constant 428 : index
    %1710 = memref.load %arg2[%c428] : memref<441xf32, #tpu.memory_space<smem>>
    %1711 = vector.broadcast %1710 : f32 to vector<16x128xf32>
    %1712 = arith.mulf %1711, %1256 : vector<16x128xf32>
    %1713 = arith.addf %1709, %1712 : vector<16x128xf32>
    %c435 = arith.constant 435 : index
    %1714 = memref.load %arg2[%c435] : memref<441xf32, #tpu.memory_space<smem>>
    %1715 = vector.broadcast %1714 : f32 to vector<16x128xf32>
    %1716 = arith.mulf %1715, %1258 : vector<16x128xf32>
    %1717 = arith.addf %1713, %1716 : vector<16x128xf32>
    %c127_i32_63 = arith.constant 127 : i32
    %1718 = tpu.dynamic_rotate %1717 by %c127_i32_63 dim 1 : vector<16x128xf32>, i32 -> vector<16x128xf32>
    %1719 = arith.addf %1690, %1718 : vector<16x128xf32>
    %c394 = arith.constant 394 : index
    %1720 = memref.load %arg2[%c394] : memref<441xf32, #tpu.memory_space<smem>>
    %1721 = vector.broadcast %1720 : f32 to vector<16x128xf32>
    %1722 = arith.mulf %1721, %1246 : vector<16x128xf32>
    %c401 = arith.constant 401 : index
    %1723 = memref.load %arg2[%c401] : memref<441xf32, #tpu.memory_space<smem>>
    %1724 = vector.broadcast %1723 : f32 to vector<16x128xf32>
    %1725 = arith.mulf %1724, %1248 : vector<16x128xf32>
    %1726 = arith.addf %1722, %1725 : vector<16x128xf32>
    %c408 = arith.constant 408 : index
    %1727 = memref.load %arg2[%c408] : memref<441xf32, #tpu.memory_space<smem>>
    %1728 = vector.broadcast %1727 : f32 to vector<16x128xf32>
    %1729 = arith.mulf %1728, %1250 : vector<16x128xf32>
    %1730 = arith.addf %1726, %1729 : vector<16x128xf32>
    %c415 = arith.constant 415 : index
    %1731 = memref.load %arg2[%c415] : memref<441xf32, #tpu.memory_space<smem>>
    %1732 = vector.broadcast %1731 : f32 to vector<16x128xf32>
    %1733 = arith.mulf %1732, %1252 : vector<16x128xf32>
    %1734 = arith.addf %1730, %1733 : vector<16x128xf32>
    %c422 = arith.constant 422 : index
    %1735 = memref.load %arg2[%c422] : memref<441xf32, #tpu.memory_space<smem>>
    %1736 = vector.broadcast %1735 : f32 to vector<16x128xf32>
    %1737 = arith.mulf %1736, %1254 : vector<16x128xf32>
    %1738 = arith.addf %1734, %1737 : vector<16x128xf32>
    %c429 = arith.constant 429 : index
    %1739 = memref.load %arg2[%c429] : memref<441xf32, #tpu.memory_space<smem>>
    %1740 = vector.broadcast %1739 : f32 to vector<16x128xf32>
    %1741 = arith.mulf %1740, %1256 : vector<16x128xf32>
    %1742 = arith.addf %1738, %1741 : vector<16x128xf32>
    %c436 = arith.constant 436 : index
    %1743 = memref.load %arg2[%c436] : memref<441xf32, #tpu.memory_space<smem>>
    %1744 = vector.broadcast %1743 : f32 to vector<16x128xf32>
    %1745 = arith.mulf %1744, %1258 : vector<16x128xf32>
    %1746 = arith.addf %1742, %1745 : vector<16x128xf32>
    %c126_i32_64 = arith.constant 126 : i32
    %1747 = tpu.dynamic_rotate %1746 by %c126_i32_64 dim 1 : vector<16x128xf32>, i32 -> vector<16x128xf32>
    %1748 = arith.addf %1719, %1747 : vector<16x128xf32>
    %c395 = arith.constant 395 : index
    %1749 = memref.load %arg2[%c395] : memref<441xf32, #tpu.memory_space<smem>>
    %1750 = vector.broadcast %1749 : f32 to vector<16x128xf32>
    %1751 = arith.mulf %1750, %1246 : vector<16x128xf32>
    %c402 = arith.constant 402 : index
    %1752 = memref.load %arg2[%c402] : memref<441xf32, #tpu.memory_space<smem>>
    %1753 = vector.broadcast %1752 : f32 to vector<16x128xf32>
    %1754 = arith.mulf %1753, %1248 : vector<16x128xf32>
    %1755 = arith.addf %1751, %1754 : vector<16x128xf32>
    %c409 = arith.constant 409 : index
    %1756 = memref.load %arg2[%c409] : memref<441xf32, #tpu.memory_space<smem>>
    %1757 = vector.broadcast %1756 : f32 to vector<16x128xf32>
    %1758 = arith.mulf %1757, %1250 : vector<16x128xf32>
    %1759 = arith.addf %1755, %1758 : vector<16x128xf32>
    %c416 = arith.constant 416 : index
    %1760 = memref.load %arg2[%c416] : memref<441xf32, #tpu.memory_space<smem>>
    %1761 = vector.broadcast %1760 : f32 to vector<16x128xf32>
    %1762 = arith.mulf %1761, %1252 : vector<16x128xf32>
    %1763 = arith.addf %1759, %1762 : vector<16x128xf32>
    %c423 = arith.constant 423 : index
    %1764 = memref.load %arg2[%c423] : memref<441xf32, #tpu.memory_space<smem>>
    %1765 = vector.broadcast %1764 : f32 to vector<16x128xf32>
    %1766 = arith.mulf %1765, %1254 : vector<16x128xf32>
    %1767 = arith.addf %1763, %1766 : vector<16x128xf32>
    %c430 = arith.constant 430 : index
    %1768 = memref.load %arg2[%c430] : memref<441xf32, #tpu.memory_space<smem>>
    %1769 = vector.broadcast %1768 : f32 to vector<16x128xf32>
    %1770 = arith.mulf %1769, %1256 : vector<16x128xf32>
    %1771 = arith.addf %1767, %1770 : vector<16x128xf32>
    %c437 = arith.constant 437 : index
    %1772 = memref.load %arg2[%c437] : memref<441xf32, #tpu.memory_space<smem>>
    %1773 = vector.broadcast %1772 : f32 to vector<16x128xf32>
    %1774 = arith.mulf %1773, %1258 : vector<16x128xf32>
    %1775 = arith.addf %1771, %1774 : vector<16x128xf32>
    %c125_i32_65 = arith.constant 125 : i32
    %1776 = tpu.dynamic_rotate %1775 by %c125_i32_65 dim 1 : vector<16x128xf32>, i32 -> vector<16x128xf32>
    %1777 = arith.addf %1748, %1776 : vector<16x128xf32>
    %c396 = arith.constant 396 : index
    %1778 = memref.load %arg2[%c396] : memref<441xf32, #tpu.memory_space<smem>>
    %1779 = vector.broadcast %1778 : f32 to vector<16x128xf32>
    %1780 = arith.mulf %1779, %1246 : vector<16x128xf32>
    %c403 = arith.constant 403 : index
    %1781 = memref.load %arg2[%c403] : memref<441xf32, #tpu.memory_space<smem>>
    %1782 = vector.broadcast %1781 : f32 to vector<16x128xf32>
    %1783 = arith.mulf %1782, %1248 : vector<16x128xf32>
    %1784 = arith.addf %1780, %1783 : vector<16x128xf32>
    %c410 = arith.constant 410 : index
    %1785 = memref.load %arg2[%c410] : memref<441xf32, #tpu.memory_space<smem>>
    %1786 = vector.broadcast %1785 : f32 to vector<16x128xf32>
    %1787 = arith.mulf %1786, %1250 : vector<16x128xf32>
    %1788 = arith.addf %1784, %1787 : vector<16x128xf32>
    %c417 = arith.constant 417 : index
    %1789 = memref.load %arg2[%c417] : memref<441xf32, #tpu.memory_space<smem>>
    %1790 = vector.broadcast %1789 : f32 to vector<16x128xf32>
    %1791 = arith.mulf %1790, %1252 : vector<16x128xf32>
    %1792 = arith.addf %1788, %1791 : vector<16x128xf32>
    %c424 = arith.constant 424 : index
    %1793 = memref.load %arg2[%c424] : memref<441xf32, #tpu.memory_space<smem>>
    %1794 = vector.broadcast %1793 : f32 to vector<16x128xf32>
    %1795 = arith.mulf %1794, %1254 : vector<16x128xf32>
    %1796 = arith.addf %1792, %1795 : vector<16x128xf32>
    %c431 = arith.constant 431 : index
    %1797 = memref.load %arg2[%c431] : memref<441xf32, #tpu.memory_space<smem>>
    %1798 = vector.broadcast %1797 : f32 to vector<16x128xf32>
    %1799 = arith.mulf %1798, %1256 : vector<16x128xf32>
    %1800 = arith.addf %1796, %1799 : vector<16x128xf32>
    %c438 = arith.constant 438 : index
    %1801 = memref.load %arg2[%c438] : memref<441xf32, #tpu.memory_space<smem>>
    %1802 = vector.broadcast %1801 : f32 to vector<16x128xf32>
    %1803 = arith.mulf %1802, %1258 : vector<16x128xf32>
    %1804 = arith.addf %1800, %1803 : vector<16x128xf32>
    %c124_i32_66 = arith.constant 124 : i32
    %1805 = tpu.dynamic_rotate %1804 by %c124_i32_66 dim 1 : vector<16x128xf32>, i32 -> vector<16x128xf32>
    %1806 = arith.addf %1777, %1805 : vector<16x128xf32>
    %c397 = arith.constant 397 : index
    %1807 = memref.load %arg2[%c397] : memref<441xf32, #tpu.memory_space<smem>>
    %1808 = vector.broadcast %1807 : f32 to vector<16x128xf32>
    %1809 = arith.mulf %1808, %1246 : vector<16x128xf32>
    %c404 = arith.constant 404 : index
    %1810 = memref.load %arg2[%c404] : memref<441xf32, #tpu.memory_space<smem>>
    %1811 = vector.broadcast %1810 : f32 to vector<16x128xf32>
    %1812 = arith.mulf %1811, %1248 : vector<16x128xf32>
    %1813 = arith.addf %1809, %1812 : vector<16x128xf32>
    %c411 = arith.constant 411 : index
    %1814 = memref.load %arg2[%c411] : memref<441xf32, #tpu.memory_space<smem>>
    %1815 = vector.broadcast %1814 : f32 to vector<16x128xf32>
    %1816 = arith.mulf %1815, %1250 : vector<16x128xf32>
    %1817 = arith.addf %1813, %1816 : vector<16x128xf32>
    %c418 = arith.constant 418 : index
    %1818 = memref.load %arg2[%c418] : memref<441xf32, #tpu.memory_space<smem>>
    %1819 = vector.broadcast %1818 : f32 to vector<16x128xf32>
    %1820 = arith.mulf %1819, %1252 : vector<16x128xf32>
    %1821 = arith.addf %1817, %1820 : vector<16x128xf32>
    %c425 = arith.constant 425 : index
    %1822 = memref.load %arg2[%c425] : memref<441xf32, #tpu.memory_space<smem>>
    %1823 = vector.broadcast %1822 : f32 to vector<16x128xf32>
    %1824 = arith.mulf %1823, %1254 : vector<16x128xf32>
    %1825 = arith.addf %1821, %1824 : vector<16x128xf32>
    %c432 = arith.constant 432 : index
    %1826 = memref.load %arg2[%c432] : memref<441xf32, #tpu.memory_space<smem>>
    %1827 = vector.broadcast %1826 : f32 to vector<16x128xf32>
    %1828 = arith.mulf %1827, %1256 : vector<16x128xf32>
    %1829 = arith.addf %1825, %1828 : vector<16x128xf32>
    %c439 = arith.constant 439 : index
    %1830 = memref.load %arg2[%c439] : memref<441xf32, #tpu.memory_space<smem>>
    %1831 = vector.broadcast %1830 : f32 to vector<16x128xf32>
    %1832 = arith.mulf %1831, %1258 : vector<16x128xf32>
    %1833 = arith.addf %1829, %1832 : vector<16x128xf32>
    %c123_i32_67 = arith.constant 123 : i32
    %1834 = tpu.dynamic_rotate %1833 by %c123_i32_67 dim 1 : vector<16x128xf32>, i32 -> vector<16x128xf32>
    %1835 = arith.addf %1806, %1834 : vector<16x128xf32>
    %c398 = arith.constant 398 : index
    %1836 = memref.load %arg2[%c398] : memref<441xf32, #tpu.memory_space<smem>>
    %1837 = vector.broadcast %1836 : f32 to vector<16x128xf32>
    %1838 = arith.mulf %1837, %1246 : vector<16x128xf32>
    %c405 = arith.constant 405 : index
    %1839 = memref.load %arg2[%c405] : memref<441xf32, #tpu.memory_space<smem>>
    %1840 = vector.broadcast %1839 : f32 to vector<16x128xf32>
    %1841 = arith.mulf %1840, %1248 : vector<16x128xf32>
    %1842 = arith.addf %1838, %1841 : vector<16x128xf32>
    %c412 = arith.constant 412 : index
    %1843 = memref.load %arg2[%c412] : memref<441xf32, #tpu.memory_space<smem>>
    %1844 = vector.broadcast %1843 : f32 to vector<16x128xf32>
    %1845 = arith.mulf %1844, %1250 : vector<16x128xf32>
    %1846 = arith.addf %1842, %1845 : vector<16x128xf32>
    %c419 = arith.constant 419 : index
    %1847 = memref.load %arg2[%c419] : memref<441xf32, #tpu.memory_space<smem>>
    %1848 = vector.broadcast %1847 : f32 to vector<16x128xf32>
    %1849 = arith.mulf %1848, %1252 : vector<16x128xf32>
    %1850 = arith.addf %1846, %1849 : vector<16x128xf32>
    %c426 = arith.constant 426 : index
    %1851 = memref.load %arg2[%c426] : memref<441xf32, #tpu.memory_space<smem>>
    %1852 = vector.broadcast %1851 : f32 to vector<16x128xf32>
    %1853 = arith.mulf %1852, %1254 : vector<16x128xf32>
    %1854 = arith.addf %1850, %1853 : vector<16x128xf32>
    %c433 = arith.constant 433 : index
    %1855 = memref.load %arg2[%c433] : memref<441xf32, #tpu.memory_space<smem>>
    %1856 = vector.broadcast %1855 : f32 to vector<16x128xf32>
    %1857 = arith.mulf %1856, %1256 : vector<16x128xf32>
    %1858 = arith.addf %1854, %1857 : vector<16x128xf32>
    %c440 = arith.constant 440 : index
    %1859 = memref.load %arg2[%c440] : memref<441xf32, #tpu.memory_space<smem>>
    %1860 = vector.broadcast %1859 : f32 to vector<16x128xf32>
    %1861 = arith.mulf %1860, %1258 : vector<16x128xf32>
    %1862 = arith.addf %1858, %1861 : vector<16x128xf32>
    %c122_i32_68 = arith.constant 122 : i32
    %1863 = tpu.dynamic_rotate %1862 by %c122_i32_68 dim 1 : vector<16x128xf32>, i32 -> vector<16x128xf32>
    %1864 = arith.addf %1835, %1863 : vector<16x128xf32>
    %c0_69 = arith.constant 0 : index
    %1865 = memref.load %arg3[%c0_69] : memref<3xf32, #tpu.memory_space<smem>>
    %1866 = vector.broadcast %1865 : f32 to vector<16x128xf32>
    %1867 = arith.addf %1460, %1866 : vector<16x128xf32>
    %1868 = math.tanh %1867 : vector<16x128xf32>
    %c0_70 = arith.constant 0 : index
    %c0_71 = arith.constant 0 : index
    %c0_72 = arith.constant 0 : index
    %c0_73 = arith.constant 0 : index
    %1869 = vector.load %arg5[%c0_70, %c0_71, %c0_72, %c0_73] : memref<1x3x16x128xf32, #tpu.memory_space<vmem>>, vector<1x1x16x128xf32>
    %1870 = vector.shape_cast %1869 : vector<1x1x16x128xf32> to vector<16x128xf32>
    %1871 = vector.shape_cast %1868 : vector<16x128xf32> to vector<1x1x16x128xf32>
    tpu.vector_store %arg5[%c0_70, %c0_71, %c0_72, %c0_73], %1871 {strides = array<i32>} : memref<1x3x16x128xf32, #tpu.memory_space<vmem>>, vector<1x1x16x128xf32>,
    %c1_74 = arith.constant 1 : index
    %1872 = memref.load %arg3[%c1_74] : memref<3xf32, #tpu.memory_space<smem>>
    %1873 = vector.broadcast %1872 : f32 to vector<16x128xf32>
    %1874 = arith.addf %1662, %1873 : vector<16x128xf32>
    %1875 = math.tanh %1874 : vector<16x128xf32>
    %c0_75 = arith.constant 0 : index
    %c1_76 = arith.constant 1 : index
    %c0_77 = arith.constant 0 : index
    %c0_78 = arith.constant 0 : index
    %1876 = vector.load %arg5[%c0_75, %c1_76, %c0_77, %c0_78] : memref<1x3x16x128xf32, #tpu.memory_space<vmem>>, vector<1x1x16x128xf32>
    %1877 = vector.shape_cast %1876 : vector<1x1x16x128xf32> to vector<16x128xf32>
    %1878 = vector.shape_cast %1875 : vector<16x128xf32> to vector<1x1x16x128xf32>
    tpu.vector_store %arg5[%c0_75, %c1_76, %c0_77, %c0_78], %1878 {strides = array<i32>} : memref<1x3x16x128xf32, #tpu.memory_space<vmem>>, vector<1x1x16x128xf32>,
    %c2_79 = arith.constant 2 : index
    %1879 = memref.load %arg3[%c2_79] : memref<3xf32, #tpu.memory_space<smem>>
    %1880 = vector.broadcast %1879 : f32 to vector<16x128xf32>
    %1881 = arith.addf %1864, %1880 : vector<16x128xf32>
    %1882 = math.tanh %1881 : vector<16x128xf32>
    %c0_80 = arith.constant 0 : index
    %c2_81 = arith.constant 2 : index
    %c0_82 = arith.constant 0 : index
    %c0_83 = arith.constant 0 : index
    %1883 = vector.load %arg5[%c0_80, %c2_81, %c0_82, %c0_83] : memref<1x3x16x128xf32, #tpu.memory_space<vmem>>, vector<1x1x16x128xf32>
    %1884 = vector.shape_cast %1883 : vector<1x1x16x128xf32> to vector<16x128xf32>
    %1885 = vector.shape_cast %1882 : vector<16x128xf32> to vector<1x1x16x128xf32>
    tpu.vector_store %arg5[%c0_80, %c2_81, %c0_82, %c0_83], %1885 {strides = array<i32>} : memref<1x3x16x128xf32, #tpu.memory_space<vmem>>, vector<1x1x16x128xf32>,
    return
  }
  func.func @transform_0(%arg0: i32, %arg1: i32) -> i32 {
    %c0_i32 = arith.constant 0 : i32
    %c0_i32_0 = arith.constant 0 : i32
    return %c0_i32 : i32
  }
  func.func @transform_1(%arg0: i32, %arg1: i32) -> i32 {
    %c0_i32 = arith.constant 0 : i32
    %c0_i32_0 = arith.constant 0 : i32
    return %c0_i32 : i32
  }
  func.func @transform_2(%arg0: i32, %arg1: i32) -> (i32, i32, i32, i32) {
    %c0_i32 = arith.constant 0 : i32
    %c0_i32_0 = arith.constant 0 : i32
    %c0_i32_1 = arith.constant 0 : i32
    %c0_i32_2 = arith.constant 0 : i32
    return %arg0, %c0_i32, %c0_i32_0, %c0_i32_1 : i32, i32, i32, i32
  }
  func.func @transform_3(%arg0: i32, %arg1: i32) -> (i32, i32, i32, i32) {
    %c0_i32 = arith.constant 0 : i32
    %c0_i32_0 = arith.constant 0 : i32
    %c0_i32_1 = arith.constant 0 : i32
    return %arg0, %c0_i32, %arg1, %c0_i32_0 : i32, i32, i32, i32
  }
}

</mosaic_0001>

<llo_original>
// kernel: tpu_custom_call.1
$region0: #{tpu_custom_call.1}
  #allocation0 [shape = 'u32[]', space=smem, size = 0x4, offset = 0x4, fixed_abs, tag = 'smem constant byte address 0x4 - core index']
  #allocation1 [shape = 'u32[144,128]{1,0:T(1,128)}', space=vmem, size = 0x12000, scoped, tag = 'internal scratch']
  #allocation10 [shape = 's32[]', space=sflag, size = 0x4, offset = 0, fixed_abs, tag = 'sflag constant byte address 0x0 - dummy sync flag']
  %s0 = inlined_call_operand.hbm [shape: f32[441], index: 0, kind: input, shape index: {}]
  %s1 = inlined_call_operand.vmem [shape: f32[3], index: 1, kind: input, shape index: {}]
  %s2 = inlined_call_operand.hbm [shape: f32[2,3,40,128], index: 2, kind: input, shape index: {}]
  %s3 = inlined_call_operand.hbm [shape: f32[2,3,32,128], index: 3, kind: output, shape index: {}]
  %s4 = sld [smem:[#allocation0]]
  $region57: #{tpu_custom_call.1} parent=0
    _
  %s6 = ssub.s32 1, %s4
  %s7 = scalar_select 0, %s6, %s4
  $region1: #{tpu_custom_call.1} parent=0
    #allocation2 [shape = 'u8[2048]{0}', space=smem, size = 0x800, scoped, tag = 'input window, operand 0, single buffered']
    #allocation3 [shape = 's32[2]{0}', space=sflag, size = 0x8, scoped, tag = 'scoped memory for tpu_custom_call.1']
    #allocation4 [shape = 's32[2]{0}', space=sflag, size = 0x8, scoped, tag = 'scoped memory for tpu_custom_call.1']
    #allocation5 [shape = 's32[2]{0}', space=sflag, size = 0x8, scoped, tag = 'scoped memory for tpu_custom_call.1']
    #allocation6 [shape = 's32[2]{0}', space=sflag, size = 0x8, scoped, tag = 'scoped memory for tpu_custom_call.1']
    #allocation7 [shape = 'u8[512]{0}', space=smem, size = 0x200, scoped, tag = 'input window, operand 1, single buffered']
    #allocation8 [shape = 'u8[122880]{0}', space=vmem, size = 0x1e000, scoped, tag = 'input window, operand 2']
    #allocation9 [shape = 'u8[49152]{0}', space=vmem, size = 0xc000, scoped, tag = 'output window, operand 0']
    %8 = vsyncpa [#allocation5], 0
    %9 = vsyncpa [#allocation6], 0
    %10 = vsyncpa [#allocation3], 0
    %s11 = scalar_lea.sflag [#allocation3], 1
    %12 = vsyncpa %s11, 0
    %13 = vsyncpa [#allocation4], 0
    %s14 = scalar_lea.sflag [#allocation4], 1
    %15 = vsyncpa %s14, 0
    loop: start=0, step=1, limit=6
    $region2: #{tpu_custom_call.1} parent=1 // loop_pre_header
      _
    $region3: #{tpu_custom_call.1} parent=1 // loop_header
      %s17 = sphi 0, %s21
      %p18 = scmp.ge.s32.totalorder %s17, 6
      %s24 = sphi 0, %s36
      %s25 = sphi 0, %s32
      %s26 = sphi 0, %s24
      %s27 = sphi 0, %s25
      %s28 = sphi 0, %s26
      %s29 = sphi 0, %s27
      %s37 = sphi 0, %s37
      %s39 = sphi 0, %s37
      %s40 = sphi 0, %s39
      %s54 = sphi 0, %s40
      %s58 = sphi 0, %s58
      %s60 = sphi 0, %s58
      %s61 = sphi 0, %s60
      %s75 = sphi 0, %s61
      %s81 = sphi 0, %s83
      %s84 = sphi 0, %s81
      %s85 = sphi 0, %s84
      %s101 = sphi 0, %s85
      %s109 = sphi 0, %s111
      %s112 = sphi 0, %s109
      %s113 = sphi 0, %s112
      %s129 = sphi 0, %s113
    $region4: #{tpu_custom_call.1} parent=1 // loop_header_branch
      %20 = sbr.rel (%p18) target = $region8
    $region5: #{tpu_custom_call.1} parent=1 // loop_body
      %s22 = ssub.s32 %s17, 1
      %s23 = ssub.s32 %s17, 2
      %s30 = sadd.s32 1, %s25
      %p31 = scmp.ge.s32.totalorder %s30, 2
      %s32 = scalar_select %p31, 0, %s30
      %s33 = sadd.s32 1, %s24
      %s34 = scalar_select %p31, %s33, %s24
      %p35 = scmp.ge.s32.totalorder %s34, 2
      %s36 = scalar_select %p35, 0, %s34
      %s38 = sadd.s32 %s37, 1
      %p41 = scmp.eq.s32.totalorder %s17, 3
      %p42 = scmp.ne.s32.totalorder %s37, %s39
      %p43 = scmp.eq.s32.totalorder %s17, 0
      %p44 = por %p42, %p43
      %p45 = scmp.ne.s32.totalorder %s37, %s39
      %p46 = scmp.eq.s32.totalorder %s22, 3
      %p47 = por %p45, %p46
      %p48 = scmp.ne.s32.totalorder %s39, %s40
      %p49 = scmp.eq.s32.totalorder %s22, 0
      %p50 = por %p48, %p49
      %p51 = scmp.ne.s32.totalorder %s39, %s40
      %p52 = scmp.eq.s32.totalorder %s23, 3
      %p53 = por %p51, %p52
      %p55 = scmp.ne.s32.totalorder %s40, %s54
      %p56 = scmp.eq.s32.totalorder %s23, 0
      %p57 = por %p55, %p56
      %s59 = sadd.s32 %s58, 1
      %p62 = scmp.eq.s32.totalorder %s17, 3
      %p63 = scmp.ne.s32.totalorder %s58, %s60
      %p64 = scmp.eq.s32.totalorder %s17, 0
      %p65 = por %p63, %p64
      %p66 = scmp.ne.s32.totalorder %s58, %s60
      %p67 = scmp.eq.s32.totalorder %s22, 3
      %p68 = por %p66, %p67
      %p69 = scmp.ne.s32.totalorder %s60, %s61
      %p70 = scmp.eq.s32.totalorder %s22, 0
      %p71 = por %p69, %p70
      %p72 = scmp.ne.s32.totalorder %s60, %s61
      %p73 = scmp.eq.s32.totalorder %s23, 3
      %p74 = por %p72, %p73
      %p76 = scmp.ne.s32.totalorder %s61, %s75
      %p77 = scmp.eq.s32.totalorder %s23, 0
      %p78 = por %p76, %p77
      %s79 = ssub.s32 %s24, %s36
      %p80 = scmp.eq.s32.totalorder %s79, 0
      %s82 = sadd.s32 %s81, 1
      %s83 = scalar_select %p80, %s81, %s82
      %p86 = pneg %p80
      %p87 = scmp.eq.s32.totalorder %s17, 3
      %p88 = por %p86, %p87
      %p89 = scmp.ne.s32.totalorder %s81, %s84
      %p90 = scmp.eq.s32.totalorder %s17, 0
      %p91 = por %p89, %p90
      %p92 = scmp.ne.s32.totalorder %s81, %s84
      %p93 = scmp.eq.s32.totalorder %s22, 3
      %p94 = por %p92, %p93
      %p95 = scmp.ne.s32.totalorder %s84, %s85
      %p96 = scmp.eq.s32.totalorder %s22, 0
      %p97 = por %p95, %p96
      %p98 = scmp.ne.s32.totalorder %s84, %s85
      %p99 = scmp.eq.s32.totalorder %s23, 3
      %p100 = por %p98, %p99
      %p102 = scmp.ne.s32.totalorder %s85, %s101
      %p103 = scmp.eq.s32.totalorder %s23, 0
      %p104 = por %p102, %p103
      %s105 = ssub.s32 %s24, %s36
      %s106 = ssub.s32 %s25, %s32
      %s107 = sor.u32 %s105, %s106
      %p108 = scmp.eq.s32.totalorder %s107, 0
      %s110 = sadd.s32 %s109, 1
      %s111 = scalar_select %p108, %s109, %s110
      %p114 = pneg %p108
      %p115 = scmp.eq.s32.totalorder %s17, 3
      %p116 = por %p114, %p115
      %p117 = scmp.ne.s32.totalorder %s109, %s112
      %p118 = scmp.eq.s32.totalorder %s17, 0
      %p119 = por %p117, %p118
      %p120 = scmp.ne.s32.totalorder %s109, %s112
      %p121 = scmp.eq.s32.totalorder %s22, 3
      %p122 = por %p120, %p121
      %p123 = scmp.ne.s32.totalorder %s112, %s113
      %p124 = scmp.eq.s32.totalorder %s22, 0
      %p125 = por %p123, %p124
      %p126 = scmp.ne.s32.totalorder %s112, %s113
      %p127 = scmp.eq.s32.totalorder %s23, 3
      %p128 = por %p126, %p127
      %p130 = scmp.ne.s32.totalorder %s113, %s129
      %p131 = scmp.eq.s32.totalorder %s23, 0
      %p132 = por %p130, %p131
      %p133 = scmp.le.s32.totalorder 1, %s17
      %p134 = scmp.lt.s32.totalorder %s17, 5
      %p135 = pnand %p133, %p134
      %p136 = pneg %p135
      // Predicated region
      $region9: #{tpu_custom_call.1} parent=5 // pred_check
        _
      $region10: #{tpu_custom_call.1} parent=5 // pred_check_branch
        %138 = sbr.rel (%p135) target = $region12
      $region11: #{tpu_custom_call.1} parent=5 // pred_region
        %s139 = ssub.s32 %s17, 1
        // Predicated region
        $region13: #{tpu_custom_call.1} parent=11 // pred_check
          %p140 = pneg %p50
        $region14: #{tpu_custom_call.1} parent=11 // pred_check_branch
          %142 = sbr.rel (%p140) target = $region16
        $region15: #{tpu_custom_call.1} parent=11 // pred_region
          %s144 = ssub.s32 64, 64
          %145 = vsyncadd [#allocation5], %s144
          %148 = dma.hbm_to_smem %s0, 64, [#allocation2], [#allocation5]
        $region16: #{tpu_custom_call.1} parent=11 // pred_fallthru
          _
        // Predicated region
        $region17: #{tpu_custom_call.1} parent=11 // pred_check
          %p149 = pneg %p71
        $region18: #{tpu_custom_call.1} parent=11 // pred_check_branch
          %151 = sbr.rel (%p149) target = $region20
        $region19: #{tpu_custom_call.1} parent=11 // pred_region
          %s153 = ssub.s32 16, 16
          %154 = vsyncadd [#allocation6], %s153
          %s156 = sshll.u32 %s1, 4
          %s157 = int_to_ptr.vmem [resolvable:$true] %s156
          %159 = dma.vmem_to_smem %s157, 16, [#allocation7], [#allocation6]
        $region20: #{tpu_custom_call.1} parent=11 // pred_fallthru
          _
      $region12: #{tpu_custom_call.1} parent=5 // pred_fallthru
        _
      %p160 = scmp.lt.s32.totalorder %s17, 4
      // Predicated region
      $region21: #{tpu_custom_call.1} parent=5 // pred_check
        %p161 = pneg %p160
      $region22: #{tpu_custom_call.1} parent=5 // pred_check_branch
        %163 = sbr.rel (%p161) target = $region24
      $region23: #{tpu_custom_call.1} parent=5 // pred_region
        // Predicated region
        $region25: #{tpu_custom_call.1} parent=23 // pred_check
          %p164 = pneg %p91
        $region26: #{tpu_custom_call.1} parent=23 // pred_check_branch
          %166 = sbr.rel (%p164) target = $region28
        $region27: #{tpu_custom_call.1} parent=23 // pred_region
          %s167 = sand.u32 %s81, 1
          %s168 = scalar_lea.sflag [#allocation3], %s167
          %s169 = sand.u32 %s81, 1
          %s170 = smul.addr %s169, 120
          %s171 = scalar_lea.vmem [#allocation8], %s170
          %s173 = ssub.s32 1920, 1920
          %174 = vsyncadd %s168, %s173
          %s175 = smul.addr %s24, 15
          %s176 = smul.addr %s175, 128
          %s177 = scalar_lea.hbm %s2, %s176
          %s178 = sshll.u32 %s171, 4
          %s179 = int_to_ptr.vmem [resolvable:$true] %s178
          %184 = dma.hbm_to_vmem [thread:$0]  %s177, 1920, %s179, %s168, 128, 128, 8
        $region28: #{tpu_custom_call.1} parent=23 // pred_fallthru
          _
      $region24: #{tpu_custom_call.1} parent=5 // pred_fallthru
        _
      %p185 = scmp.le.s32.totalorder 1, %s17
      %p186 = scmp.lt.s32.totalorder %s17, 5
      %p187 = pnand %p185, %p186
      %p188 = pneg %p187
      // Predicated region
      $region29: #{tpu_custom_call.1} parent=5 // pred_check
        _
      $region30: #{tpu_custom_call.1} parent=5 // pred_check_branch
        %190 = sbr.rel (%p187) target = $region32
      $region31: #{tpu_custom_call.1} parent=5 // pred_region
        %s191 = ssub.s32 %s17, 1
        // Predicated region
        $region33: #{tpu_custom_call.1} parent=31 // pred_check
          %p192 = pneg %p50
        $region34: #{tpu_custom_call.1} parent=31 // pred_check_branch
          %194 = sbr.rel (%p192) target = $region36
        $region35: #{tpu_custom_call.1} parent=31 // pred_region
          %195 = dma.done [#allocation5], 64
        $region36: #{tpu_custom_call.1} parent=31 // pred_fallthru
          _
        // Predicated region
        $region37: #{tpu_custom_call.1} parent=31 // pred_check
          %p196 = pneg %p71
        $region38: #{tpu_custom_call.1} parent=31 // pred_check_branch
          %198 = sbr.rel (%p196) target = $region40
        $region39: #{tpu_custom_call.1} parent=31 // pred_region
          %199 = dma.done [#allocation6], 16
        $region40: #{tpu_custom_call.1} parent=31 // pred_fallthru
          _
        %s200 = sand.u32 %s84, 1
        %s201 = scalar_lea.sflag [#allocation3], %s200
        %s202 = sand.u32 %s84, 1
        %s203 = smul.addr %s202, 120
        %s204 = scalar_lea.vmem [#allocation8], %s203
        // Predicated region
        $region41: #{tpu_custom_call.1} parent=31 // pred_check
          %p205 = pneg %p97
        $region42: #{tpu_custom_call.1} parent=31 // pred_check_branch
          %207 = sbr.rel (%p205) target = $region44
        $region43: #{tpu_custom_call.1} parent=31 // pred_region
          %208 = dma.done %s201, 1920
        $region44: #{tpu_custom_call.1} parent=31 // pred_fallthru
          _
        %209 = sfence
        %p210 = pneg %p50
        %p211 = pneg %p47
        %p212 = pneg %p71
        %p213 = pneg %p68
        %s214 = sand.u32 %s84, 1
        %s215 = scalar_lea.sflag [#allocation3], %s214
        %s216 = sand.u32 %s84, 1
        %s217 = smul.addr %s216, 120
        %s218 = scalar_lea.vmem [#allocation8], %s217
        %p219 = pneg %p97
        %p220 = pneg %p94
        %p221 = pneg %p125
        %p222 = pneg %p122
        %s223 = sand.u32 %s112, 1
        %s224 = scalar_lea.sflag [#allocation4], %s223
        %s225 = sand.u32 %s112, 1
        %s226 = smul.addr %s225, 48
        %s227 = scalar_lea.vmem [#allocation9], %s226
        %s228 = smul.u32 2, %s27
        %s229 = smul.u32 %s27, 16
        %s230 = scalar_lea.vmem %s204, %s229 [#allocation8]
        %v231 = vld [vmem:[%s230] sm:$0xff]
        %v232 = vld [vmem:[%s230 + $0x8] sm:$0xff]
        %v233 = vld [vmem:[%s230 + $0x10] sm:$0xff]
        %v234 = vrot.slane %v231, 1
        %v235 = vrot.slane %v232, 1
        %v236 = vrot.slane %v233, 1
        %v237 = vlaneseq
        %v238 = vshrl.u32 %v237, 7
        %vm239 = vcmp.lt.s32.totalorder %v238, 7
        %v240 = vsel %vm239, %v235, %v236
        %v241 = vsel %vm239, %v234, %v235
        %v242 = vrot.slane %v231, 2
        %v243 = vrot.slane %v232, 2
        %v244 = vrot.slane %v233, 2
        %vm245 = vcmp.lt.s32.totalorder %v238, 6
        %v246 = vsel %vm245, %v243, %v244
        %v247 = vsel %vm245, %v242, %v243
        %v248 = vrot.slane %v231, 3
        %v249 = vrot.slane %v232, 3
        %v250 = vrot.slane %v233, 3
        %vm251 = vcmp.lt.s32.totalorder %v238, 5
        %v252 = vsel %vm251, %v249, %v250
        %v253 = vsel %vm251, %v248, %v249
        %v254 = vrot.slane %v231, 4
        %v255 = vrot.slane %v232, 4
        %v256 = vrot.slane %v233, 4
        %vm257 = vcmp.lt.s32.totalorder %v238, 4
        %v258 = vsel %vm257, %v255, %v256
        %v259 = vsel %vm257, %v254, %v255
        %v260 = vrot.slane %v231, 5
        %v261 = vrot.slane %v232, 5
        %v262 = vrot.slane %v233, 5
        %vm263 = vcmp.lt.s32.totalorder %v238, 3
        %v264 = vsel %vm263, %v261, %v262
        %v265 = vsel %vm263, %v260, %v261
        %v266 = vrot.slane %v231, 6
        %v267 = vrot.slane %v232, 6
        %v268 = vrot.slane %v233, 6
        %vm269 = vcmp.lt.s32.totalorder %v238, 2
        %v270 = vsel %vm269, %v267, %v268
        %v271 = vsel %vm269, %v266, %v267
        %s272 = sld [smem:[#allocation2]]
        %v273 = vstv %s272
        %v274 = vmul.f32 %v273, %v231
        %v275 = vmul.f32 %v273, %v232
        %s276 = sld [smem:[#allocation2 + $0x7]]
        %v277 = vstv %s276
        %v278 = vmul.f32 %v277, %v241
        %v279 = vmul.f32 %v277, %v240
        %v280 = vadd.f32 %v274, %v278
        %v281 = vadd.f32 %v275, %v279
        %s282 = sld [smem:[#allocation2 + $0xe]]
        %v283 = vstv %s282
        %v284 = vmul.f32 %v283, %v247
        %v285 = vmul.f32 %v283, %v246
        %v286 = vadd.f32 %v280, %v284
        %v287 = vadd.f32 %v281, %v285
        %s288 = sld [smem:[#allocation2 + $0x15]]
        %v289 = vstv %s288
        %v290 = vmul.f32 %v289, %v253
        %v291 = vmul.f32 %v289, %v252
        %v292 = vadd.f32 %v286, %v290
        %v293 = vadd.f32 %v287, %v291
        %s294 = sld [smem:[#allocation2 + $0x1c]]
        %v295 = vstv %s294
        %v296 = vmul.f32 %v295, %v259
        %v297 = vmul.f32 %v295, %v258
        %v298 = vadd.f32 %v292, %v296
        %v299 = vadd.f32 %v293, %v297
        %s300 = sld [smem:[#allocation2 + $0x23]]
        %v301 = vstv %s300
        %v302 = vmul.f32 %v301, %v265
        %v303 = vmul.f32 %v301, %v264
        %v304 = vadd.f32 %v298, %v302
        %v305 = vadd.f32 %v299, %v303
        %s306 = sld [smem:[#allocation2 + $0x2a]]
        %v307 = vstv %s306
        %v308 = vmul.f32 %v307, %v271
        %v309 = vmul.f32 %v307, %v270
        %v310 = vadd.f32 %v304, %v308
        %v311 = vadd.f32 %v305, %v309
        %s312 = sld [smem:[#allocation2 + $0x1]]
        %v313 = vstv %s312
        %v314 = vmul.f32 %v313, %v231
        %v315 = vmul.f32 %v313, %v232
        %s316 = sld [smem:[#allocation2 + $0x8]]
        %v317 = vstv %s316
        %v318 = vmul.f32 %v317, %v241
        %v319 = vmul.f32 %v317, %v240
        %v320 = vadd.f32 %v314, %v318
        %v321 = vadd.f32 %v315, %v319
        %s322 = sld [smem:[#allocation2 + $0xf]]
        %v323 = vstv %s322
        %v324 = vmul.f32 %v323, %v247
        %v325 = vmul.f32 %v323, %v246
        %v326 = vadd.f32 %v320, %v324
        %v327 = vadd.f32 %v321, %v325
        %s328 = sld [smem:[#allocation2 + $0x16]]
        %v329 = vstv %s328
        %v330 = vmul.f32 %v329, %v253
        %v331 = vmul.f32 %v329, %v252
        %v332 = vadd.f32 %v326, %v330
        %v333 = vadd.f32 %v327, %v331
        %s334 = sld [smem:[#allocation2 + $0x1d]]
        %v335 = vstv %s334
        %v336 = vmul.f32 %v335, %v259
        %v337 = vmul.f32 %v335, %v258
        %v338 = vadd.f32 %v332, %v336
        %v339 = vadd.f32 %v333, %v337
        %s340 = sld [smem:[#allocation2 + $0x24]]
        %v341 = vstv %s340
        %v342 = vmul.f32 %v341, %v265
        %v343 = vmul.f32 %v341, %v264
        %v344 = vadd.f32 %v338, %v342
        %v345 = vadd.f32 %v339, %v343
        %s346 = sld [smem:[#allocation2 + $0x2b]]
        %v347 = vstv %s346
        %v348 = vmul.f32 %v347, %v271
        %v349 = vmul.f32 %v347, %v270
        %v350 = vadd.f32 %v344, %v348
        %v351 = vadd.f32 %v345, %v349
        %352 = vrot.lane.b32.xlu0 %v350, 127
        %v353 = vpop.permute.xlu0 %352
        %354 = vrot.lane.b32.xlu0 %v351, 127
        %v355 = vpop.permute.xlu0 %354
        %v356 = vadd.f32 %v310, %v353
        %v357 = vadd.f32 %v311, %v355
        %s358 = sld [smem:[#allocation2 + $0x2]]
        %v359 = vstv %s358
        %v360 = vmul.f32 %v359, %v231
        %v361 = vmul.f32 %v359, %v232
        %s362 = sld [smem:[#allocation2 + $0x9]]
        %v363 = vstv %s362
        %v364 = vmul.f32 %v363, %v241
        %v365 = vmul.f32 %v363, %v240
        %v366 = vadd.f32 %v360, %v364
        %v367 = vadd.f32 %v361, %v365
        %s368 = sld [smem:[#allocation2 + $0x10]]
        %v369 = vstv %s368
        %v370 = vmul.f32 %v369, %v247
        %v371 = vmul.f32 %v369, %v246
        %v372 = vadd.f32 %v366, %v370
        %v373 = vadd.f32 %v367, %v371
        %s374 = sld [smem:[#allocation2 + $0x17]]
        %v375 = vstv %s374
        %v376 = vmul.f32 %v375, %v253
        %v377 = vmul.f32 %v375, %v252
        %v378 = vadd.f32 %v372, %v376
        %v379 = vadd.f32 %v373, %v377
        %s380 = sld [smem:[#allocation2 + $0x1e]]
        %v381 = vstv %s380
        %v382 = vmul.f32 %v381, %v259
        %v383 = vmul.f32 %v381, %v258
        %v384 = vadd.f32 %v378, %v382
        %v385 = vadd.f32 %v379, %v383
        %s386 = sld [smem:[#allocation2 + $0x25]]
        %v387 = vstv %s386
        %v388 = vmul.f32 %v387, %v265
        %v389 = vmul.f32 %v387, %v264
        %v390 = vadd.f32 %v384, %v388
        %v391 = vadd.f32 %v385, %v389
        %s392 = sld [smem:[#allocation2 + $0x2c]]
        %v393 = vstv %s392
        %v394 = vmul.f32 %v393, %v271
        %v395 = vmul.f32 %v393, %v270
        %v396 = vadd.f32 %v390, %v394
        %v397 = vadd.f32 %v391, %v395
        %398 = vrot.lane.b32.xlu0 %v396, 126
        %v399 = vpop.permute.xlu0 %398
        %400 = vrot.lane.b32.xlu0 %v397, 126
        %v401 = vpop.permute.xlu0 %400
        %v402 = vadd.f32 %v356, %v399
        %v403 = vadd.f32 %v357, %v401
        %s404 = sld [smem:[#allocation2 + $0x3]]
        %v405 = vstv %s404
        %v406 = vmul.f32 %v405, %v231
        %v407 = vmul.f32 %v405, %v232
        %s408 = sld [smem:[#allocation2 + $0xa]]
        %v409 = vstv %s408
        %v410 = vmul.f32 %v409, %v241
        %v411 = vmul.f32 %v409, %v240
        %v412 = vadd.f32 %v406, %v410
        %v413 = vadd.f32 %v407, %v411
        %s414 = sld [smem:[#allocation2 + $0x11]]
        %v415 = vstv %s414
        %v416 = vmul.f32 %v415, %v247
        %v417 = vmul.f32 %v415, %v246
        %v418 = vadd.f32 %v412, %v416
        %v419 = vadd.f32 %v413, %v417
        %s420 = sld [smem:[#allocation2 + $0x18]]
        %v421 = vstv %s420
        %v422 = vmul.f32 %v421, %v253
        %v423 = vmul.f32 %v421, %v252
        %v424 = vadd.f32 %v418, %v422
        %v425 = vadd.f32 %v419, %v423
        %s426 = sld [smem:[#allocation2 + $0x1f]]
        %v427 = vstv %s426
        %v428 = vmul.f32 %v427, %v259
        %v429 = vmul.f32 %v427, %v258
        %v430 = vadd.f32 %v424, %v428
        %v431 = vadd.f32 %v425, %v429
        %s432 = sld [smem:[#allocation2 + $0x26]]
        %v433 = vstv %s432
        %v434 = vmul.f32 %v433, %v265
        %v435 = vmul.f32 %v433, %v264
        %v436 = vadd.f32 %v430, %v434
        %v437 = vadd.f32 %v431, %v435
        %s438 = sld [smem:[#allocation2 + $0x2d]]
        %v439 = vstv %s438
        %v440 = vmul.f32 %v439, %v271
        %v441 = vmul.f32 %v439, %v270
        %v442 = vadd.f32 %v436, %v440
        %v443 = vadd.f32 %v437, %v441
        %444 = vrot.lane.b32.xlu0 %v442, 125
        %v445 = vpop.permute.xlu0 %444
        %446 = vrot.lane.b32.xlu0 %v443, 125
        %v447 = vpop.permute.xlu0 %446
        %v448 = vadd.f32 %v402, %v445
        %v449 = vadd.f32 %v403, %v447
        %s450 = sld [smem:[#allocation2 + $0x4]]
        %v451 = vstv %s450
        %v452 = vmul.f32 %v451, %v231
        %v453 = vmul.f32 %v451, %v232
        %s454 = sld [smem:[#allocation2 + $0xb]]
        %v455 = vstv %s454
        %v456 = vmul.f32 %v455, %v241
        %v457 = vmul.f32 %v455, %v240
        %v458 = vadd.f32 %v452, %v456
        %v459 = vadd.f32 %v453, %v457
        %s460 = sld [smem:[#allocation2 + $0x12]]
        %v461 = vstv %s460
        %v462 = vmul.f32 %v461, %v247
        %v463 = vmul.f32 %v461, %v246
        %v464 = vadd.f32 %v458, %v462
        %v465 = vadd.f32 %v459, %v463
        %s466 = sld [smem:[#allocation2 + $0x19]]
        %v467 = vstv %s466
        %v468 = vmul.f32 %v467, %v253
        %v469 = vmul.f32 %v467, %v252
        %v470 = vadd.f32 %v464, %v468
        %v471 = vadd.f32 %v465, %v469
        %s472 = sld [smem:[#allocation2 + $0x20]]
        %v473 = vstv %s472
        %v474 = vmul.f32 %v473, %v259
        %v475 = vmul.f32 %v473, %v258
        %v476 = vadd.f32 %v470, %v474
        %v477 = vadd.f32 %v471, %v475
        %s478 = sld [smem:[#allocation2 + $0x27]]
        %v479 = vstv %s478
        %v480 = vmul.f32 %v479, %v265
        %v481 = vmul.f32 %v479, %v264
        %v482 = vadd.f32 %v476, %v480
        %v483 = vadd.f32 %v477, %v481
        %s484 = sld [smem:[#allocation2 + $0x2e]]
        %v485 = vstv %s484
        %v486 = vmul.f32 %v485, %v271
        %v487 = vmul.f32 %v485, %v270
        %v488 = vadd.f32 %v482, %v486
        %v489 = vadd.f32 %v483, %v487
        %490 = vrot.lane.b32.xlu0 %v488, 124
        %v491 = vpop.permute.xlu0 %490
        %492 = vrot.lane.b32.xlu0 %v489, 124
        %v493 = vpop.permute.xlu0 %492
        %v494 = vadd.f32 %v448, %v491
        %v495 = vadd.f32 %v449, %v493
        %s496 = sld [smem:[#allocation2 + $0x5]]
        %v497 = vstv %s496
        %v498 = vmul.f32 %v497, %v231
        %v499 = vmul.f32 %v497, %v232
        %s500 = sld [smem:[#allocation2 + $0xc]]
        %v501 = vstv %s500
        %v502 = vmul.f32 %v501, %v241
        %v503 = vmul.f32 %v501, %v240
        %v504 = vadd.f32 %v498, %v502
        %v505 = vadd.f32 %v499, %v503
        %s506 = sld [smem:[#allocation2 + $0x13]]
        %v507 = vstv %s506
        %v508 = vmul.f32 %v507, %v247
        %v509 = vmul.f32 %v507, %v246
        %v510 = vadd.f32 %v504, %v508
        %v511 = vadd.f32 %v505, %v509
        %s512 = sld [smem:[#allocation2 + $0x1a]]
        %v513 = vstv %s512
        %v514 = vmul.f32 %v513, %v253
        %v515 = vmul.f32 %v513, %v252
        %v516 = vadd.f32 %v510, %v514
        %v517 = vadd.f32 %v511, %v515
        %s518 = sld [smem:[#allocation2 + $0x21]]
        %v519 = vstv %s518
        %v520 = vmul.f32 %v519, %v259
        %v521 = vmul.f32 %v519, %v258
        %v522 = vadd.f32 %v516, %v520
        %v523 = vadd.f32 %v517, %v521
        %s524 = sld [smem:[#allocation2 + $0x28]]
        %v525 = vstv %s524
        %v526 = vmul.f32 %v525, %v265
        %v527 = vmul.f32 %v525, %v264
        %v528 = vadd.f32 %v522, %v526
        %v529 = vadd.f32 %v523, %v527
        %s530 = sld [smem:[#allocation2 + $0x2f]]
        %v531 = vstv %s530
        %v532 = vmul.f32 %v531, %v271
        %v533 = vmul.f32 %v531, %v270
        %v534 = vadd.f32 %v528, %v532
        %v535 = vadd.f32 %v529, %v533
        %536 = vrot.lane.b32.xlu0 %v534, 123
        %v537 = vpop.permute.xlu0 %536
        %538 = vrot.lane.b32.xlu0 %v535, 123
        %v539 = vpop.permute.xlu0 %538
        %v540 = vadd.f32 %v494, %v537
        %v541 = vadd.f32 %v495, %v539
        %s542 = sld [smem:[#allocation2 + $0x6]]
        %v543 = vstv %s542
        %v544 = vmul.f32 %v543, %v231
        %v545 = vmul.f32 %v543, %v232
        %s546 = sld [smem:[#allocation2 + $0xd]]
        %v547 = vstv %s546
        %v548 = vmul.f32 %v547, %v241
        %v549 = vmul.f32 %v547, %v240
        %v550 = vadd.f32 %v544, %v548
        %v551 = vadd.f32 %v545, %v549
        %s552 = sld [smem:[#allocation2 + $0x14]]
        %v553 = vstv %s552
        %v554 = vmul.f32 %v553, %v247
        %v555 = vmul.f32 %v553, %v246
        %v556 = vadd.f32 %v550, %v554
        %v557 = vadd.f32 %v551, %v555
        %s558 = sld [smem:[#allocation2 + $0x1b]]
        %v559 = vstv %s558
        %v560 = vmul.f32 %v559, %v253
        %v561 = vmul.f32 %v559, %v252
        %v562 = vadd.f32 %v556, %v560
        %v563 = vadd.f32 %v557, %v561
        %s564 = sld [smem:[#allocation2 + $0x22]]
        %v565 = vstv %s564
        %v566 = vmul.f32 %v565, %v259
        %v567 = vmul.f32 %v565, %v258
        %v568 = vadd.f32 %v562, %v566
        %v569 = vadd.f32 %v563, %v567
        %s570 = sld [smem:[#allocation2 + $0x29]]
        %v571 = vstv %s570
        %v572 = vmul.f32 %v571, %v265
        %v573 = vmul.f32 %v571, %v264
        %v574 = vadd.f32 %v568, %v572
        %v575 = vadd.f32 %v569, %v573
        %s576 = sld [smem:[#allocation2 + $0x30]]
        %v577 = vstv %s576
        %v578 = vmul.f32 %v577, %v271
        %v579 = vmul.f32 %v577, %v270
        %v580 = vadd.f32 %v574, %v578
        %v581 = vadd.f32 %v575, %v579
        %582 = vrot.lane.b32.xlu0 %v580, 122
        %v583 = vpop.permute.xlu0 %582
        %584 = vrot.lane.b32.xlu0 %v581, 122
        %v585 = vpop.permute.xlu0 %584
        %v586 = vadd.f32 %v540, %v583
        %v587 = vadd.f32 %v541, %v585
        %s588 = sld [smem:[#allocation2 + $0x93]]
        %v589 = vstv %s588
        %v590 = vmul.f32 %v589, %v231
        %v591 = vmul.f32 %v589, %v232
        %s592 = sld [smem:[#allocation2 + $0x9a]]
        %v593 = vstv %s592
        %v594 = vmul.f32 %v593, %v241
        %v595 = vmul.f32 %v593, %v240
        %v596 = vadd.f32 %v590, %v594
        %v597 = vadd.f32 %v591, %v595
        %s598 = sld [smem:[#allocation2 + $0xa1]]
        %v599 = vstv %s598
        %v600 = vmul.f32 %v599, %v247
        %v601 = vmul.f32 %v599, %v246
        %v602 = vadd.f32 %v596, %v600
        %v603 = vadd.f32 %v597, %v601
        %s604 = sld [smem:[#allocation2 + $0xa8]]
        %v605 = vstv %s604
        %v606 = vmul.f32 %v605, %v253
        %v607 = vmul.f32 %v605, %v252
        %v608 = vadd.f32 %v602, %v606
        %v609 = vadd.f32 %v603, %v607
        %s610 = sld [smem:[#allocation2 + $0xaf]]
        %v611 = vstv %s610
        %v612 = vmul.f32 %v611, %v259
        %v613 = vmul.f32 %v611, %v258
        %v614 = vadd.f32 %v608, %v612
        %v615 = vadd.f32 %v609, %v613
        %s616 = sld [smem:[#allocation2 + $0xb6]]
        %v617 = vstv %s616
        %v618 = vmul.f32 %v617, %v265
        %v619 = vmul.f32 %v617, %v264
        %v620 = vadd.f32 %v614, %v618
        %v621 = vadd.f32 %v615, %v619
        %s622 = sld [smem:[#allocation2 + $0xbd]]
        %v623 = vstv %s622
        %v624 = vmul.f32 %v623, %v271
        %v625 = vmul.f32 %v623, %v270
        %v626 = vadd.f32 %v620, %v624
        %v627 = vadd.f32 %v621, %v625
        %s628 = sld [smem:[#allocation2 + $0x94]]
        %v629 = vstv %s628
        %v630 = vmul.f32 %v629, %v231
        %v631 = vmul.f32 %v629, %v232
        %s632 = sld [smem:[#allocation2 + $0x9b]]
        %v633 = vstv %s632
        %v634 = vmul.f32 %v633, %v241
        %v635 = vmul.f32 %v633, %v240
        %v636 = vadd.f32 %v630, %v634
        %v637 = vadd.f32 %v631, %v635
        %s638 = sld [smem:[#allocation2 + $0xa2]]
        %v639 = vstv %s638
        %v640 = vmul.f32 %v639, %v247
        %v641 = vmul.f32 %v639, %v246
        %v642 = vadd.f32 %v636, %v640
        %v643 = vadd.f32 %v637, %v641
        %s644 = sld [smem:[#allocation2 + $0xa9]]
        %v645 = vstv %s644
        %v646 = vmul.f32 %v645, %v253
        %v647 = vmul.f32 %v645, %v252
        %v648 = vadd.f32 %v642, %v646
        %v649 = vadd.f32 %v643, %v647
        %s650 = sld [smem:[#allocation2 + $0xb0]]
        %v651 = vstv %s650
        %v652 = vmul.f32 %v651, %v259
        %v653 = vmul.f32 %v651, %v258
        %v654 = vadd.f32 %v648, %v652
        %v655 = vadd.f32 %v649, %v653
        %s656 = sld [smem:[#allocation2 + $0xb7]]
        %v657 = vstv %s656
        %v658 = vmul.f32 %v657, %v265
        %v659 = vmul.f32 %v657, %v264
        %v660 = vadd.f32 %v654, %v658
        %v661 = vadd.f32 %v655, %v659
        %s662 = sld [smem:[#allocation2 + $0xbe]]
        %v663 = vstv %s662
        %v664 = vmul.f32 %v663, %v271
        %v665 = vmul.f32 %v663, %v270
        %v666 = vadd.f32 %v660, %v664
        %v667 = vadd.f32 %v661, %v665
        %668 = vrot.lane.b32.xlu0 %v666, 127
        %v669 = vpop.permute.xlu0 %668
        %670 = vrot.lane.b32.xlu0 %v667, 127
        %v671 = vpop.permute.xlu0 %670
        %v672 = vadd.f32 %v626, %v669
        %v673 = vadd.f32 %v627, %v671
        %s674 = sld [smem:[#allocation2 + $0x95]]
        %v675 = vstv %s674
        %v676 = vmul.f32 %v675, %v231
        %v677 = vmul.f32 %v675, %v232
        %s678 = sld [smem:[#allocation2 + $0x9c]]
        %v679 = vstv %s678
        %v680 = vmul.f32 %v679, %v241
        %v681 = vmul.f32 %v679, %v240
        %v682 = vadd.f32 %v676, %v680
        %v683 = vadd.f32 %v677, %v681
        %s684 = sld [smem:[#allocation2 + $0xa3]]
        %v685 = vstv %s684
        %v686 = vmul.f32 %v685, %v247
        %v687 = vmul.f32 %v685, %v246
        %v688 = vadd.f32 %v682, %v686
        %v689 = vadd.f32 %v683, %v687
        %s690 = sld [smem:[#allocation2 + $0xaa]]
        %v691 = vstv %s690
        %v692 = vmul.f32 %v691, %v253
        %v693 = vmul.f32 %v691, %v252
        %v694 = vadd.f32 %v688, %v692
        %v695 = vadd.f32 %v689, %v693
        %s696 = sld [smem:[#allocation2 + $0xb1]]
        %v697 = vstv %s696
        %v698 = vmul.f32 %v697, %v259
        %v699 = vmul.f32 %v697, %v258
        %v700 = vadd.f32 %v694, %v698
        %v701 = vadd.f32 %v695, %v699
        %s702 = sld [smem:[#allocation2 + $0xb8]]
        %v703 = vstv %s702
        %v704 = vmul.f32 %v703, %v265
        %v705 = vmul.f32 %v703, %v264
        %v706 = vadd.f32 %v700, %v704
        %v707 = vadd.f32 %v701, %v705
        %s708 = sld [smem:[#allocation2 + $0xbf]]
        %v709 = vstv %s708
        %v710 = vmul.f32 %v709, %v271
        %v711 = vmul.f32 %v709, %v270
        %v712 = vadd.f32 %v706, %v710
        %v713 = vadd.f32 %v707, %v711
        %714 = vrot.lane.b32.xlu0 %v712, 126
        %v715 = vpop.permute.xlu0 %714
        %716 = vrot.lane.b32.xlu0 %v713, 126
        %v717 = vpop.permute.xlu0 %716
        %v718 = vadd.f32 %v672, %v715
        %v719 = vadd.f32 %v673, %v717
        %s720 = sld [smem:[#allocation2 + $0x96]]
        %v721 = vstv %s720
        %v722 = vmul.f32 %v721, %v231
        %v723 = vmul.f32 %v721, %v232
        %s724 = sld [smem:[#allocation2 + $0x9d]]
        %v725 = vstv %s724
        %v726 = vmul.f32 %v725, %v241
        %v727 = vmul.f32 %v725, %v240
        %v728 = vadd.f32 %v722, %v726
        %v729 = vadd.f32 %v723, %v727
        %s730 = sld [smem:[#allocation2 + $0xa4]]
        %v731 = vstv %s730
        %v732 = vmul.f32 %v731, %v247
        %v733 = vmul.f32 %v731, %v246
        %v734 = vadd.f32 %v728, %v732
        %v735 = vadd.f32 %v729, %v733
        %s736 = sld [smem:[#allocation2 + $0xab]]
        %v737 = vstv %s736
        %v738 = vmul.f32 %v737, %v253
        %v739 = vmul.f32 %v737, %v252
        %v740 = vadd.f32 %v734, %v738
        %v741 = vadd.f32 %v735, %v739
        %s742 = sld [smem:[#allocation2 + $0xb2]]
        %v743 = vstv %s742
        %v744 = vmul.f32 %v743, %v259
        %v745 = vmul.f32 %v743, %v258
        %v746 = vadd.f32 %v740, %v744
        %v747 = vadd.f32 %v741, %v745
        %s748 = sld [smem:[#allocation2 + $0xb9]]
        %v749 = vstv %s748
        %v750 = vmul.f32 %v749, %v265
        %v751 = vmul.f32 %v749, %v264
        %v752 = vadd.f32 %v746, %v750
        %v753 = vadd.f32 %v747, %v751
        %s754 = sld [smem:[#allocation2 + $0xc0]]
        %v755 = vstv %s754
        %v756 = vmul.f32 %v755, %v271
        %v757 = vmul.f32 %v755, %v270
        %v758 = vadd.f32 %v752, %v756
        %v759 = vadd.f32 %v753, %v757
        %760 = vrot.lane.b32.xlu0 %v758, 125
        %v761 = vpop.permute.xlu0 %760
        %762 = vrot.lane.b32.xlu0 %v759, 125
        %v763 = vpop.permute.xlu0 %762
        %v764 = vadd.f32 %v718, %v761
        %v765 = vadd.f32 %v719, %v763
        %s766 = sld [smem:[#allocation2 + $0x97]]
        %v767 = vstv %s766
        %v768 = vmul.f32 %v767, %v231
        %v769 = vmul.f32 %v767, %v232
        %s770 = sld [smem:[#allocation2 + $0x9e]]
        %v771 = vstv %s770
        %v772 = vmul.f32 %v771, %v241
        %v773 = vmul.f32 %v771, %v240
        %v774 = vadd.f32 %v768, %v772
        %v775 = vadd.f32 %v769, %v773
        %s776 = sld [smem:[#allocation2 + $0xa5]]
        %v777 = vstv %s776
        %v778 = vmul.f32 %v777, %v247
        %v779 = vmul.f32 %v777, %v246
        %v780 = vadd.f32 %v774, %v778
        %v781 = vadd.f32 %v775, %v779
        %s782 = sld [smem:[#allocation2 + $0xac]]
        %v783 = vstv %s782
        %v784 = vmul.f32 %v783, %v253
        %v785 = vmul.f32 %v783, %v252
        %v786 = vadd.f32 %v780, %v784
        %v787 = vadd.f32 %v781, %v785
        %s788 = sld [smem:[#allocation2 + $0xb3]]
        %v789 = vstv %s788
        %v790 = vmul.f32 %v789, %v259
        %v791 = vmul.f32 %v789, %v258
        %v792 = vadd.f32 %v786, %v790
        %v793 = vadd.f32 %v787, %v791
        %s794 = sld [smem:[#allocation2 + $0xba]]
        %v795 = vstv %s794
        %v796 = vmul.f32 %v795, %v265
        %v797 = vmul.f32 %v795, %v264
        %v798 = vadd.f32 %v792, %v796
        %v799 = vadd.f32 %v793, %v797
        %s800 = sld [smem:[#allocation2 + $0xc1]]
        %v801 = vstv %s800
        %v802 = vmul.f32 %v801, %v271
        %v803 = vmul.f32 %v801, %v270
        %v804 = vadd.f32 %v798, %v802
        %v805 = vadd.f32 %v799, %v803
        %806 = vrot.lane.b32.xlu0 %v804, 124
        %v807 = vpop.permute.xlu0 %806
        %808 = vrot.lane.b32.xlu0 %v805, 124
        %v809 = vpop.permute.xlu0 %808
        %v810 = vadd.f32 %v764, %v807
        %v811 = vadd.f32 %v765, %v809
        %s812 = sld [smem:[#allocation2 + $0x98]]
        %v813 = vstv %s812
        %v814 = vmul.f32 %v813, %v231
        %v815 = vmul.f32 %v813, %v232
        %s816 = sld [smem:[#allocation2 + $0x9f]]
        %v817 = vstv %s816
        %v818 = vmul.f32 %v817, %v241
        %v819 = vmul.f32 %v817, %v240
        %v820 = vadd.f32 %v814, %v818
        %v821 = vadd.f32 %v815, %v819
        %s822 = sld [smem:[#allocation2 + $0xa6]]
        %v823 = vstv %s822
        %v824 = vmul.f32 %v823, %v247
        %v825 = vmul.f32 %v823, %v246
        %v826 = vadd.f32 %v820, %v824
        %v827 = vadd.f32 %v821, %v825
        %s828 = sld [smem:[#allocation2 + $0xad]]
        %v829 = vstv %s828
        %v830 = vmul.f32 %v829, %v253
        %v831 = vmul.f32 %v829, %v252
        %v832 = vadd.f32 %v826, %v830
        %v833 = vadd.f32 %v827, %v831
        %s834 = sld [smem:[#allocation2 + $0xb4]]
        %v835 = vstv %s834
        %v836 = vmul.f32 %v835, %v259
        %v837 = vmul.f32 %v835, %v258
        %v838 = vadd.f32 %v832, %v836
        %v839 = vadd.f32 %v833, %v837
        %s840 = sld [smem:[#allocation2 + $0xbb]]
        %v841 = vstv %s840
        %v842 = vmul.f32 %v841, %v265
        %v843 = vmul.f32 %v841, %v264
        %v844 = vadd.f32 %v838, %v842
        %v845 = vadd.f32 %v839, %v843
        %s846 = sld [smem:[#allocation2 + $0xc2]]
        %v847 = vstv %s846
        %v848 = vmul.f32 %v847, %v271
        %v849 = vmul.f32 %v847, %v270
        %v850 = vadd.f32 %v844, %v848
        %v851 = vadd.f32 %v845, %v849
        %852 = vrot.lane.b32.xlu0 %v850, 123
        %v853 = vpop.permute.xlu0 %852
        %854 = vrot.lane.b32.xlu0 %v851, 123
        %v855 = vpop.permute.xlu0 %854
        %v856 = vadd.f32 %v810, %v853
        %v857 = vadd.f32 %v811, %v855
        %s858 = sld [smem:[#allocation2 + $0x99]]
        %v859 = vstv %s858
        %v860 = vmul.f32 %v859, %v231
        %v861 = vmul.f32 %v859, %v232
        %s862 = sld [smem:[#allocation2 + $0xa0]]
        %v863 = vstv %s862
        %v864 = vmul.f32 %v863, %v241
        %v865 = vmul.f32 %v863, %v240
        %v866 = vadd.f32 %v860, %v864
        %v867 = vadd.f32 %v861, %v865
        %s868 = sld [smem:[#allocation2 + $0xa7]]
        %v869 = vstv %s868
        %v870 = vmul.f32 %v869, %v247
        %v871 = vmul.f32 %v869, %v246
        %v872 = vadd.f32 %v866, %v870
        %v873 = vadd.f32 %v867, %v871
        %s874 = sld [smem:[#allocation2 + $0xae]]
        %v875 = vstv %s874
        %v876 = vmul.f32 %v875, %v253
        %v877 = vmul.f32 %v875, %v252
        %v878 = vadd.f32 %v872, %v876
        %v879 = vadd.f32 %v873, %v877
        %s880 = sld [smem:[#allocation2 + $0xb5]]
        %v881 = vstv %s880
        %v882 = vmul.f32 %v881, %v259
        %v883 = vmul.f32 %v881, %v258
        %v884 = vadd.f32 %v878, %v882
        %v885 = vadd.f32 %v879, %v883
        %s886 = sld [smem:[#allocation2 + $0xbc]]
        %v887 = vstv %s886
        %v888 = vmul.f32 %v887, %v265
        %v889 = vmul.f32 %v887, %v264
        %v890 = vadd.f32 %v884, %v888
        %v891 = vadd.f32 %v885, %v889
        %s892 = sld [smem:[#allocation2 + $0xc3]]
        %v893 = vstv %s892
        %v894 = vmul.f32 %v893, %v271
        %v895 = vmul.f32 %v893, %v270
        %v896 = vadd.f32 %v890, %v894
        %v897 = vadd.f32 %v891, %v895
        %898 = vrot.lane.b32.xlu0 %v896, 122
        %v899 = vpop.permute.xlu0 %898
        %900 = vrot.lane.b32.xlu0 %v897, 122
        %v901 = vpop.permute.xlu0 %900
        %v902 = vadd.f32 %v856, %v899
        %v903 = vadd.f32 %v857, %v901
        %s904 = sld [smem:[#allocation2 + $0x126]]
        %v905 = vstv %s904
        %v906 = vmul.f32 %v905, %v231
        %v907 = vmul.f32 %v905, %v232
        %s908 = sld [smem:[#allocation2 + $0x12d]]
        %v909 = vstv %s908
        %v910 = vmul.f32 %v909, %v241
        %v911 = vmul.f32 %v909, %v240
        %v912 = vadd.f32 %v906, %v910
        %v913 = vadd.f32 %v907, %v911
        %s914 = sld [smem:[#allocation2 + $0x134]]
        %v915 = vstv %s914
        %v916 = vmul.f32 %v915, %v247
        %v917 = vmul.f32 %v915, %v246
        %v918 = vadd.f32 %v912, %v916
        %v919 = vadd.f32 %v913, %v917
        %s920 = sld [smem:[#allocation2 + $0x13b]]
        %v921 = vstv %s920
        %v922 = vmul.f32 %v921, %v253
        %v923 = vmul.f32 %v921, %v252
        %v924 = vadd.f32 %v918, %v922
        %v925 = vadd.f32 %v919, %v923
        %s926 = sld [smem:[#allocation2 + $0x142]]
        %v927 = vstv %s926
        %v928 = vmul.f32 %v927, %v259
        %v929 = vmul.f32 %v927, %v258
        %v930 = vadd.f32 %v924, %v928
        %v931 = vadd.f32 %v925, %v929
        %s932 = sld [smem:[#allocation2 + $0x149]]
        %v933 = vstv %s932
        %v934 = vmul.f32 %v933, %v265
        %v935 = vmul.f32 %v933, %v264
        %v936 = vadd.f32 %v930, %v934
        %v937 = vadd.f32 %v931, %v935
        %s938 = sld [smem:[#allocation2 + $0x150]]
        %v939 = vstv %s938
        %v940 = vmul.f32 %v939, %v271
        %v941 = vmul.f32 %v939, %v270
        %v942 = vadd.f32 %v936, %v940
        %v943 = vadd.f32 %v937, %v941
        %s944 = sld [smem:[#allocation2 + $0x127]]
        %v945 = vstv %s944
        %v946 = vmul.f32 %v945, %v231
        %v947 = vmul.f32 %v945, %v232
        %s948 = sld [smem:[#allocation2 + $0x12e]]
        %v949 = vstv %s948
        %v950 = vmul.f32 %v949, %v241
        %v951 = vmul.f32 %v949, %v240
        %v952 = vadd.f32 %v946, %v950
        %v953 = vadd.f32 %v947, %v951
        %s954 = sld [smem:[#allocation2 + $0x135]]
        %v955 = vstv %s954
        %v956 = vmul.f32 %v955, %v247
        %v957 = vmul.f32 %v955, %v246
        %v958 = vadd.f32 %v952, %v956
        %v959 = vadd.f32 %v953, %v957
        %s960 = sld [smem:[#allocation2 + $0x13c]]
        %v961 = vstv %s960
        %v962 = vmul.f32 %v961, %v253
        %v963 = vmul.f32 %v961, %v252
        %v964 = vadd.f32 %v958, %v962
        %v965 = vadd.f32 %v959, %v963
        %s966 = sld [smem:[#allocation2 + $0x143]]
        %v967 = vstv %s966
        %v968 = vmul.f32 %v967, %v259
        %v969 = vmul.f32 %v967, %v258
        %v970 = vadd.f32 %v964, %v968
        %v971 = vadd.f32 %v965, %v969
        %s972 = sld [smem:[#allocation2 + $0x14a]]
        %v973 = vstv %s972
        %v974 = vmul.f32 %v973, %v265
        %v975 = vmul.f32 %v973, %v264
        %v976 = vadd.f32 %v970, %v974
        %v977 = vadd.f32 %v971, %v975
        %s978 = sld [smem:[#allocation2 + $0x151]]
        %v979 = vstv %s978
        %v980 = vmul.f32 %v979, %v271
        %v981 = vmul.f32 %v979, %v270
        %v982 = vadd.f32 %v976, %v980
        %v983 = vadd.f32 %v977, %v981
        %984 = vrot.lane.b32.xlu0 %v982, 127
        %v985 = vpop.permute.xlu0 %984
        %986 = vrot.lane.b32.xlu0 %v983, 127
        %v987 = vpop.permute.xlu0 %986
        %v988 = vadd.f32 %v942, %v985
        %v989 = vadd.f32 %v943, %v987
        %s990 = sld [smem:[#allocation2 + $0x128]]
        %v991 = vstv %s990
        %v992 = vmul.f32 %v991, %v231
        %v993 = vmul.f32 %v991, %v232
        %s994 = sld [smem:[#allocation2 + $0x12f]]
        %v995 = vstv %s994
        %v996 = vmul.f32 %v995, %v241
        %v997 = vmul.f32 %v995, %v240
        %v998 = vadd.f32 %v992, %v996
        %v999 = vadd.f32 %v993, %v997
        %s1000 = sld [smem:[#allocation2 + $0x136]]
        %v1001 = vstv %s1000
        %v1002 = vmul.f32 %v1001, %v247
        %v1003 = vmul.f32 %v1001, %v246
        %v1004 = vadd.f32 %v998, %v1002
        %v1005 = vadd.f32 %v999, %v1003
        %s1006 = sld [smem:[#allocation2 + $0x13d]]
        %v1007 = vstv %s1006
        %v1008 = vmul.f32 %v1007, %v253
        %v1009 = vmul.f32 %v1007, %v252
        %v1010 = vadd.f32 %v1004, %v1008
        %v1011 = vadd.f32 %v1005, %v1009
        %s1012 = sld [smem:[#allocation2 + $0x144]]
        %v1013 = vstv %s1012
        %v1014 = vmul.f32 %v1013, %v259
        %v1015 = vmul.f32 %v1013, %v258
        %v1016 = vadd.f32 %v1010, %v1014
        %v1017 = vadd.f32 %v1011, %v1015
        %s1018 = sld [smem:[#allocation2 + $0x14b]]
        %v1019 = vstv %s1018
        %v1020 = vmul.f32 %v1019, %v265
        %v1021 = vmul.f32 %v1019, %v264
        %v1022 = vadd.f32 %v1016, %v1020
        %v1023 = vadd.f32 %v1017, %v1021
        %s1024 = sld [smem:[#allocation2 + $0x152]]
        %v1025 = vstv %s1024
        %v1026 = vmul.f32 %v1025, %v271
        %v1027 = vmul.f32 %v1025, %v270
        %v1028 = vadd.f32 %v1022, %v1026
        %v1029 = vadd.f32 %v1023, %v1027
        %1030 = vrot.lane.b32.xlu0 %v1028, 126
        %v1031 = vpop.permute.xlu0 %1030
        %1032 = vrot.lane.b32.xlu0 %v1029, 126
        %v1033 = vpop.permute.xlu0 %1032
        %v1034 = vadd.f32 %v988, %v1031
        %v1035 = vadd.f32 %v989, %v1033
        %s1036 = sld [smem:[#allocation2 + $0x129]]
        %v1037 = vstv %s1036
        %v1038 = vmul.f32 %v1037, %v231
        %v1039 = vmul.f32 %v1037, %v232
        %s1040 = sld [smem:[#allocation2 + $0x130]]
        %v1041 = vstv %s1040
        %v1042 = vmul.f32 %v1041, %v241
        %v1043 = vmul.f32 %v1041, %v240
        %v1044 = vadd.f32 %v1038, %v1042
        %v1045 = vadd.f32 %v1039, %v1043
        %s1046 = sld [smem:[#allocation2 + $0x137]]
        %v1047 = vstv %s1046
        %v1048 = vmul.f32 %v1047, %v247
        %v1049 = vmul.f32 %v1047, %v246
        %v1050 = vadd.f32 %v1044, %v1048
        %v1051 = vadd.f32 %v1045, %v1049
        %s1052 = sld [smem:[#allocation2 + $0x13e]]
        %v1053 = vstv %s1052
        %v1054 = vmul.f32 %v1053, %v253
        %v1055 = vmul.f32 %v1053, %v252
        %v1056 = vadd.f32 %v1050, %v1054
        %v1057 = vadd.f32 %v1051, %v1055
        %s1058 = sld [smem:[#allocation2 + $0x145]]
        %v1059 = vstv %s1058
        %v1060 = vmul.f32 %v1059, %v259
        %v1061 = vmul.f32 %v1059, %v258
        %v1062 = vadd.f32 %v1056, %v1060
        %v1063 = vadd.f32 %v1057, %v1061
        %s1064 = sld [smem:[#allocation2 + $0x14c]]
        %v1065 = vstv %s1064
        %v1066 = vmul.f32 %v1065, %v265
        %v1067 = vmul.f32 %v1065, %v264
        %v1068 = vadd.f32 %v1062, %v1066
        %v1069 = vadd.f32 %v1063, %v1067
        %s1070 = sld [smem:[#allocation2 + $0x153]]
        %v1071 = vstv %s1070
        %v1072 = vmul.f32 %v1071, %v271
        %v1073 = vmul.f32 %v1071, %v270
        %v1074 = vadd.f32 %v1068, %v1072
        %v1075 = vadd.f32 %v1069, %v1073
        %1076 = vrot.lane.b32.xlu0 %v1074, 125
        %v1077 = vpop.permute.xlu0 %1076
        %1078 = vrot.lane.b32.xlu0 %v1075, 125
        %v1079 = vpop.permute.xlu0 %1078
        %v1080 = vadd.f32 %v1034, %v1077
        %v1081 = vadd.f32 %v1035, %v1079
        %s1082 = sld [smem:[#allocation2 + $0x12a]]
        %v1083 = vstv %s1082
        %v1084 = vmul.f32 %v1083, %v231
        %v1085 = vmul.f32 %v1083, %v232
        %s1086 = sld [smem:[#allocation2 + $0x131]]
        %v1087 = vstv %s1086
        %v1088 = vmul.f32 %v1087, %v241
        %v1089 = vmul.f32 %v1087, %v240
        %v1090 = vadd.f32 %v1084, %v1088
        %v1091 = vadd.f32 %v1085, %v1089
        %s1092 = sld [smem:[#allocation2 + $0x138]]
        %v1093 = vstv %s1092
        %v1094 = vmul.f32 %v1093, %v247
        %v1095 = vmul.f32 %v1093, %v246
        %v1096 = vadd.f32 %v1090, %v1094
        %v1097 = vadd.f32 %v1091, %v1095
        %s1098 = sld [smem:[#allocation2 + $0x13f]]
        %v1099 = vstv %s1098
        %v1100 = vmul.f32 %v1099, %v253
        %v1101 = vmul.f32 %v1099, %v252
        %v1102 = vadd.f32 %v1096, %v1100
        %v1103 = vadd.f32 %v1097, %v1101
        %s1104 = sld [smem:[#allocation2 + $0x146]]
        %v1105 = vstv %s1104
        %v1106 = vmul.f32 %v1105, %v259
        %v1107 = vmul.f32 %v1105, %v258
        %v1108 = vadd.f32 %v1102, %v1106
        %v1109 = vadd.f32 %v1103, %v1107
        %s1110 = sld [smem:[#allocation2 + $0x14d]]
        %v1111 = vstv %s1110
        %v1112 = vmul.f32 %v1111, %v265
        %v1113 = vmul.f32 %v1111, %v264
        %v1114 = vadd.f32 %v1108, %v1112
        %v1115 = vadd.f32 %v1109, %v1113
        %s1116 = sld [smem:[#allocation2 + $0x154]]
        %v1117 = vstv %s1116
        %v1118 = vmul.f32 %v1117, %v271
        %v1119 = vmul.f32 %v1117, %v270
        %v1120 = vadd.f32 %v1114, %v1118
        %v1121 = vadd.f32 %v1115, %v1119
        %1122 = vrot.lane.b32.xlu0 %v1120, 124
        %v1123 = vpop.permute.xlu0 %1122
        %1124 = vrot.lane.b32.xlu0 %v1121, 124
        %v1125 = vpop.permute.xlu0 %1124
        %v1126 = vadd.f32 %v1080, %v1123
        %v1127 = vadd.f32 %v1081, %v1125
        %s1128 = sld [smem:[#allocation2 + $0x12b]]
        %v1129 = vstv %s1128
        %v1130 = vmul.f32 %v1129, %v231
        %v1131 = vmul.f32 %v1129, %v232
        %s1132 = sld [smem:[#allocation2 + $0x132]]
        %v1133 = vstv %s1132
        %v1134 = vmul.f32 %v1133, %v241
        %v1135 = vmul.f32 %v1133, %v240
        %v1136 = vadd.f32 %v1130, %v1134
        %v1137 = vadd.f32 %v1131, %v1135
        %s1138 = sld [smem:[#allocation2 + $0x139]]
        %v1139 = vstv %s1138
        %v1140 = vmul.f32 %v1139, %v247
        %v1141 = vmul.f32 %v1139, %v246
        %v1142 = vadd.f32 %v1136, %v1140
        %v1143 = vadd.f32 %v1137, %v1141
        %s1144 = sld [smem:[#allocation2 + $0x140]]
        %v1145 = vstv %s1144
        %v1146 = vmul.f32 %v1145, %v253
        %v1147 = vmul.f32 %v1145, %v252
        %v1148 = vadd.f32 %v1142, %v1146
        %v1149 = vadd.f32 %v1143, %v1147
        %s1150 = sld [smem:[#allocation2 + $0x147]]
        %v1151 = vstv %s1150
        %v1152 = vmul.f32 %v1151, %v259
        %v1153 = vmul.f32 %v1151, %v258
        %v1154 = vadd.f32 %v1148, %v1152
        %v1155 = vadd.f32 %v1149, %v1153
        %s1156 = sld [smem:[#allocation2 + $0x14e]]
        %v1157 = vstv %s1156
        %v1158 = vmul.f32 %v1157, %v265
        %v1159 = vmul.f32 %v1157, %v264
        %v1160 = vadd.f32 %v1154, %v1158
        %v1161 = vadd.f32 %v1155, %v1159
        %s1162 = sld [smem:[#allocation2 + $0x155]]
        %v1163 = vstv %s1162
        %v1164 = vmul.f32 %v1163, %v271
        %v1165 = vmul.f32 %v1163, %v270
        %v1166 = vadd.f32 %v1160, %v1164
        %v1167 = vadd.f32 %v1161, %v1165
        %1168 = vrot.lane.b32.xlu0 %v1166, 123
        %v1169 = vpop.permute.xlu0 %1168
        %1170 = vrot.lane.b32.xlu0 %v1167, 123
        %v1171 = vpop.permute.xlu0 %1170
        %v1172 = vadd.f32 %v1126, %v1169
        %v1173 = vadd.f32 %v1127, %v1171
        %s1174 = sld [smem:[#allocation2 + $0x12c]]
        %v1175 = vstv %s1174
        %v1176 = vmul.f32 %v1175, %v231
        %v1177 = vmul.f32 %v1175, %v232
        %s1178 = sld [smem:[#allocation2 + $0x133]]
        %v1179 = vstv %s1178
        %v1180 = vmul.f32 %v1179, %v241
        %v1181 = vmul.f32 %v1179, %v240
        %v1182 = vadd.f32 %v1176, %v1180
        %v1183 = vadd.f32 %v1177, %v1181
        %s1184 = sld [smem:[#allocation2 + $0x13a]]
        %v1185 = vstv %s1184
        %v1186 = vmul.f32 %v1185, %v247
        %v1187 = vmul.f32 %v1185, %v246
        %v1188 = vadd.f32 %v1182, %v1186
        %v1189 = vadd.f32 %v1183, %v1187
        %s1190 = sld [smem:[#allocation2 + $0x141]]
        %v1191 = vstv %s1190
        %v1192 = vmul.f32 %v1191, %v253
        %v1193 = vmul.f32 %v1191, %v252
        %v1194 = vadd.f32 %v1188, %v1192
        %v1195 = vadd.f32 %v1189, %v1193
        %s1196 = sld [smem:[#allocation2 + $0x148]]
        %v1197 = vstv %s1196
        %v1198 = vmul.f32 %v1197, %v259
        %v1199 = vmul.f32 %v1197, %v258
        %v1200 = vadd.f32 %v1194, %v1198
        %v1201 = vadd.f32 %v1195, %v1199
        %s1202 = sld [smem:[#allocation2 + $0x14f]]
        %v1203 = vstv %s1202
        %v1204 = vmul.f32 %v1203, %v265
        %v1205 = vmul.f32 %v1203, %v264
        %v1206 = vadd.f32 %v1200, %v1204
        %v1207 = vadd.f32 %v1201, %v1205
        %s1208 = sld [smem:[#allocation2 + $0x156]]
        %v1209 = vstv %s1208
        %v1210 = vmul.f32 %v1209, %v271
        %v1211 = vmul.f32 %v1209, %v270
        %v1212 = vadd.f32 %v1206, %v1210
        %v1213 = vadd.f32 %v1207, %v1211
        %1214 = vrot.lane.b32.xlu0 %v1212, 122
        %v1215 = vpop.permute.xlu0 %1214
        %1216 = vrot.lane.b32.xlu0 %v1213, 122
        %v1217 = vpop.permute.xlu0 %1216
        %v1218 = vadd.f32 %v1172, %v1215
        %v1219 = vadd.f32 %v1173, %v1217
        %s1220 = sadd.s32 %s229, 40
        %s1221 = scalar_lea.vmem %s204, %s1220 [#allocation8]
        %v1222 = vld [vmem:[%s1221] sm:$0xff]
        %v1223 = vld [vmem:[%s1221 + $0x8] sm:$0xff]
        %v1224 = vld [vmem:[%s1221 + $0x10] sm:$0xff]
        %v1225 = vrot.slane %v1222, 1
        %v1226 = vrot.slane %v1223, 1
        %v1227 = vrot.slane %v1224, 1
        %v1228 = vsel %vm239, %v1226, %v1227
        %v1229 = vsel %vm239, %v1225, %v1226
        %v1230 = vrot.slane %v1222, 2
        %v1231 = vrot.slane %v1223, 2
        %v1232 = vrot.slane %v1224, 2
        %v1233 = vsel %vm245, %v1231, %v1232
        %v1234 = vsel %vm245, %v1230, %v1231
        %v1235 = vrot.slane %v1222, 3
        %v1236 = vrot.slane %v1223, 3
        %v1237 = vrot.slane %v1224, 3
        %v1238 = vsel %vm251, %v1236, %v1237
        %v1239 = vsel %vm251, %v1235, %v1236
        %v1240 = vrot.slane %v1222, 4
        %v1241 = vrot.slane %v1223, 4
        %v1242 = vrot.slane %v1224, 4
        %v1243 = vsel %vm257, %v1241, %v1242
        %v1244 = vsel %vm257, %v1240, %v1241
        %v1245 = vrot.slane %v1222, 5
        %v1246 = vrot.slane %v1223, 5
        %v1247 = vrot.slane %v1224, 5
        %v1248 = vsel %vm263, %v1246, %v1247
        %v1249 = vsel %vm263, %v1245, %v1246
        %v1250 = vrot.slane %v1222, 6
        %v1251 = vrot.slane %v1223, 6
        %v1252 = vrot.slane %v1224, 6
        %v1253 = vsel %vm269, %v1251, %v1252
        %v1254 = vsel %vm269, %v1250, %v1251
        %s1255 = sld [smem:[#allocation2 + $0x31]]
        %v1256 = vstv %s1255
        %v1257 = vmul.f32 %v1256, %v1222
        %v1258 = vmul.f32 %v1256, %v1223
        %s1259 = sld [smem:[#allocation2 + $0x38]]
        %v1260 = vstv %s1259
        %v1261 = vmul.f32 %v1260, %v1229
        %v1262 = vmul.f32 %v1260, %v1228
        %v1263 = vadd.f32 %v1257, %v1261
        %v1264 = vadd.f32 %v1258, %v1262
        %s1265 = sld [smem:[#allocation2 + $0x3f]]
        %v1266 = vstv %s1265
        %v1267 = vmul.f32 %v1266, %v1234
        %v1268 = vmul.f32 %v1266, %v1233
        %v1269 = vadd.f32 %v1263, %v1267
        %v1270 = vadd.f32 %v1264, %v1268
        %s1271 = sld [smem:[#allocation2 + $0x46]]
        %v1272 = vstv %s1271
        %v1273 = vmul.f32 %v1272, %v1239
        %v1274 = vmul.f32 %v1272, %v1238
        %v1275 = vadd.f32 %v1269, %v1273
        %v1276 = vadd.f32 %v1270, %v1274
        %s1277 = sld [smem:[#allocation2 + $0x4d]]
        %v1278 = vstv %s1277
        %v1279 = vmul.f32 %v1278, %v1244
        %v1280 = vmul.f32 %v1278, %v1243
        %v1281 = vadd.f32 %v1275, %v1279
        %v1282 = vadd.f32 %v1276, %v1280
        %s1283 = sld [smem:[#allocation2 + $0x54]]
        %v1284 = vstv %s1283
        %v1285 = vmul.f32 %v1284, %v1249
        %v1286 = vmul.f32 %v1284, %v1248
        %v1287 = vadd.f32 %v1281, %v1285
        %v1288 = vadd.f32 %v1282, %v1286
        %s1289 = sld [smem:[#allocation2 + $0x5b]]
        %v1290 = vstv %s1289
        %v1291 = vmul.f32 %v1290, %v1254
        %v1292 = vmul.f32 %v1290, %v1253
        %v1293 = vadd.f32 %v1287, %v1291
        %v1294 = vadd.f32 %v1288, %v1292
        %v1295 = vadd.f32 %v586, %v1293
        %v1296 = vadd.f32 %v587, %v1294
        %s1297 = sld [smem:[#allocation2 + $0x32]]
        %v1298 = vstv %s1297
        %v1299 = vmul.f32 %v1298, %v1222
        %v1300 = vmul.f32 %v1298, %v1223
        %s1301 = sld [smem:[#allocation2 + $0x39]]
        %v1302 = vstv %s1301
        %v1303 = vmul.f32 %v1302, %v1229
        %v1304 = vmul.f32 %v1302, %v1228
        %v1305 = vadd.f32 %v1299, %v1303
        %v1306 = vadd.f32 %v1300, %v1304
        %s1307 = sld [smem:[#allocation2 + $0x40]]
        %v1308 = vstv %s1307
        %v1309 = vmul.f32 %v1308, %v1234
        %v1310 = vmul.f32 %v1308, %v1233
        %v1311 = vadd.f32 %v1305, %v1309
        %v1312 = vadd.f32 %v1306, %v1310
        %s1313 = sld [smem:[#allocation2 + $0x47]]
        %v1314 = vstv %s1313
        %v1315 = vmul.f32 %v1314, %v1239
        %v1316 = vmul.f32 %v1314, %v1238
        %v1317 = vadd.f32 %v1311, %v1315
        %v1318 = vadd.f32 %v1312, %v1316
        %s1319 = sld [smem:[#allocation2 + $0x4e]]
        %v1320 = vstv %s1319
        %v1321 = vmul.f32 %v1320, %v1244
        %v1322 = vmul.f32 %v1320, %v1243
        %v1323 = vadd.f32 %v1317, %v1321
        %v1324 = vadd.f32 %v1318, %v1322
        %s1325 = sld [smem:[#allocation2 + $0x55]]
        %v1326 = vstv %s1325
        %v1327 = vmul.f32 %v1326, %v1249
        %v1328 = vmul.f32 %v1326, %v1248
        %v1329 = vadd.f32 %v1323, %v1327
        %v1330 = vadd.f32 %v1324, %v1328
        %s1331 = sld [smem:[#allocation2 + $0x5c]]
        %v1332 = vstv %s1331
        %v1333 = vmul.f32 %v1332, %v1254
        %v1334 = vmul.f32 %v1332, %v1253
        %v1335 = vadd.f32 %v1329, %v1333
        %v1336 = vadd.f32 %v1330, %v1334
        %1337 = vrot.lane.b32.xlu0 %v1335, 127
        %v1338 = vpop.permute.xlu0 %1337
        %1339 = vrot.lane.b32.xlu0 %v1336, 127
        %v1340 = vpop.permute.xlu0 %1339
        %v1341 = vadd.f32 %v1295, %v1338
        %v1342 = vadd.f32 %v1296, %v1340
        %s1343 = sld [smem:[#allocation2 + $0x33]]
        %v1344 = vstv %s1343
        %v1345 = vmul.f32 %v1344, %v1222
        %v1346 = vmul.f32 %v1344, %v1223
        %s1347 = sld [smem:[#allocation2 + $0x3a]]
        %v1348 = vstv %s1347
        %v1349 = vmul.f32 %v1348, %v1229
        %v1350 = vmul.f32 %v1348, %v1228
        %v1351 = vadd.f32 %v1345, %v1349
        %v1352 = vadd.f32 %v1346, %v1350
        %s1353 = sld [smem:[#allocation2 + $0x41]]
        %v1354 = vstv %s1353
        %v1355 = vmul.f32 %v1354, %v1234
        %v1356 = vmul.f32 %v1354, %v1233
        %v1357 = vadd.f32 %v1351, %v1355
        %v1358 = vadd.f32 %v1352, %v1356
        %s1359 = sld [smem:[#allocation2 + $0x48]]
        %v1360 = vstv %s1359
        %v1361 = vmul.f32 %v1360, %v1239
        %v1362 = vmul.f32 %v1360, %v1238
        %v1363 = vadd.f32 %v1357, %v1361
        %v1364 = vadd.f32 %v1358, %v1362
        %s1365 = sld [smem:[#allocation2 + $0x4f]]
        %v1366 = vstv %s1365
        %v1367 = vmul.f32 %v1366, %v1244
        %v1368 = vmul.f32 %v1366, %v1243
        %v1369 = vadd.f32 %v1363, %v1367
        %v1370 = vadd.f32 %v1364, %v1368
        %s1371 = sld [smem:[#allocation2 + $0x56]]
        %v1372 = vstv %s1371
        %v1373 = vmul.f32 %v1372, %v1249
        %v1374 = vmul.f32 %v1372, %v1248
        %v1375 = vadd.f32 %v1369, %v1373
        %v1376 = vadd.f32 %v1370, %v1374
        %s1377 = sld [smem:[#allocation2 + $0x5d]]
        %v1378 = vstv %s1377
        %v1379 = vmul.f32 %v1378, %v1254
        %v1380 = vmul.f32 %v1378, %v1253
        %v1381 = vadd.f32 %v1375, %v1379
        %v1382 = vadd.f32 %v1376, %v1380
        %1383 = vrot.lane.b32.xlu0 %v1381, 126
        %v1384 = vpop.permute.xlu0 %1383
        %1385 = vrot.lane.b32.xlu0 %v1382, 126
        %v1386 = vpop.permute.xlu0 %1385
        %v1387 = vadd.f32 %v1341, %v1384
        %v1388 = vadd.f32 %v1342, %v1386
        %s1389 = sld [smem:[#allocation2 + $0x34]]
        %v1390 = vstv %s1389
        %v1391 = vmul.f32 %v1390, %v1222
        %v1392 = vmul.f32 %v1390, %v1223
        %s1393 = sld [smem:[#allocation2 + $0x3b]]
        %v1394 = vstv %s1393
        %v1395 = vmul.f32 %v1394, %v1229
        %v1396 = vmul.f32 %v1394, %v1228
        %v1397 = vadd.f32 %v1391, %v1395
        %v1398 = vadd.f32 %v1392, %v1396
        %s1399 = sld [smem:[#allocation2 + $0x42]]
        %v1400 = vstv %s1399
        %v1401 = vmul.f32 %v1400, %v1234
        %v1402 = vmul.f32 %v1400, %v1233
        %v1403 = vadd.f32 %v1397, %v1401
        %v1404 = vadd.f32 %v1398, %v1402
        %s1405 = sld [smem:[#allocation2 + $0x49]]
        %v1406 = vstv %s1405
        %v1407 = vmul.f32 %v1406, %v1239
        %v1408 = vmul.f32 %v1406, %v1238
        %v1409 = vadd.f32 %v1403, %v1407
        %v1410 = vadd.f32 %v1404, %v1408
        %s1411 = sld [smem:[#allocation2 + $0x50]]
        %v1412 = vstv %s1411
        %v1413 = vmul.f32 %v1412, %v1244
        %v1414 = vmul.f32 %v1412, %v1243
        %v1415 = vadd.f32 %v1409, %v1413
        %v1416 = vadd.f32 %v1410, %v1414
        %s1417 = sld [smem:[#allocation2 + $0x57]]
        %v1418 = vstv %s1417
        %v1419 = vmul.f32 %v1418, %v1249
        %v1420 = vmul.f32 %v1418, %v1248
        %v1421 = vadd.f32 %v1415, %v1419
        %v1422 = vadd.f32 %v1416, %v1420
        %s1423 = sld [smem:[#allocation2 + $0x5e]]
        %v1424 = vstv %s1423
        %v1425 = vmul.f32 %v1424, %v1254
        %v1426 = vmul.f32 %v1424, %v1253
        %v1427 = vadd.f32 %v1421, %v1425
        %v1428 = vadd.f32 %v1422, %v1426
        %1429 = vrot.lane.b32.xlu0 %v1427, 125
        %v1430 = vpop.permute.xlu0 %1429
        %1431 = vrot.lane.b32.xlu0 %v1428, 125
        %v1432 = vpop.permute.xlu0 %1431
        %v1433 = vadd.f32 %v1387, %v1430
        %v1434 = vadd.f32 %v1388, %v1432
        %s1435 = sld [smem:[#allocation2 + $0x35]]
        %v1436 = vstv %s1435
        %v1437 = vmul.f32 %v1436, %v1222
        %v1438 = vmul.f32 %v1436, %v1223
        %s1439 = sld [smem:[#allocation2 + $0x3c]]
        %v1440 = vstv %s1439
        %v1441 = vmul.f32 %v1440, %v1229
        %v1442 = vmul.f32 %v1440, %v1228
        %v1443 = vadd.f32 %v1437, %v1441
        %v1444 = vadd.f32 %v1438, %v1442
        %s1445 = sld [smem:[#allocation2 + $0x43]]
        %v1446 = vstv %s1445
        %v1447 = vmul.f32 %v1446, %v1234
        %v1448 = vmul.f32 %v1446, %v1233
        %v1449 = vadd.f32 %v1443, %v1447
        %v1450 = vadd.f32 %v1444, %v1448
        %s1451 = sld [smem:[#allocation2 + $0x4a]]
        %v1452 = vstv %s1451
        %v1453 = vmul.f32 %v1452, %v1239
        %v1454 = vmul.f32 %v1452, %v1238
        %v1455 = vadd.f32 %v1449, %v1453
        %v1456 = vadd.f32 %v1450, %v1454
        %s1457 = sld [smem:[#allocation2 + $0x51]]
        %v1458 = vstv %s1457
        %v1459 = vmul.f32 %v1458, %v1244
        %v1460 = vmul.f32 %v1458, %v1243
        %v1461 = vadd.f32 %v1455, %v1459
        %v1462 = vadd.f32 %v1456, %v1460
        %s1463 = sld [smem:[#allocation2 + $0x58]]
        %v1464 = vstv %s1463
        %v1465 = vmul.f32 %v1464, %v1249
        %v1466 = vmul.f32 %v1464, %v1248
        %v1467 = vadd.f32 %v1461, %v1465
        %v1468 = vadd.f32 %v1462, %v1466
        %s1469 = sld [smem:[#allocation2 + $0x5f]]
        %v1470 = vstv %s1469
        %v1471 = vmul.f32 %v1470, %v1254
        %v1472 = vmul.f32 %v1470, %v1253
        %v1473 = vadd.f32 %v1467, %v1471
        %v1474 = vadd.f32 %v1468, %v1472
        %1475 = vrot.lane.b32.xlu0 %v1473, 124
        %v1476 = vpop.permute.xlu0 %1475
        %1477 = vrot.lane.b32.xlu0 %v1474, 124
        %v1478 = vpop.permute.xlu0 %1477
        %v1479 = vadd.f32 %v1433, %v1476
        %v1480 = vadd.f32 %v1434, %v1478
        %s1481 = sld [smem:[#allocation2 + $0x36]]
        %v1482 = vstv %s1481
        %v1483 = vmul.f32 %v1482, %v1222
        %v1484 = vmul.f32 %v1482, %v1223
        %s1485 = sld [smem:[#allocation2 + $0x3d]]
        %v1486 = vstv %s1485
        %v1487 = vmul.f32 %v1486, %v1229
        %v1488 = vmul.f32 %v1486, %v1228
        %v1489 = vadd.f32 %v1483, %v1487
        %v1490 = vadd.f32 %v1484, %v1488
        %s1491 = sld [smem:[#allocation2 + $0x44]]
        %v1492 = vstv %s1491
        %v1493 = vmul.f32 %v1492, %v1234
        %v1494 = vmul.f32 %v1492, %v1233
        %v1495 = vadd.f32 %v1489, %v1493
        %v1496 = vadd.f32 %v1490, %v1494
        %s1497 = sld [smem:[#allocation2 + $0x4b]]
        %v1498 = vstv %s1497
        %v1499 = vmul.f32 %v1498, %v1239
        %v1500 = vmul.f32 %v1498, %v1238
        %v1501 = vadd.f32 %v1495, %v1499
        %v1502 = vadd.f32 %v1496, %v1500
        %s1503 = sld [smem:[#allocation2 + $0x52]]
        %v1504 = vstv %s1503
        %v1505 = vmul.f32 %v1504, %v1244
        %v1506 = vmul.f32 %v1504, %v1243
        %v1507 = vadd.f32 %v1501, %v1505
        %v1508 = vadd.f32 %v1502, %v1506
        %s1509 = sld [smem:[#allocation2 + $0x59]]
        %v1510 = vstv %s1509
        %v1511 = vmul.f32 %v1510, %v1249
        %v1512 = vmul.f32 %v1510, %v1248
        %v1513 = vadd.f32 %v1507, %v1511
        %v1514 = vadd.f32 %v1508, %v1512
        %s1515 = sld [smem:[#allocation2 + $0x60]]
        %v1516 = vstv %s1515
        %v1517 = vmul.f32 %v1516, %v1254
        %v1518 = vmul.f32 %v1516, %v1253
        %v1519 = vadd.f32 %v1513, %v1517
        %v1520 = vadd.f32 %v1514, %v1518
        %1521 = vrot.lane.b32.xlu0 %v1519, 123
        %v1522 = vpop.permute.xlu0 %1521
        %1523 = vrot.lane.b32.xlu0 %v1520, 123
        %v1524 = vpop.permute.xlu0 %1523
        %v1525 = vadd.f32 %v1479, %v1522
        %v1526 = vadd.f32 %v1480, %v1524
        %s1527 = sld [smem:[#allocation2 + $0x37]]
        %v1528 = vstv %s1527
        %v1529 = vmul.f32 %v1528, %v1222
        %v1530 = vmul.f32 %v1528, %v1223
        %s1531 = sld [smem:[#allocation2 + $0x3e]]
        %v1532 = vstv %s1531
        %v1533 = vmul.f32 %v1532, %v1229
        %v1534 = vmul.f32 %v1532, %v1228
        %v1535 = vadd.f32 %v1529, %v1533
        %v1536 = vadd.f32 %v1530, %v1534
        %s1537 = sld [smem:[#allocation2 + $0x45]]
        %v1538 = vstv %s1537
        %v1539 = vmul.f32 %v1538, %v1234
        %v1540 = vmul.f32 %v1538, %v1233
        %v1541 = vadd.f32 %v1535, %v1539
        %v1542 = vadd.f32 %v1536, %v1540
        %s1543 = sld [smem:[#allocation2 + $0x4c]]
        %v1544 = vstv %s1543
        %v1545 = vmul.f32 %v1544, %v1239
        %v1546 = vmul.f32 %v1544, %v1238
        %v1547 = vadd.f32 %v1541, %v1545
        %v1548 = vadd.f32 %v1542, %v1546
        %s1549 = sld [smem:[#allocation2 + $0x53]]
        %v1550 = vstv %s1549
        %v1551 = vmul.f32 %v1550, %v1244
        %v1552 = vmul.f32 %v1550, %v1243
        %v1553 = vadd.f32 %v1547, %v1551
        %v1554 = vadd.f32 %v1548, %v1552
        %s1555 = sld [smem:[#allocation2 + $0x5a]]
        %v1556 = vstv %s1555
        %v1557 = vmul.f32 %v1556, %v1249
        %v1558 = vmul.f32 %v1556, %v1248
        %v1559 = vadd.f32 %v1553, %v1557
        %v1560 = vadd.f32 %v1554, %v1558
        %s1561 = sld [smem:[#allocation2 + $0x61]]
        %v1562 = vstv %s1561
        %v1563 = vmul.f32 %v1562, %v1254
        %v1564 = vmul.f32 %v1562, %v1253
        %v1565 = vadd.f32 %v1559, %v1563
        %v1566 = vadd.f32 %v1560, %v1564
        %1567 = vrot.lane.b32.xlu0 %v1565, 122
        %v1568 = vpop.permute.xlu0 %1567
        %1569 = vrot.lane.b32.xlu0 %v1566, 122
        %v1570 = vpop.permute.xlu0 %1569
        %v1571 = vadd.f32 %v1525, %v1568
        %v1572 = vadd.f32 %v1526, %v1570
        %s1573 = sld [smem:[#allocation2 + $0xc4]]
        %v1574 = vstv %s1573
        %v1575 = vmul.f32 %v1574, %v1222
        %v1576 = vmul.f32 %v1574, %v1223
        %s1577 = sld [smem:[#allocation2 + $0xcb]]
        %v1578 = vstv %s1577
        %v1579 = vmul.f32 %v1578, %v1229
        %v1580 = vmul.f32 %v1578, %v1228
        %v1581 = vadd.f32 %v1575, %v1579
        %v1582 = vadd.f32 %v1576, %v1580
        %s1583 = sld [smem:[#allocation2 + $0xd2]]
        %v1584 = vstv %s1583
        %v1585 = vmul.f32 %v1584, %v1234
        %v1586 = vmul.f32 %v1584, %v1233
        %v1587 = vadd.f32 %v1581, %v1585
        %v1588 = vadd.f32 %v1582, %v1586
        %s1589 = sld [smem:[#allocation2 + $0xd9]]
        %v1590 = vstv %s1589
        %v1591 = vmul.f32 %v1590, %v1239
        %v1592 = vmul.f32 %v1590, %v1238
        %v1593 = vadd.f32 %v1587, %v1591
        %v1594 = vadd.f32 %v1588, %v1592
        %s1595 = sld [smem:[#allocation2 + $0xe0]]
        %v1596 = vstv %s1595
        %v1597 = vmul.f32 %v1596, %v1244
        %v1598 = vmul.f32 %v1596, %v1243
        %v1599 = vadd.f32 %v1593, %v1597
        %v1600 = vadd.f32 %v1594, %v1598
        %s1601 = sld [smem:[#allocation2 + $0xe7]]
        %v1602 = vstv %s1601
        %v1603 = vmul.f32 %v1602, %v1249
        %v1604 = vmul.f32 %v1602, %v1248
        %v1605 = vadd.f32 %v1599, %v1603
        %v1606 = vadd.f32 %v1600, %v1604
        %s1607 = sld [smem:[#allocation2 + $0xee]]
        %v1608 = vstv %s1607
        %v1609 = vmul.f32 %v1608, %v1254
        %v1610 = vmul.f32 %v1608, %v1253
        %v1611 = vadd.f32 %v1605, %v1609
        %v1612 = vadd.f32 %v1606, %v1610
        %v1613 = vadd.f32 %v902, %v1611
        %v1614 = vadd.f32 %v903, %v1612
        %s1615 = sld [smem:[#allocation2 + $0xc5]]
        %v1616 = vstv %s1615
        %v1617 = vmul.f32 %v1616, %v1222
        %v1618 = vmul.f32 %v1616, %v1223
        %s1619 = sld [smem:[#allocation2 + $0xcc]]
        %v1620 = vstv %s1619
        %v1621 = vmul.f32 %v1620, %v1229
        %v1622 = vmul.f32 %v1620, %v1228
        %v1623 = vadd.f32 %v1617, %v1621
        %v1624 = vadd.f32 %v1618, %v1622
        %s1625 = sld [smem:[#allocation2 + $0xd3]]
        %v1626 = vstv %s1625
        %v1627 = vmul.f32 %v1626, %v1234
        %v1628 = vmul.f32 %v1626, %v1233
        %v1629 = vadd.f32 %v1623, %v1627
        %v1630 = vadd.f32 %v1624, %v1628
        %s1631 = sld [smem:[#allocation2 + $0xda]]
        %v1632 = vstv %s1631
        %v1633 = vmul.f32 %v1632, %v1239
        %v1634 = vmul.f32 %v1632, %v1238
        %v1635 = vadd.f32 %v1629, %v1633
        %v1636 = vadd.f32 %v1630, %v1634
        %s1637 = sld [smem:[#allocation2 + $0xe1]]
        %v1638 = vstv %s1637
        %v1639 = vmul.f32 %v1638, %v1244
        %v1640 = vmul.f32 %v1638, %v1243
        %v1641 = vadd.f32 %v1635, %v1639
        %v1642 = vadd.f32 %v1636, %v1640
        %s1643 = sld [smem:[#allocation2 + $0xe8]]
        %v1644 = vstv %s1643
        %v1645 = vmul.f32 %v1644, %v1249
        %v1646 = vmul.f32 %v1644, %v1248
        %v1647 = vadd.f32 %v1641, %v1645
        %v1648 = vadd.f32 %v1642, %v1646
        %s1649 = sld [smem:[#allocation2 + $0xef]]
        %v1650 = vstv %s1649
        %v1651 = vmul.f32 %v1650, %v1254
        %v1652 = vmul.f32 %v1650, %v1253
        %v1653 = vadd.f32 %v1647, %v1651
        %v1654 = vadd.f32 %v1648, %v1652
        %1655 = vrot.lane.b32.xlu0 %v1653, 127
        %v1656 = vpop.permute.xlu0 %1655
        %1657 = vrot.lane.b32.xlu0 %v1654, 127
        %v1658 = vpop.permute.xlu0 %1657
        %v1659 = vadd.f32 %v1613, %v1656
        %v1660 = vadd.f32 %v1614, %v1658
        %s1661 = sld [smem:[#allocation2 + $0xc6]]
        %v1662 = vstv %s1661
        %v1663 = vmul.f32 %v1662, %v1222
        %v1664 = vmul.f32 %v1662, %v1223
        %s1665 = sld [smem:[#allocation2 + $0xcd]]
        %v1666 = vstv %s1665
        %v1667 = vmul.f32 %v1666, %v1229
        %v1668 = vmul.f32 %v1666, %v1228
        %v1669 = vadd.f32 %v1663, %v1667
        %v1670 = vadd.f32 %v1664, %v1668
        %s1671 = sld [smem:[#allocation2 + $0xd4]]
        %v1672 = vstv %s1671
        %v1673 = vmul.f32 %v1672, %v1234
        %v1674 = vmul.f32 %v1672, %v1233
        %v1675 = vadd.f32 %v1669, %v1673
        %v1676 = vadd.f32 %v1670, %v1674
        %s1677 = sld [smem:[#allocation2 + $0xdb]]
        %v1678 = vstv %s1677
        %v1679 = vmul.f32 %v1678, %v1239
        %v1680 = vmul.f32 %v1678, %v1238
        %v1681 = vadd.f32 %v1675, %v1679
        %v1682 = vadd.f32 %v1676, %v1680
        %s1683 = sld [smem:[#allocation2 + $0xe2]]
        %v1684 = vstv %s1683
        %v1685 = vmul.f32 %v1684, %v1244
        %v1686 = vmul.f32 %v1684, %v1243
        %v1687 = vadd.f32 %v1681, %v1685
        %v1688 = vadd.f32 %v1682, %v1686
        %s1689 = sld [smem:[#allocation2 + $0xe9]]
        %v1690 = vstv %s1689
        %v1691 = vmul.f32 %v1690, %v1249
        %v1692 = vmul.f32 %v1690, %v1248
        %v1693 = vadd.f32 %v1687, %v1691
        %v1694 = vadd.f32 %v1688, %v1692
        %s1695 = sld [smem:[#allocation2 + $0xf0]]
        %v1696 = vstv %s1695
        %v1697 = vmul.f32 %v1696, %v1254
        %v1698 = vmul.f32 %v1696, %v1253
        %v1699 = vadd.f32 %v1693, %v1697
        %v1700 = vadd.f32 %v1694, %v1698
        %1701 = vrot.lane.b32.xlu0 %v1699, 126
        %v1702 = vpop.permute.xlu0 %1701
        %1703 = vrot.lane.b32.xlu0 %v1700, 126
        %v1704 = vpop.permute.xlu0 %1703
        %v1705 = vadd.f32 %v1659, %v1702
        %v1706 = vadd.f32 %v1660, %v1704
        %s1707 = sld [smem:[#allocation2 + $0xc7]]
        %v1708 = vstv %s1707
        %v1709 = vmul.f32 %v1708, %v1222
        %v1710 = vmul.f32 %v1708, %v1223
        %s1711 = sld [smem:[#allocation2 + $0xce]]
        %v1712 = vstv %s1711
        %v1713 = vmul.f32 %v1712, %v1229
        %v1714 = vmul.f32 %v1712, %v1228
        %v1715 = vadd.f32 %v1709, %v1713
        %v1716 = vadd.f32 %v1710, %v1714
        %s1717 = sld [smem:[#allocation2 + $0xd5]]
        %v1718 = vstv %s1717
        %v1719 = vmul.f32 %v1718, %v1234
        %v1720 = vmul.f32 %v1718, %v1233
        %v1721 = vadd.f32 %v1715, %v1719
        %v1722 = vadd.f32 %v1716, %v1720
        %s1723 = sld [smem:[#allocation2 + $0xdc]]
        %v1724 = vstv %s1723
        %v1725 = vmul.f32 %v1724, %v1239
        %v1726 = vmul.f32 %v1724, %v1238
        %v1727 = vadd.f32 %v1721, %v1725
        %v1728 = vadd.f32 %v1722, %v1726
        %s1729 = sld [smem:[#allocation2 + $0xe3]]
        %v1730 = vstv %s1729
        %v1731 = vmul.f32 %v1730, %v1244
        %v1732 = vmul.f32 %v1730, %v1243
        %v1733 = vadd.f32 %v1727, %v1731
        %v1734 = vadd.f32 %v1728, %v1732
        %s1735 = sld [smem:[#allocation2 + $0xea]]
        %v1736 = vstv %s1735
        %v1737 = vmul.f32 %v1736, %v1249
        %v1738 = vmul.f32 %v1736, %v1248
        %v1739 = vadd.f32 %v1733, %v1737
        %v1740 = vadd.f32 %v1734, %v1738
        %s1741 = sld [smem:[#allocation2 + $0xf1]]
        %v1742 = vstv %s1741
        %v1743 = vmul.f32 %v1742, %v1254
        %v1744 = vmul.f32 %v1742, %v1253
        %v1745 = vadd.f32 %v1739, %v1743
        %v1746 = vadd.f32 %v1740, %v1744
        %1747 = vrot.lane.b32.xlu0 %v1745, 125
        %v1748 = vpop.permute.xlu0 %1747
        %1749 = vrot.lane.b32.xlu0 %v1746, 125
        %v1750 = vpop.permute.xlu0 %1749
        %v1751 = vadd.f32 %v1705, %v1748
        %v1752 = vadd.f32 %v1706, %v1750
        %s1753 = sld [smem:[#allocation2 + $0xc8]]
        %v1754 = vstv %s1753
        %v1755 = vmul.f32 %v1754, %v1222
        %v1756 = vmul.f32 %v1754, %v1223
        %s1757 = sld [smem:[#allocation2 + $0xcf]]
        %v1758 = vstv %s1757
        %v1759 = vmul.f32 %v1758, %v1229
        %v1760 = vmul.f32 %v1758, %v1228
        %v1761 = vadd.f32 %v1755, %v1759
        %v1762 = vadd.f32 %v1756, %v1760
        %s1763 = sld [smem:[#allocation2 + $0xd6]]
        %v1764 = vstv %s1763
        %v1765 = vmul.f32 %v1764, %v1234
        %v1766 = vmul.f32 %v1764, %v1233
        %v1767 = vadd.f32 %v1761, %v1765
        %v1768 = vadd.f32 %v1762, %v1766
        %s1769 = sld [smem:[#allocation2 + $0xdd]]
        %v1770 = vstv %s1769
        %v1771 = vmul.f32 %v1770, %v1239
        %v1772 = vmul.f32 %v1770, %v1238
        %v1773 = vadd.f32 %v1767, %v1771
        %v1774 = vadd.f32 %v1768, %v1772
        %s1775 = sld [smem:[#allocation2 + $0xe4]]
        %v1776 = vstv %s1775
        %v1777 = vmul.f32 %v1776, %v1244
        %v1778 = vmul.f32 %v1776, %v1243
        %v1779 = vadd.f32 %v1773, %v1777
        %v1780 = vadd.f32 %v1774, %v1778
        %s1781 = sld [smem:[#allocation2 + $0xeb]]
        %v1782 = vstv %s1781
        %v1783 = vmul.f32 %v1782, %v1249
        %v1784 = vmul.f32 %v1782, %v1248
        %v1785 = vadd.f32 %v1779, %v1783
        %v1786 = vadd.f32 %v1780, %v1784
        %s1787 = sld [smem:[#allocation2 + $0xf2]]
        %v1788 = vstv %s1787
        %v1789 = vmul.f32 %v1788, %v1254
        %v1790 = vmul.f32 %v1788, %v1253
        %v1791 = vadd.f32 %v1785, %v1789
        %v1792 = vadd.f32 %v1786, %v1790
        %1793 = vrot.lane.b32.xlu0 %v1791, 124
        %v1794 = vpop.permute.xlu0 %1793
        %1795 = vrot.lane.b32.xlu0 %v1792, 124
        %v1796 = vpop.permute.xlu0 %1795
        %v1797 = vadd.f32 %v1751, %v1794
        %v1798 = vadd.f32 %v1752, %v1796
        %s1799 = sld [smem:[#allocation2 + $0xc9]]
        %v1800 = vstv %s1799
        %v1801 = vmul.f32 %v1800, %v1222
        %v1802 = vmul.f32 %v1800, %v1223
        %s1803 = sld [smem:[#allocation2 + $0xd0]]
        %v1804 = vstv %s1803
        %v1805 = vmul.f32 %v1804, %v1229
        %v1806 = vmul.f32 %v1804, %v1228
        %v1807 = vadd.f32 %v1801, %v1805
        %v1808 = vadd.f32 %v1802, %v1806
        %s1809 = sld [smem:[#allocation2 + $0xd7]]
        %v1810 = vstv %s1809
        %v1811 = vmul.f32 %v1810, %v1234
        %v1812 = vmul.f32 %v1810, %v1233
        %v1813 = vadd.f32 %v1807, %v1811
        %v1814 = vadd.f32 %v1808, %v1812
        %s1815 = sld [smem:[#allocation2 + $0xde]]
        %v1816 = vstv %s1815
        %v1817 = vmul.f32 %v1816, %v1239
        %v1818 = vmul.f32 %v1816, %v1238
        %v1819 = vadd.f32 %v1813, %v1817
        %v1820 = vadd.f32 %v1814, %v1818
        %s1821 = sld [smem:[#allocation2 + $0xe5]]
        %v1822 = vstv %s1821
        %v1823 = vmul.f32 %v1822, %v1244
        %v1824 = vmul.f32 %v1822, %v1243
        %v1825 = vadd.f32 %v1819, %v1823
        %v1826 = vadd.f32 %v1820, %v1824
        %s1827 = sld [smem:[#allocation2 + $0xec]]
        %v1828 = vstv %s1827
        %v1829 = vmul.f32 %v1828, %v1249
        %v1830 = vmul.f32 %v1828, %v1248
        %v1831 = vadd.f32 %v1825, %v1829
        %v1832 = vadd.f32 %v1826, %v1830
        %s1833 = sld [smem:[#allocation2 + $0xf3]]
        %v1834 = vstv %s1833
        %v1835 = vmul.f32 %v1834, %v1254
        %v1836 = vmul.f32 %v1834, %v1253
        %v1837 = vadd.f32 %v1831, %v1835
        %v1838 = vadd.f32 %v1832, %v1836
        %1839 = vrot.lane.b32.xlu0 %v1837, 123
        %v1840 = vpop.permute.xlu0 %1839
        %1841 = vrot.lane.b32.xlu0 %v1838, 123
        %v1842 = vpop.permute.xlu0 %1841
        %v1843 = vadd.f32 %v1797, %v1840
        %v1844 = vadd.f32 %v1798, %v1842
        %s1845 = sld [smem:[#allocation2 + $0xca]]
        %v1846 = vstv %s1845
        %v1847 = vmul.f32 %v1846, %v1222
        %v1848 = vmul.f32 %v1846, %v1223
        %s1849 = sld [smem:[#allocation2 + $0xd1]]
        %v1850 = vstv %s1849
        %v1851 = vmul.f32 %v1850, %v1229
        %v1852 = vmul.f32 %v1850, %v1228
        %v1853 = vadd.f32 %v1847, %v1851
        %v1854 = vadd.f32 %v1848, %v1852
        %s1855 = sld [smem:[#allocation2 + $0xd8]]
        %v1856 = vstv %s1855
        %v1857 = vmul.f32 %v1856, %v1234
        %v1858 = vmul.f32 %v1856, %v1233
        %v1859 = vadd.f32 %v1853, %v1857
        %v1860 = vadd.f32 %v1854, %v1858
        %s1861 = sld [smem:[#allocation2 + $0xdf]]
        %v1862 = vstv %s1861
        %v1863 = vmul.f32 %v1862, %v1239
        %v1864 = vmul.f32 %v1862, %v1238
        %v1865 = vadd.f32 %v1859, %v1863
        %v1866 = vadd.f32 %v1860, %v1864
        %s1867 = sld [smem:[#allocation2 + $0xe6]]
        %v1868 = vstv %s1867
        %v1869 = vmul.f32 %v1868, %v1244
        %v1870 = vmul.f32 %v1868, %v1243
        %v1871 = vadd.f32 %v1865, %v1869
        %v1872 = vadd.f32 %v1866, %v1870
        %s1873 = sld [smem:[#allocation2 + $0xed]]
        %v1874 = vstv %s1873
        %v1875 = vmul.f32 %v1874, %v1249
        %v1876 = vmul.f32 %v1874, %v1248
        %v1877 = vadd.f32 %v1871, %v1875
        %v1878 = vadd.f32 %v1872, %v1876
        %s1879 = sld [smem:[#allocation2 + $0xf4]]
        %v1880 = vstv %s1879
        %v1881 = vmul.f32 %v1880, %v1254
        %v1882 = vmul.f32 %v1880, %v1253
        %v1883 = vadd.f32 %v1877, %v1881
        %v1884 = vadd.f32 %v1878, %v1882
        %1885 = vrot.lane.b32.xlu0 %v1883, 122
        %v1886 = vpop.permute.xlu0 %1885
        %1887 = vrot.lane.b32.xlu0 %v1884, 122
        %v1888 = vpop.permute.xlu0 %1887
        %v1889 = vadd.f32 %v1843, %v1886
        %v1890 = vadd.f32 %v1844, %v1888
        %s1891 = sld [smem:[#allocation2 + $0x157]]
        %v1892 = vstv %s1891
        %v1893 = vmul.f32 %v1892, %v1222
        %v1894 = vmul.f32 %v1892, %v1223
        %s1895 = sld [smem:[#allocation2 + $0x15e]]
        %v1896 = vstv %s1895
        %v1897 = vmul.f32 %v1896, %v1229
        %v1898 = vmul.f32 %v1896, %v1228
        %v1899 = vadd.f32 %v1893, %v1897
        %v1900 = vadd.f32 %v1894, %v1898
        %s1901 = sld [smem:[#allocation2 + $0x165]]
        %v1902 = vstv %s1901
        %v1903 = vmul.f32 %v1902, %v1234
        %v1904 = vmul.f32 %v1902, %v1233
        %v1905 = vadd.f32 %v1899, %v1903
        %v1906 = vadd.f32 %v1900, %v1904
        %s1907 = sld [smem:[#allocation2 + $0x16c]]
        %v1908 = vstv %s1907
        %v1909 = vmul.f32 %v1908, %v1239
        %v1910 = vmul.f32 %v1908, %v1238
        %v1911 = vadd.f32 %v1905, %v1909
        %v1912 = vadd.f32 %v1906, %v1910
        %s1913 = sld [smem:[#allocation2 + $0x173]]
        %v1914 = vstv %s1913
        %v1915 = vmul.f32 %v1914, %v1244
        %v1916 = vmul.f32 %v1914, %v1243
        %v1917 = vadd.f32 %v1911, %v1915
        %v1918 = vadd.f32 %v1912, %v1916
        %s1919 = sld [smem:[#allocation2 + $0x17a]]
        %v1920 = vstv %s1919
        %v1921 = vmul.f32 %v1920, %v1249
        %v1922 = vmul.f32 %v1920, %v1248
        %v1923 = vadd.f32 %v1917, %v1921
        %v1924 = vadd.f32 %v1918, %v1922
        %s1925 = sld [smem:[#allocation2 + $0x181]]
        %v1926 = vstv %s1925
        %v1927 = vmul.f32 %v1926, %v1254
        %v1928 = vmul.f32 %v1926, %v1253
        %v1929 = vadd.f32 %v1923, %v1927
        %v1930 = vadd.f32 %v1924, %v1928
        %v1931 = vadd.f32 %v1218, %v1929
        %v1932 = vadd.f32 %v1219, %v1930
        %s1933 = sld [smem:[#allocation2 + $0x158]]
        %v1934 = vstv %s1933
        %v1935 = vmul.f32 %v1934, %v1222
        %v1936 = vmul.f32 %v1934, %v1223
        %s1937 = sld [smem:[#allocation2 + $0x15f]]
        %v1938 = vstv %s1937
        %v1939 = vmul.f32 %v1938, %v1229
        %v1940 = vmul.f32 %v1938, %v1228
        %v1941 = vadd.f32 %v1935, %v1939
        %v1942 = vadd.f32 %v1936, %v1940
        %s1943 = sld [smem:[#allocation2 + $0x166]]
        %v1944 = vstv %s1943
        %v1945 = vmul.f32 %v1944, %v1234
        %v1946 = vmul.f32 %v1944, %v1233
        %v1947 = vadd.f32 %v1941, %v1945
        %v1948 = vadd.f32 %v1942, %v1946
        %s1949 = sld [smem:[#allocation2 + $0x16d]]
        %v1950 = vstv %s1949
        %v1951 = vmul.f32 %v1950, %v1239
        %v1952 = vmul.f32 %v1950, %v1238
        %v1953 = vadd.f32 %v1947, %v1951
        %v1954 = vadd.f32 %v1948, %v1952
        %s1955 = sld [smem:[#allocation2 + $0x174]]
        %v1956 = vstv %s1955
        %v1957 = vmul.f32 %v1956, %v1244
        %v1958 = vmul.f32 %v1956, %v1243
        %v1959 = vadd.f32 %v1953, %v1957
        %v1960 = vadd.f32 %v1954, %v1958
        %s1961 = sld [smem:[#allocation2 + $0x17b]]
        %v1962 = vstv %s1961
        %v1963 = vmul.f32 %v1962, %v1249
        %v1964 = vmul.f32 %v1962, %v1248
        %v1965 = vadd.f32 %v1959, %v1963
        %v1966 = vadd.f32 %v1960, %v1964
        %s1967 = sld [smem:[#allocation2 + $0x182]]
        %v1968 = vstv %s1967
        %v1969 = vmul.f32 %v1968, %v1254
        %v1970 = vmul.f32 %v1968, %v1253
        %v1971 = vadd.f32 %v1965, %v1969
        %v1972 = vadd.f32 %v1966, %v1970
        %1973 = vrot.lane.b32.xlu0 %v1971, 127
        %v1974 = vpop.permute.xlu0 %1973
        %1975 = vrot.lane.b32.xlu0 %v1972, 127
        %v1976 = vpop.permute.xlu0 %1975
        %v1977 = vadd.f32 %v1931, %v1974
        %v1978 = vadd.f32 %v1932, %v1976
        %s1979 = sld [smem:[#allocation2 + $0x159]]
        %v1980 = vstv %s1979
        %v1981 = vmul.f32 %v1980, %v1222
        %v1982 = vmul.f32 %v1980, %v1223
        %s1983 = sld [smem:[#allocation2 + $0x160]]
        %v1984 = vstv %s1983
        %v1985 = vmul.f32 %v1984, %v1229
        %v1986 = vmul.f32 %v1984, %v1228
        %v1987 = vadd.f32 %v1981, %v1985
        %v1988 = vadd.f32 %v1982, %v1986
        %s1989 = sld [smem:[#allocation2 + $0x167]]
        %v1990 = vstv %s1989
        %v1991 = vmul.f32 %v1990, %v1234
        %v1992 = vmul.f32 %v1990, %v1233
        %v1993 = vadd.f32 %v1987, %v1991
        %v1994 = vadd.f32 %v1988, %v1992
        %s1995 = sld [smem:[#allocation2 + $0x16e]]
        %v1996 = vstv %s1995
        %v1997 = vmul.f32 %v1996, %v1239
        %v1998 = vmul.f32 %v1996, %v1238
        %v1999 = vadd.f32 %v1993, %v1997
        %v2000 = vadd.f32 %v1994, %v1998
        %s2001 = sld [smem:[#allocation2 + $0x175]]
        %v2002 = vstv %s2001
        %v2003 = vmul.f32 %v2002, %v1244
        %v2004 = vmul.f32 %v2002, %v1243
        %v2005 = vadd.f32 %v1999, %v2003
        %v2006 = vadd.f32 %v2000, %v2004
        %s2007 = sld [smem:[#allocation2 + $0x17c]]
        %v2008 = vstv %s2007
        %v2009 = vmul.f32 %v2008, %v1249
        %v2010 = vmul.f32 %v2008, %v1248
        %v2011 = vadd.f32 %v2005, %v2009
        %v2012 = vadd.f32 %v2006, %v2010
        %s2013 = sld [smem:[#allocation2 + $0x183]]
        %v2014 = vstv %s2013
        %v2015 = vmul.f32 %v2014, %v1254
        %v2016 = vmul.f32 %v2014, %v1253
        %v2017 = vadd.f32 %v2011, %v2015
        %v2018 = vadd.f32 %v2012, %v2016
        %2019 = vrot.lane.b32.xlu0 %v2017, 126
        %v2020 = vpop.permute.xlu0 %2019
        %2021 = vrot.lane.b32.xlu0 %v2018, 126
        %v2022 = vpop.permute.xlu0 %2021
        %v2023 = vadd.f32 %v1977, %v2020
        %v2024 = vadd.f32 %v1978, %v2022
        %s2025 = sld [smem:[#allocation2 + $0x15a]]
        %v2026 = vstv %s2025
        %v2027 = vmul.f32 %v2026, %v1222
        %v2028 = vmul.f32 %v2026, %v1223
        %s2029 = sld [smem:[#allocation2 + $0x161]]
        %v2030 = vstv %s2029
        %v2031 = vmul.f32 %v2030, %v1229
        %v2032 = vmul.f32 %v2030, %v1228
        %v2033 = vadd.f32 %v2027, %v2031
        %v2034 = vadd.f32 %v2028, %v2032
        %s2035 = sld [smem:[#allocation2 + $0x168]]
        %v2036 = vstv %s2035
        %v2037 = vmul.f32 %v2036, %v1234
        %v2038 = vmul.f32 %v2036, %v1233
        %v2039 = vadd.f32 %v2033, %v2037
        %v2040 = vadd.f32 %v2034, %v2038
        %s2041 = sld [smem:[#allocation2 + $0x16f]]
        %v2042 = vstv %s2041
        %v2043 = vmul.f32 %v2042, %v1239
        %v2044 = vmul.f32 %v2042, %v1238
        %v2045 = vadd.f32 %v2039, %v2043
        %v2046 = vadd.f32 %v2040, %v2044
        %s2047 = sld [smem:[#allocation2 + $0x176]]
        %v2048 = vstv %s2047
        %v2049 = vmul.f32 %v2048, %v1244
        %v2050 = vmul.f32 %v2048, %v1243
        %v2051 = vadd.f32 %v2045, %v2049
        %v2052 = vadd.f32 %v2046, %v2050
        %s2053 = sld [smem:[#allocation2 + $0x17d]]
        %v2054 = vstv %s2053
        %v2055 = vmul.f32 %v2054, %v1249
        %v2056 = vmul.f32 %v2054, %v1248
        %v2057 = vadd.f32 %v2051, %v2055
        %v2058 = vadd.f32 %v2052, %v2056
        %s2059 = sld [smem:[#allocation2 + $0x184]]
        %v2060 = vstv %s2059
        %v2061 = vmul.f32 %v2060, %v1254
        %v2062 = vmul.f32 %v2060, %v1253
        %v2063 = vadd.f32 %v2057, %v2061
        %v2064 = vadd.f32 %v2058, %v2062
        %2065 = vrot.lane.b32.xlu0 %v2063, 125
        %v2066 = vpop.permute.xlu0 %2065
        %2067 = vrot.lane.b32.xlu0 %v2064, 125
        %v2068 = vpop.permute.xlu0 %2067
        %v2069 = vadd.f32 %v2023, %v2066
        %v2070 = vadd.f32 %v2024, %v2068
        %s2071 = sld [smem:[#allocation2 + $0x15b]]
        %v2072 = vstv %s2071
        %v2073 = vmul.f32 %v2072, %v1222
        %v2074 = vmul.f32 %v2072, %v1223
        %s2075 = sld [smem:[#allocation2 + $0x162]]
        %v2076 = vstv %s2075
        %v2077 = vmul.f32 %v2076, %v1229
        %v2078 = vmul.f32 %v2076, %v1228
        %v2079 = vadd.f32 %v2073, %v2077
        %v2080 = vadd.f32 %v2074, %v2078
        %s2081 = sld [smem:[#allocation2 + $0x169]]
        %v2082 = vstv %s2081
        %v2083 = vmul.f32 %v2082, %v1234
        %v2084 = vmul.f32 %v2082, %v1233
        %v2085 = vadd.f32 %v2079, %v2083
        %v2086 = vadd.f32 %v2080, %v2084
        %s2087 = sld [smem:[#allocation2 + $0x170]]
        %v2088 = vstv %s2087
        %v2089 = vmul.f32 %v2088, %v1239
        %v2090 = vmul.f32 %v2088, %v1238
        %v2091 = vadd.f32 %v2085, %v2089
        %v2092 = vadd.f32 %v2086, %v2090
        %s2093 = sld [smem:[#allocation2 + $0x177]]
        %v2094 = vstv %s2093
        %v2095 = vmul.f32 %v2094, %v1244
        %v2096 = vmul.f32 %v2094, %v1243
        %v2097 = vadd.f32 %v2091, %v2095
        %v2098 = vadd.f32 %v2092, %v2096
        %s2099 = sld [smem:[#allocation2 + $0x17e]]
        %v2100 = vstv %s2099
        %v2101 = vmul.f32 %v2100, %v1249
        %v2102 = vmul.f32 %v2100, %v1248
        %v2103 = vadd.f32 %v2097, %v2101
        %v2104 = vadd.f32 %v2098, %v2102
        %s2105 = sld [smem:[#allocation2 + $0x185]]
        %v2106 = vstv %s2105
        %v2107 = vmul.f32 %v2106, %v1254
        %v2108 = vmul.f32 %v2106, %v1253
        %v2109 = vadd.f32 %v2103, %v2107
        %v2110 = vadd.f32 %v2104, %v2108
        %2111 = vrot.lane.b32.xlu0 %v2109, 124
        %v2112 = vpop.permute.xlu0 %2111
        %2113 = vrot.lane.b32.xlu0 %v2110, 124
        %v2114 = vpop.permute.xlu0 %2113
        %v2115 = vadd.f32 %v2069, %v2112
        %v2116 = vadd.f32 %v2070, %v2114
        %s2117 = sld [smem:[#allocation2 + $0x15c]]
        %v2118 = vstv %s2117
        %v2119 = vmul.f32 %v2118, %v1222
        %v2120 = vmul.f32 %v2118, %v1223
        %s2121 = sld [smem:[#allocation2 + $0x163]]
        %v2122 = vstv %s2121
        %v2123 = vmul.f32 %v2122, %v1229
        %v2124 = vmul.f32 %v2122, %v1228
        %v2125 = vadd.f32 %v2119, %v2123
        %v2126 = vadd.f32 %v2120, %v2124
        %s2127 = sld [smem:[#allocation2 + $0x16a]]
        %v2128 = vstv %s2127
        %v2129 = vmul.f32 %v2128, %v1234
        %v2130 = vmul.f32 %v2128, %v1233
        %v2131 = vadd.f32 %v2125, %v2129
        %v2132 = vadd.f32 %v2126, %v2130
        %s2133 = sld [smem:[#allocation2 + $0x171]]
        %v2134 = vstv %s2133
        %v2135 = vmul.f32 %v2134, %v1239
        %v2136 = vmul.f32 %v2134, %v1238
        %v2137 = vadd.f32 %v2131, %v2135
        %v2138 = vadd.f32 %v2132, %v2136
        %s2139 = sld [smem:[#allocation2 + $0x178]]
        %v2140 = vstv %s2139
        %v2141 = vmul.f32 %v2140, %v1244
        %v2142 = vmul.f32 %v2140, %v1243
        %v2143 = vadd.f32 %v2137, %v2141
        %v2144 = vadd.f32 %v2138, %v2142
        %s2145 = sld [smem:[#allocation2 + $0x17f]]
        %v2146 = vstv %s2145
        %v2147 = vmul.f32 %v2146, %v1249
        %v2148 = vmul.f32 %v2146, %v1248
        %v2149 = vadd.f32 %v2143, %v2147
        %v2150 = vadd.f32 %v2144, %v2148
        %s2151 = sld [smem:[#allocation2 + $0x186]]
        %v2152 = vstv %s2151
        %v2153 = vmul.f32 %v2152, %v1254
        %v2154 = vmul.f32 %v2152, %v1253
        %v2155 = vadd.f32 %v2149, %v2153
        %v2156 = vadd.f32 %v2150, %v2154
        %2157 = vrot.lane.b32.xlu0 %v2155, 123
        %v2158 = vpop.permute.xlu0 %2157
        %2159 = vrot.lane.b32.xlu0 %v2156, 123
        %v2160 = vpop.permute.xlu0 %2159
        %v2161 = vadd.f32 %v2115, %v2158
        %v2162 = vadd.f32 %v2116, %v2160
        %s2163 = sld [smem:[#allocation2 + $0x15d]]
        %v2164 = vstv %s2163
        %v2165 = vmul.f32 %v2164, %v1222
        %v2166 = vmul.f32 %v2164, %v1223
        %s2167 = sld [smem:[#allocation2 + $0x164]]
        %v2168 = vstv %s2167
        %v2169 = vmul.f32 %v2168, %v1229
        %v2170 = vmul.f32 %v2168, %v1228
        %v2171 = vadd.f32 %v2165, %v2169
        %v2172 = vadd.f32 %v2166, %v2170
        %s2173 = sld [smem:[#allocation2 + $0x16b]]
        %v2174 = vstv %s2173
        %v2175 = vmul.f32 %v2174, %v1234
        %v2176 = vmul.f32 %v2174, %v1233
        %v2177 = vadd.f32 %v2171, %v2175
        %v2178 = vadd.f32 %v2172, %v2176
        %s2179 = sld [smem:[#allocation2 + $0x172]]
        %v2180 = vstv %s2179
        %v2181 = vmul.f32 %v2180, %v1239
        %v2182 = vmul.f32 %v2180, %v1238
        %v2183 = vadd.f32 %v2177, %v2181
        %v2184 = vadd.f32 %v2178, %v2182
        %s2185 = sld [smem:[#allocation2 + $0x179]]
        %v2186 = vstv %s2185
        %v2187 = vmul.f32 %v2186, %v1244
        %v2188 = vmul.f32 %v2186, %v1243
        %v2189 = vadd.f32 %v2183, %v2187
        %v2190 = vadd.f32 %v2184, %v2188
        %s2191 = sld [smem:[#allocation2 + $0x180]]
        %v2192 = vstv %s2191
        %v2193 = vmul.f32 %v2192, %v1249
        %v2194 = vmul.f32 %v2192, %v1248
        %v2195 = vadd.f32 %v2189, %v2193
        %v2196 = vadd.f32 %v2190, %v2194
        %s2197 = sld [smem:[#allocation2 + $0x187]]
        %v2198 = vstv %s2197
        %v2199 = vmul.f32 %v2198, %v1254
        %v2200 = vmul.f32 %v2198, %v1253
        %v2201 = vadd.f32 %v2195, %v2199
        %v2202 = vadd.f32 %v2196, %v2200
        %2203 = vrot.lane.b32.xlu0 %v2201, 122
        %v2204 = vpop.permute.xlu0 %2203
        %2205 = vrot.lane.b32.xlu0 %v2202, 122
        %v2206 = vpop.permute.xlu0 %2205
        %v2207 = vadd.f32 %v2161, %v2204
        %v2208 = vadd.f32 %v2162, %v2206
        %s2209 = sadd.s32 %s229, 80
        %s2210 = scalar_lea.vmem %s204, %s2209 [#allocation8]
        %v2211 = vld [vmem:[%s2210] sm:$0xff]
        %v2212 = vld [vmem:[%s2210 + $0x8] sm:$0xff]
        %v2213 = vld [vmem:[%s2210 + $0x10] sm:$0xff]
        %v2214 = vrot.slane %v2211, 1
        %v2215 = vrot.slane %v2212, 1
        %v2216 = vrot.slane %v2213, 1
        %v2217 = vsel %vm239, %v2215, %v2216
        %v2218 = vsel %vm239, %v2214, %v2215
        %v2219 = vrot.slane %v2211, 2
        %v2220 = vrot.slane %v2212, 2
        %v2221 = vrot.slane %v2213, 2
        %v2222 = vsel %vm245, %v2220, %v2221
        %v2223 = vsel %vm245, %v2219, %v2220
        %v2224 = vrot.slane %v2211, 3
        %v2225 = vrot.slane %v2212, 3
        %v2226 = vrot.slane %v2213, 3
        %v2227 = vsel %vm251, %v2225, %v2226
        %v2228 = vsel %vm251, %v2224, %v2225
        %v2229 = vrot.slane %v2211, 4
        %v2230 = vrot.slane %v2212, 4
        %v2231 = vrot.slane %v2213, 4
        %v2232 = vsel %vm257, %v2230, %v2231
        %v2233 = vsel %vm257, %v2229, %v2230
        %v2234 = vrot.slane %v2211, 5
        %v2235 = vrot.slane %v2212, 5
        %v2236 = vrot.slane %v2213, 5
        %v2237 = vsel %vm263, %v2235, %v2236
        %v2238 = vsel %vm263, %v2234, %v2235
        %v2239 = vrot.slane %v2211, 6
        %v2240 = vrot.slane %v2212, 6
        %v2241 = vrot.slane %v2213, 6
        %v2242 = vsel %vm269, %v2240, %v2241
        %v2243 = vsel %vm269, %v2239, %v2240
        %s2244 = sld [smem:[#allocation2 + $0x62]]
        %v2245 = vstv %s2244
        %v2246 = vmul.f32 %v2245, %v2211
        %v2247 = vmul.f32 %v2245, %v2212
        %s2248 = sld [smem:[#allocation2 + $0x69]]
        %v2249 = vstv %s2248
        %v2250 = vmul.f32 %v2249, %v2218
        %v2251 = vmul.f32 %v2249, %v2217
        %v2252 = vadd.f32 %v2246, %v2250
        %v2253 = vadd.f32 %v2247, %v2251
        %s2254 = sld [smem:[#allocation2 + $0x70]]
        %v2255 = vstv %s2254
        %v2256 = vmul.f32 %v2255, %v2223
        %v2257 = vmul.f32 %v2255, %v2222
        %v2258 = vadd.f32 %v2252, %v2256
        %v2259 = vadd.f32 %v2253, %v2257
        %s2260 = sld [smem:[#allocation2 + $0x77]]
        %v2261 = vstv %s2260
        %v2262 = vmul.f32 %v2261, %v2228
        %v2263 = vmul.f32 %v2261, %v2227
        %v2264 = vadd.f32 %v2258, %v2262
        %v2265 = vadd.f32 %v2259, %v2263
        %s2266 = sld [smem:[#allocation2 + $0x7e]]
        %v2267 = vstv %s2266
        %v2268 = vmul.f32 %v2267, %v2233
        %v2269 = vmul.f32 %v2267, %v2232
        %v2270 = vadd.f32 %v2264, %v2268
        %v2271 = vadd.f32 %v2265, %v2269
        %s2272 = sld [smem:[#allocation2 + $0x85]]
        %v2273 = vstv %s2272
        %v2274 = vmul.f32 %v2273, %v2238
        %v2275 = vmul.f32 %v2273, %v2237
        %v2276 = vadd.f32 %v2270, %v2274
        %v2277 = vadd.f32 %v2271, %v2275
        %s2278 = sld [smem:[#allocation2 + $0x8c]]
        %v2279 = vstv %s2278
        %v2280 = vmul.f32 %v2279, %v2243
        %v2281 = vmul.f32 %v2279, %v2242
        %v2282 = vadd.f32 %v2276, %v2280
        %v2283 = vadd.f32 %v2277, %v2281
        %v2284 = vadd.f32 %v1571, %v2282
        %v2285 = vadd.f32 %v1572, %v2283
        %s2286 = sld [smem:[#allocation2 + $0x63]]
        %v2287 = vstv %s2286
        %v2288 = vmul.f32 %v2287, %v2211
        %v2289 = vmul.f32 %v2287, %v2212
        %s2290 = sld [smem:[#allocation2 + $0x6a]]
        %v2291 = vstv %s2290
        %v2292 = vmul.f32 %v2291, %v2218
        %v2293 = vmul.f32 %v2291, %v2217
        %v2294 = vadd.f32 %v2288, %v2292
        %v2295 = vadd.f32 %v2289, %v2293
        %s2296 = sld [smem:[#allocation2 + $0x71]]
        %v2297 = vstv %s2296
        %v2298 = vmul.f32 %v2297, %v2223
        %v2299 = vmul.f32 %v2297, %v2222
        %v2300 = vadd.f32 %v2294, %v2298
        %v2301 = vadd.f32 %v2295, %v2299
        %s2302 = sld [smem:[#allocation2 + $0x78]]
        %v2303 = vstv %s2302
        %v2304 = vmul.f32 %v2303, %v2228
        %v2305 = vmul.f32 %v2303, %v2227
        %v2306 = vadd.f32 %v2300, %v2304
        %v2307 = vadd.f32 %v2301, %v2305
        %s2308 = sld [smem:[#allocation2 + $0x7f]]
        %v2309 = vstv %s2308
        %v2310 = vmul.f32 %v2309, %v2233
        %v2311 = vmul.f32 %v2309, %v2232
        %v2312 = vadd.f32 %v2306, %v2310
        %v2313 = vadd.f32 %v2307, %v2311
        %s2314 = sld [smem:[#allocation2 + $0x86]]
        %v2315 = vstv %s2314
        %v2316 = vmul.f32 %v2315, %v2238
        %v2317 = vmul.f32 %v2315, %v2237
        %v2318 = vadd.f32 %v2312, %v2316
        %v2319 = vadd.f32 %v2313, %v2317
        %s2320 = sld [smem:[#allocation2 + $0x8d]]
        %v2321 = vstv %s2320
        %v2322 = vmul.f32 %v2321, %v2243
        %v2323 = vmul.f32 %v2321, %v2242
        %v2324 = vadd.f32 %v2318, %v2322
        %v2325 = vadd.f32 %v2319, %v2323
        %2326 = vrot.lane.b32.xlu0 %v2324, 127
        %v2327 = vpop.permute.xlu0 %2326
        %2328 = vrot.lane.b32.xlu0 %v2325, 127
        %v2329 = vpop.permute.xlu0 %2328
        %v2330 = vadd.f32 %v2284, %v2327
        %v2331 = vadd.f32 %v2285, %v2329
        %s2332 = sld [smem:[#allocation2 + $0x64]]
        %v2333 = vstv %s2332
        %v2334 = vmul.f32 %v2333, %v2211
        %v2335 = vmul.f32 %v2333, %v2212
        %s2336 = sld [smem:[#allocation2 + $0x6b]]
        %v2337 = vstv %s2336
        %v2338 = vmul.f32 %v2337, %v2218
        %v2339 = vmul.f32 %v2337, %v2217
        %v2340 = vadd.f32 %v2334, %v2338
        %v2341 = vadd.f32 %v2335, %v2339
        %s2342 = sld [smem:[#allocation2 + $0x72]]
        %v2343 = vstv %s2342
        %v2344 = vmul.f32 %v2343, %v2223
        %v2345 = vmul.f32 %v2343, %v2222
        %v2346 = vadd.f32 %v2340, %v2344
        %v2347 = vadd.f32 %v2341, %v2345
        %s2348 = sld [smem:[#allocation2 + $0x79]]
        %v2349 = vstv %s2348
        %v2350 = vmul.f32 %v2349, %v2228
        %v2351 = vmul.f32 %v2349, %v2227
        %v2352 = vadd.f32 %v2346, %v2350
        %v2353 = vadd.f32 %v2347, %v2351
        %s2354 = sld [smem:[#allocation2 + $0x80]]
        %v2355 = vstv %s2354
        %v2356 = vmul.f32 %v2355, %v2233
        %v2357 = vmul.f32 %v2355, %v2232
        %v2358 = vadd.f32 %v2352, %v2356
        %v2359 = vadd.f32 %v2353, %v2357
        %s2360 = sld [smem:[#allocation2 + $0x87]]
        %v2361 = vstv %s2360
        %v2362 = vmul.f32 %v2361, %v2238
        %v2363 = vmul.f32 %v2361, %v2237
        %v2364 = vadd.f32 %v2358, %v2362
        %v2365 = vadd.f32 %v2359, %v2363
        %s2366 = sld [smem:[#allocation2 + $0x8e]]
        %v2367 = vstv %s2366
        %v2368 = vmul.f32 %v2367, %v2243
        %v2369 = vmul.f32 %v2367, %v2242
        %v2370 = vadd.f32 %v2364, %v2368
        %v2371 = vadd.f32 %v2365, %v2369
        %2372 = vrot.lane.b32.xlu0 %v2370, 126
        %v2373 = vpop.permute.xlu0 %2372
        %2374 = vrot.lane.b32.xlu0 %v2371, 126
        %v2375 = vpop.permute.xlu0 %2374
        %v2376 = vadd.f32 %v2330, %v2373
        %v2377 = vadd.f32 %v2331, %v2375
        %s2378 = sld [smem:[#allocation2 + $0x65]]
        %v2379 = vstv %s2378
        %v2380 = vmul.f32 %v2379, %v2211
        %v2381 = vmul.f32 %v2379, %v2212
        %s2382 = sld [smem:[#allocation2 + $0x6c]]
        %v2383 = vstv %s2382
        %v2384 = vmul.f32 %v2383, %v2218
        %v2385 = vmul.f32 %v2383, %v2217
        %v2386 = vadd.f32 %v2380, %v2384
        %v2387 = vadd.f32 %v2381, %v2385
        %s2388 = sld [smem:[#allocation2 + $0x73]]
        %v2389 = vstv %s2388
        %v2390 = vmul.f32 %v2389, %v2223
        %v2391 = vmul.f32 %v2389, %v2222
        %v2392 = vadd.f32 %v2386, %v2390
        %v2393 = vadd.f32 %v2387, %v2391
        %s2394 = sld [smem:[#allocation2 + $0x7a]]
        %v2395 = vstv %s2394
        %v2396 = vmul.f32 %v2395, %v2228
        %v2397 = vmul.f32 %v2395, %v2227
        %v2398 = vadd.f32 %v2392, %v2396
        %v2399 = vadd.f32 %v2393, %v2397
        %s2400 = sld [smem:[#allocation2 + $0x81]]
        %v2401 = vstv %s2400
        %v2402 = vmul.f32 %v2401, %v2233
        %v2403 = vmul.f32 %v2401, %v2232
        %v2404 = vadd.f32 %v2398, %v2402
        %v2405 = vadd.f32 %v2399, %v2403
        %s2406 = sld [smem:[#allocation2 + $0x88]]
        %v2407 = vstv %s2406
        %v2408 = vmul.f32 %v2407, %v2238
        %v2409 = vmul.f32 %v2407, %v2237
        %v2410 = vadd.f32 %v2404, %v2408
        %v2411 = vadd.f32 %v2405, %v2409
        %s2412 = sld [smem:[#allocation2 + $0x8f]]
        %v2413 = vstv %s2412
        %v2414 = vmul.f32 %v2413, %v2243
        %v2415 = vmul.f32 %v2413, %v2242
        %v2416 = vadd.f32 %v2410, %v2414
        %v2417 = vadd.f32 %v2411, %v2415
        %2418 = vrot.lane.b32.xlu0 %v2416, 125
        %v2419 = vpop.permute.xlu0 %2418
        %2420 = vrot.lane.b32.xlu0 %v2417, 125
        %v2421 = vpop.permute.xlu0 %2420
        %v2422 = vadd.f32 %v2376, %v2419
        %v2423 = vadd.f32 %v2377, %v2421
        %s2424 = sld [smem:[#allocation2 + $0x66]]
        %v2425 = vstv %s2424
        %v2426 = vmul.f32 %v2425, %v2211
        %v2427 = vmul.f32 %v2425, %v2212
        %s2428 = sld [smem:[#allocation2 + $0x6d]]
        %v2429 = vstv %s2428
        %v2430 = vmul.f32 %v2429, %v2218
        %v2431 = vmul.f32 %v2429, %v2217
        %v2432 = vadd.f32 %v2426, %v2430
        %v2433 = vadd.f32 %v2427, %v2431
        %s2434 = sld [smem:[#allocation2 + $0x74]]
        %v2435 = vstv %s2434
        %v2436 = vmul.f32 %v2435, %v2223
        %v2437 = vmul.f32 %v2435, %v2222
        %v2438 = vadd.f32 %v2432, %v2436
        %v2439 = vadd.f32 %v2433, %v2437
        %s2440 = sld [smem:[#allocation2 + $0x7b]]
        %v2441 = vstv %s2440
        %v2442 = vmul.f32 %v2441, %v2228
        %v2443 = vmul.f32 %v2441, %v2227
        %v2444 = vadd.f32 %v2438, %v2442
        %v2445 = vadd.f32 %v2439, %v2443
        %s2446 = sld [smem:[#allocation2 + $0x82]]
        %v2447 = vstv %s2446
        %v2448 = vmul.f32 %v2447, %v2233
        %v2449 = vmul.f32 %v2447, %v2232
        %v2450 = vadd.f32 %v2444, %v2448
        %v2451 = vadd.f32 %v2445, %v2449
        %s2452 = sld [smem:[#allocation2 + $0x89]]
        %v2453 = vstv %s2452
        %v2454 = vmul.f32 %v2453, %v2238
        %v2455 = vmul.f32 %v2453, %v2237
        %v2456 = vadd.f32 %v2450, %v2454
        %v2457 = vadd.f32 %v2451, %v2455
        %s2458 = sld [smem:[#allocation2 + $0x90]]
        %v2459 = vstv %s2458
        %v2460 = vmul.f32 %v2459, %v2243
        %v2461 = vmul.f32 %v2459, %v2242
        %v2462 = vadd.f32 %v2456, %v2460
        %v2463 = vadd.f32 %v2457, %v2461
        %2464 = vrot.lane.b32.xlu0 %v2462, 124
        %v2465 = vpop.permute.xlu0 %2464
        %2466 = vrot.lane.b32.xlu0 %v2463, 124
        %v2467 = vpop.permute.xlu0 %2466
        %v2468 = vadd.f32 %v2422, %v2465
        %v2469 = vadd.f32 %v2423, %v2467
        %s2470 = sld [smem:[#allocation2 + $0x67]]
        %v2471 = vstv %s2470
        %v2472 = vmul.f32 %v2471, %v2211
        %v2473 = vmul.f32 %v2471, %v2212
        %s2474 = sld [smem:[#allocation2 + $0x6e]]
        %v2475 = vstv %s2474
        %v2476 = vmul.f32 %v2475, %v2218
        %v2477 = vmul.f32 %v2475, %v2217
        %v2478 = vadd.f32 %v2472, %v2476
        %v2479 = vadd.f32 %v2473, %v2477
        %s2480 = sld [smem:[#allocation2 + $0x75]]
        %v2481 = vstv %s2480
        %v2482 = vmul.f32 %v2481, %v2223
        %v2483 = vmul.f32 %v2481, %v2222
        %v2484 = vadd.f32 %v2478, %v2482
        %v2485 = vadd.f32 %v2479, %v2483
        %s2486 = sld [smem:[#allocation2 + $0x7c]]
        %v2487 = vstv %s2486
        %v2488 = vmul.f32 %v2487, %v2228
        %v2489 = vmul.f32 %v2487, %v2227
        %v2490 = vadd.f32 %v2484, %v2488
        %v2491 = vadd.f32 %v2485, %v2489
        %s2492 = sld [smem:[#allocation2 + $0x83]]
        %v2493 = vstv %s2492
        %v2494 = vmul.f32 %v2493, %v2233
        %v2495 = vmul.f32 %v2493, %v2232
        %v2496 = vadd.f32 %v2490, %v2494
        %v2497 = vadd.f32 %v2491, %v2495
        %s2498 = sld [smem:[#allocation2 + $0x8a]]
        %v2499 = vstv %s2498
        %v2500 = vmul.f32 %v2499, %v2238
        %v2501 = vmul.f32 %v2499, %v2237
        %v2502 = vadd.f32 %v2496, %v2500
        %v2503 = vadd.f32 %v2497, %v2501
        %s2504 = sld [smem:[#allocation2 + $0x91]]
        %v2505 = vstv %s2504
        %v2506 = vmul.f32 %v2505, %v2243
        %v2507 = vmul.f32 %v2505, %v2242
        %v2508 = vadd.f32 %v2502, %v2506
        %v2509 = vadd.f32 %v2503, %v2507
        %2510 = vrot.lane.b32.xlu0 %v2508, 123
        %v2511 = vpop.permute.xlu0 %2510
        %2512 = vrot.lane.b32.xlu0 %v2509, 123
        %v2513 = vpop.permute.xlu0 %2512
        %v2514 = vadd.f32 %v2468, %v2511
        %v2515 = vadd.f32 %v2469, %v2513
        %s2516 = sld [smem:[#allocation2 + $0x68]]
        %v2517 = vstv %s2516
        %v2518 = vmul.f32 %v2517, %v2211
        %v2519 = vmul.f32 %v2517, %v2212
        %s2520 = sld [smem:[#allocation2 + $0x6f]]
        %v2521 = vstv %s2520
        %v2522 = vmul.f32 %v2521, %v2218
        %v2523 = vmul.f32 %v2521, %v2217
        %v2524 = vadd.f32 %v2518, %v2522
        %v2525 = vadd.f32 %v2519, %v2523
        %s2526 = sld [smem:[#allocation2 + $0x76]]
        %v2527 = vstv %s2526
        %v2528 = vmul.f32 %v2527, %v2223
        %v2529 = vmul.f32 %v2527, %v2222
        %v2530 = vadd.f32 %v2524, %v2528
        %v2531 = vadd.f32 %v2525, %v2529
        %s2532 = sld [smem:[#allocation2 + $0x7d]]
        %v2533 = vstv %s2532
        %v2534 = vmul.f32 %v2533, %v2228
        %v2535 = vmul.f32 %v2533, %v2227
        %v2536 = vadd.f32 %v2530, %v2534
        %v2537 = vadd.f32 %v2531, %v2535
        %s2538 = sld [smem:[#allocation2 + $0x84]]
        %v2539 = vstv %s2538
        %v2540 = vmul.f32 %v2539, %v2233
        %v2541 = vmul.f32 %v2539, %v2232
        %v2542 = vadd.f32 %v2536, %v2540
        %v2543 = vadd.f32 %v2537, %v2541
        %s2544 = sld [smem:[#allocation2 + $0x8b]]
        %v2545 = vstv %s2544
        %v2546 = vmul.f32 %v2545, %v2238
        %v2547 = vmul.f32 %v2545, %v2237
        %v2548 = vadd.f32 %v2542, %v2546
        %v2549 = vadd.f32 %v2543, %v2547
        %s2550 = sld [smem:[#allocation2 + $0x92]]
        %v2551 = vstv %s2550
        %v2552 = vmul.f32 %v2551, %v2243
        %v2553 = vmul.f32 %v2551, %v2242
        %v2554 = vadd.f32 %v2548, %v2552
        %v2555 = vadd.f32 %v2549, %v2553
        %2556 = vrot.lane.b32.xlu0 %v2554, 122
        %v2557 = vpop.permute.xlu0 %2556
        %2558 = vrot.lane.b32.xlu0 %v2555, 122
        %v2559 = vpop.permute.xlu0 %2558
        %v2560 = vadd.f32 %v2514, %v2557
        %v2561 = vadd.f32 %v2515, %v2559
        %s2562 = sld [smem:[#allocation2 + $0xf5]]
        %v2563 = vstv %s2562
        %v2564 = vmul.f32 %v2563, %v2211
        %v2565 = vmul.f32 %v2563, %v2212
        %s2566 = sld [smem:[#allocation2 + $0xfc]]
        %v2567 = vstv %s2566
        %v2568 = vmul.f32 %v2567, %v2218
        %v2569 = vmul.f32 %v2567, %v2217
        %v2570 = vadd.f32 %v2564, %v2568
        %v2571 = vadd.f32 %v2565, %v2569
        %s2572 = sld [smem:[#allocation2 + $0x103]]
        %v2573 = vstv %s2572
        %v2574 = vmul.f32 %v2573, %v2223
        %v2575 = vmul.f32 %v2573, %v2222
        %v2576 = vadd.f32 %v2570, %v2574
        %v2577 = vadd.f32 %v2571, %v2575
        %s2578 = sld [smem:[#allocation2 + $0x10a]]
        %v2579 = vstv %s2578
        %v2580 = vmul.f32 %v2579, %v2228
        %v2581 = vmul.f32 %v2579, %v2227
        %v2582 = vadd.f32 %v2576, %v2580
        %v2583 = vadd.f32 %v2577, %v2581
        %s2584 = sld [smem:[#allocation2 + $0x111]]
        %v2585 = vstv %s2584
        %v2586 = vmul.f32 %v2585, %v2233
        %v2587 = vmul.f32 %v2585, %v2232
        %v2588 = vadd.f32 %v2582, %v2586
        %v2589 = vadd.f32 %v2583, %v2587
        %s2590 = sld [smem:[#allocation2 + $0x118]]
        %v2591 = vstv %s2590
        %v2592 = vmul.f32 %v2591, %v2238
        %v2593 = vmul.f32 %v2591, %v2237
        %v2594 = vadd.f32 %v2588, %v2592
        %v2595 = vadd.f32 %v2589, %v2593
        %s2596 = sld [smem:[#allocation2 + $0x11f]]
        %v2597 = vstv %s2596
        %v2598 = vmul.f32 %v2597, %v2243
        %v2599 = vmul.f32 %v2597, %v2242
        %v2600 = vadd.f32 %v2594, %v2598
        %v2601 = vadd.f32 %v2595, %v2599
        %v2602 = vadd.f32 %v1889, %v2600
        %v2603 = vadd.f32 %v1890, %v2601
        %s2604 = sld [smem:[#allocation2 + $0xf6]]
        %v2605 = vstv %s2604
        %v2606 = vmul.f32 %v2605, %v2211
        %v2607 = vmul.f32 %v2605, %v2212
        %s2608 = sld [smem:[#allocation2 + $0xfd]]
        %v2609 = vstv %s2608
        %v2610 = vmul.f32 %v2609, %v2218
        %v2611 = vmul.f32 %v2609, %v2217
        %v2612 = vadd.f32 %v2606, %v2610
        %v2613 = vadd.f32 %v2607, %v2611
        %s2614 = sld [smem:[#allocation2 + $0x104]]
        %v2615 = vstv %s2614
        %v2616 = vmul.f32 %v2615, %v2223
        %v2617 = vmul.f32 %v2615, %v2222
        %v2618 = vadd.f32 %v2612, %v2616
        %v2619 = vadd.f32 %v2613, %v2617
        %s2620 = sld [smem:[#allocation2 + $0x10b]]
        %v2621 = vstv %s2620
        %v2622 = vmul.f32 %v2621, %v2228
        %v2623 = vmul.f32 %v2621, %v2227
        %v2624 = vadd.f32 %v2618, %v2622
        %v2625 = vadd.f32 %v2619, %v2623
        %s2626 = sld [smem:[#allocation2 + $0x112]]
        %v2627 = vstv %s2626
        %v2628 = vmul.f32 %v2627, %v2233
        %v2629 = vmul.f32 %v2627, %v2232
        %v2630 = vadd.f32 %v2624, %v2628
        %v2631 = vadd.f32 %v2625, %v2629
        %s2632 = sld [smem:[#allocation2 + $0x119]]
        %v2633 = vstv %s2632
        %v2634 = vmul.f32 %v2633, %v2238
        %v2635 = vmul.f32 %v2633, %v2237
        %v2636 = vadd.f32 %v2630, %v2634
        %v2637 = vadd.f32 %v2631, %v2635
        %s2638 = sld [smem:[#allocation2 + $0x120]]
        %v2639 = vstv %s2638
        %v2640 = vmul.f32 %v2639, %v2243
        %v2641 = vmul.f32 %v2639, %v2242
        %v2642 = vadd.f32 %v2636, %v2640
        %v2643 = vadd.f32 %v2637, %v2641
        %2644 = vrot.lane.b32.xlu0 %v2642, 127
        %v2645 = vpop.permute.xlu0 %2644
        %2646 = vrot.lane.b32.xlu0 %v2643, 127
        %v2647 = vpop.permute.xlu0 %2646
        %v2648 = vadd.f32 %v2602, %v2645
        %v2649 = vadd.f32 %v2603, %v2647
        %s2650 = sld [smem:[#allocation2 + $0xf7]]
        %v2651 = vstv %s2650
        %v2652 = vmul.f32 %v2651, %v2211
        %v2653 = vmul.f32 %v2651, %v2212
        %s2654 = sld [smem:[#allocation2 + $0xfe]]
        %v2655 = vstv %s2654
        %v2656 = vmul.f32 %v2655, %v2218
        %v2657 = vmul.f32 %v2655, %v2217
        %v2658 = vadd.f32 %v2652, %v2656
        %v2659 = vadd.f32 %v2653, %v2657
        %s2660 = sld [smem:[#allocation2 + $0x105]]
        %v2661 = vstv %s2660
        %v2662 = vmul.f32 %v2661, %v2223
        %v2663 = vmul.f32 %v2661, %v2222
        %v2664 = vadd.f32 %v2658, %v2662
        %v2665 = vadd.f32 %v2659, %v2663
        %s2666 = sld [smem:[#allocation2 + $0x10c]]
        %v2667 = vstv %s2666
        %v2668 = vmul.f32 %v2667, %v2228
        %v2669 = vmul.f32 %v2667, %v2227
        %v2670 = vadd.f32 %v2664, %v2668
        %v2671 = vadd.f32 %v2665, %v2669
        %s2672 = sld [smem:[#allocation2 + $0x113]]
        %v2673 = vstv %s2672
        %v2674 = vmul.f32 %v2673, %v2233
        %v2675 = vmul.f32 %v2673, %v2232
        %v2676 = vadd.f32 %v2670, %v2674
        %v2677 = vadd.f32 %v2671, %v2675
        %s2678 = sld [smem:[#allocation2 + $0x11a]]
        %v2679 = vstv %s2678
        %v2680 = vmul.f32 %v2679, %v2238
        %v2681 = vmul.f32 %v2679, %v2237
        %v2682 = vadd.f32 %v2676, %v2680
        %v2683 = vadd.f32 %v2677, %v2681
        %s2684 = sld [smem:[#allocation2 + $0x121]]
        %v2685 = vstv %s2684
        %v2686 = vmul.f32 %v2685, %v2243
        %v2687 = vmul.f32 %v2685, %v2242
        %v2688 = vadd.f32 %v2682, %v2686
        %v2689 = vadd.f32 %v2683, %v2687
        %2690 = vrot.lane.b32.xlu0 %v2688, 126
        %v2691 = vpop.permute.xlu0 %2690
        %2692 = vrot.lane.b32.xlu0 %v2689, 126
        %v2693 = vpop.permute.xlu0 %2692
        %v2694 = vadd.f32 %v2648, %v2691
        %v2695 = vadd.f32 %v2649, %v2693
        %s2696 = sld [smem:[#allocation2 + $0xf8]]
        %v2697 = vstv %s2696
        %v2698 = vmul.f32 %v2697, %v2211
        %v2699 = vmul.f32 %v2697, %v2212
        %s2700 = sld [smem:[#allocation2 + $0xff]]
        %v2701 = vstv %s2700
        %v2702 = vmul.f32 %v2701, %v2218
        %v2703 = vmul.f32 %v2701, %v2217
        %v2704 = vadd.f32 %v2698, %v2702
        %v2705 = vadd.f32 %v2699, %v2703
        %s2706 = sld [smem:[#allocation2 + $0x106]]
        %v2707 = vstv %s2706
        %v2708 = vmul.f32 %v2707, %v2223
        %v2709 = vmul.f32 %v2707, %v2222
        %v2710 = vadd.f32 %v2704, %v2708
        %v2711 = vadd.f32 %v2705, %v2709
        %s2712 = sld [smem:[#allocation2 + $0x10d]]
        %v2713 = vstv %s2712
        %v2714 = vmul.f32 %v2713, %v2228
        %v2715 = vmul.f32 %v2713, %v2227
        %v2716 = vadd.f32 %v2710, %v2714
        %v2717 = vadd.f32 %v2711, %v2715
        %s2718 = sld [smem:[#allocation2 + $0x114]]
        %v2719 = vstv %s2718
        %v2720 = vmul.f32 %v2719, %v2233
        %v2721 = vmul.f32 %v2719, %v2232
        %v2722 = vadd.f32 %v2716, %v2720
        %v2723 = vadd.f32 %v2717, %v2721
        %s2724 = sld [smem:[#allocation2 + $0x11b]]
        %v2725 = vstv %s2724
        %v2726 = vmul.f32 %v2725, %v2238
        %v2727 = vmul.f32 %v2725, %v2237
        %v2728 = vadd.f32 %v2722, %v2726
        %v2729 = vadd.f32 %v2723, %v2727
        %s2730 = sld [smem:[#allocation2 + $0x122]]
        %v2731 = vstv %s2730
        %v2732 = vmul.f32 %v2731, %v2243
        %v2733 = vmul.f32 %v2731, %v2242
        %v2734 = vadd.f32 %v2728, %v2732
        %v2735 = vadd.f32 %v2729, %v2733
        %2736 = vrot.lane.b32.xlu0 %v2734, 125
        %v2737 = vpop.permute.xlu0 %2736
        %2738 = vrot.lane.b32.xlu0 %v2735, 125
        %v2739 = vpop.permute.xlu0 %2738
        %v2740 = vadd.f32 %v2694, %v2737
        %v2741 = vadd.f32 %v2695, %v2739
        %s2742 = sld [smem:[#allocation2 + $0xf9]]
        %v2743 = vstv %s2742
        %v2744 = vmul.f32 %v2743, %v2211
        %v2745 = vmul.f32 %v2743, %v2212
        %s2746 = sld [smem:[#allocation2 + $0x100]]
        %v2747 = vstv %s2746
        %v2748 = vmul.f32 %v2747, %v2218
        %v2749 = vmul.f32 %v2747, %v2217
        %v2750 = vadd.f32 %v2744, %v2748
        %v2751 = vadd.f32 %v2745, %v2749
        %s2752 = sld [smem:[#allocation2 + $0x107]]
        %v2753 = vstv %s2752
        %v2754 = vmul.f32 %v2753, %v2223
        %v2755 = vmul.f32 %v2753, %v2222
        %v2756 = vadd.f32 %v2750, %v2754
        %v2757 = vadd.f32 %v2751, %v2755
        %s2758 = sld [smem:[#allocation2 + $0x10e]]
        %v2759 = vstv %s2758
        %v2760 = vmul.f32 %v2759, %v2228
        %v2761 = vmul.f32 %v2759, %v2227
        %v2762 = vadd.f32 %v2756, %v2760
        %v2763 = vadd.f32 %v2757, %v2761
        %s2764 = sld [smem:[#allocation2 + $0x115]]
        %v2765 = vstv %s2764
        %v2766 = vmul.f32 %v2765, %v2233
        %v2767 = vmul.f32 %v2765, %v2232
        %v2768 = vadd.f32 %v2762, %v2766
        %v2769 = vadd.f32 %v2763, %v2767
        %s2770 = sld [smem:[#allocation2 + $0x11c]]
        %v2771 = vstv %s2770
        %v2772 = vmul.f32 %v2771, %v2238
        %v2773 = vmul.f32 %v2771, %v2237
        %v2774 = vadd.f32 %v2768, %v2772
        %v2775 = vadd.f32 %v2769, %v2773
        %s2776 = sld [smem:[#allocation2 + $0x123]]
        %v2777 = vstv %s2776
        %v2778 = vmul.f32 %v2777, %v2243
        %v2779 = vmul.f32 %v2777, %v2242
        %v2780 = vadd.f32 %v2774, %v2778
        %v2781 = vadd.f32 %v2775, %v2779
        %2782 = vrot.lane.b32.xlu0 %v2780, 124
        %v2783 = vpop.permute.xlu0 %2782
        %2784 = vrot.lane.b32.xlu0 %v2781, 124
        %v2785 = vpop.permute.xlu0 %2784
        %v2786 = vadd.f32 %v2740, %v2783
        %v2787 = vadd.f32 %v2741, %v2785
        %s2788 = sld [smem:[#allocation2 + $0xfa]]
        %v2789 = vstv %s2788
        %v2790 = vmul.f32 %v2789, %v2211
        %v2791 = vmul.f32 %v2789, %v2212
        %s2792 = sld [smem:[#allocation2 + $0x101]]
        %v2793 = vstv %s2792
        %v2794 = vmul.f32 %v2793, %v2218
        %v2795 = vmul.f32 %v2793, %v2217
        %v2796 = vadd.f32 %v2790, %v2794
        %v2797 = vadd.f32 %v2791, %v2795
        %s2798 = sld [smem:[#allocation2 + $0x108]]
        %v2799 = vstv %s2798
        %v2800 = vmul.f32 %v2799, %v2223
        %v2801 = vmul.f32 %v2799, %v2222
        %v2802 = vadd.f32 %v2796, %v2800
        %v2803 = vadd.f32 %v2797, %v2801
        %s2804 = sld [smem:[#allocation2 + $0x10f]]
        %v2805 = vstv %s2804
        %v2806 = vmul.f32 %v2805, %v2228
        %v2807 = vmul.f32 %v2805, %v2227
        %v2808 = vadd.f32 %v2802, %v2806
        %v2809 = vadd.f32 %v2803, %v2807
        %s2810 = sld [smem:[#allocation2 + $0x116]]
        %v2811 = vstv %s2810
        %v2812 = vmul.f32 %v2811, %v2233
        %v2813 = vmul.f32 %v2811, %v2232
        %v2814 = vadd.f32 %v2808, %v2812
        %v2815 = vadd.f32 %v2809, %v2813
        %s2816 = sld [smem:[#allocation2 + $0x11d]]
        %v2817 = vstv %s2816
        %v2818 = vmul.f32 %v2817, %v2238
        %v2819 = vmul.f32 %v2817, %v2237
        %v2820 = vadd.f32 %v2814, %v2818
        %v2821 = vadd.f32 %v2815, %v2819
        %s2822 = sld [smem:[#allocation2 + $0x124]]
        %v2823 = vstv %s2822
        %v2824 = vmul.f32 %v2823, %v2243
        %v2825 = vmul.f32 %v2823, %v2242
        %v2826 = vadd.f32 %v2820, %v2824
        %v2827 = vadd.f32 %v2821, %v2825
        %2828 = vrot.lane.b32.xlu0 %v2826, 123
        %v2829 = vpop.permute.xlu0 %2828
        %2830 = vrot.lane.b32.xlu0 %v2827, 123
        %v2831 = vpop.permute.xlu0 %2830
        %v2832 = vadd.f32 %v2786, %v2829
        %v2833 = vadd.f32 %v2787, %v2831
        %s2834 = sld [smem:[#allocation2 + $0xfb]]
        %v2835 = vstv %s2834
        %v2836 = vmul.f32 %v2835, %v2211
        %v2837 = vmul.f32 %v2835, %v2212
        %s2838 = sld [smem:[#allocation2 + $0x102]]
        %v2839 = vstv %s2838
        %v2840 = vmul.f32 %v2839, %v2218
        %v2841 = vmul.f32 %v2839, %v2217
        %v2842 = vadd.f32 %v2836, %v2840
        %v2843 = vadd.f32 %v2837, %v2841
        %s2844 = sld [smem:[#allocation2 + $0x109]]
        %v2845 = vstv %s2844
        %v2846 = vmul.f32 %v2845, %v2223
        %v2847 = vmul.f32 %v2845, %v2222
        %v2848 = vadd.f32 %v2842, %v2846
        %v2849 = vadd.f32 %v2843, %v2847
        %s2850 = sld [smem:[#allocation2 + $0x110]]
        %v2851 = vstv %s2850
        %v2852 = vmul.f32 %v2851, %v2228
        %v2853 = vmul.f32 %v2851, %v2227
        %v2854 = vadd.f32 %v2848, %v2852
        %v2855 = vadd.f32 %v2849, %v2853
        %s2856 = sld [smem:[#allocation2 + $0x117]]
        %v2857 = vstv %s2856
        %v2858 = vmul.f32 %v2857, %v2233
        %v2859 = vmul.f32 %v2857, %v2232
        %v2860 = vadd.f32 %v2854, %v2858
        %v2861 = vadd.f32 %v2855, %v2859
        %s2862 = sld [smem:[#allocation2 + $0x11e]]
        %v2863 = vstv %s2862
        %v2864 = vmul.f32 %v2863, %v2238
        %v2865 = vmul.f32 %v2863, %v2237
        %v2866 = vadd.f32 %v2860, %v2864
        %v2867 = vadd.f32 %v2861, %v2865
        %s2868 = sld [smem:[#allocation2 + $0x125]]
        %v2869 = vstv %s2868
        %v2870 = vmul.f32 %v2869, %v2243
        %v2871 = vmul.f32 %v2869, %v2242
        %v2872 = vadd.f32 %v2866, %v2870
        %v2873 = vadd.f32 %v2867, %v2871
        %2874 = vrot.lane.b32.xlu0 %v2872, 122
        %v2875 = vpop.permute.xlu0 %2874
        %2876 = vrot.lane.b32.xlu0 %v2873, 122
        %v2877 = vpop.permute.xlu0 %2876
        %v2878 = vadd.f32 %v2832, %v2875
        %v2879 = vadd.f32 %v2833, %v2877
        %s2880 = sld [smem:[#allocation2 + $0x188]]
        %v2881 = vstv %s2880
        %v2882 = vmul.f32 %v2881, %v2211
        %v2883 = vmul.f32 %v2881, %v2212
        %s2884 = sld [smem:[#allocation2 + $0x18f]]
        %v2885 = vstv %s2884
        %v2886 = vmul.f32 %v2885, %v2218
        %v2887 = vmul.f32 %v2885, %v2217
        %v2888 = vadd.f32 %v2882, %v2886
        %v2889 = vadd.f32 %v2883, %v2887
        %s2890 = sld [smem:[#allocation2 + $0x196]]
        %v2891 = vstv %s2890
        %v2892 = vmul.f32 %v2891, %v2223
        %v2893 = vmul.f32 %v2891, %v2222
        %v2894 = vadd.f32 %v2888, %v2892
        %v2895 = vadd.f32 %v2889, %v2893
        %s2896 = sld [smem:[#allocation2 + $0x19d]]
        %v2897 = vstv %s2896
        %v2898 = vmul.f32 %v2897, %v2228
        %v2899 = vmul.f32 %v2897, %v2227
        %v2900 = vadd.f32 %v2894, %v2898
        %v2901 = vadd.f32 %v2895, %v2899
        %s2902 = sld [smem:[#allocation2 + $0x1a4]]
        %v2903 = vstv %s2902
        %v2904 = vmul.f32 %v2903, %v2233
        %v2905 = vmul.f32 %v2903, %v2232
        %v2906 = vadd.f32 %v2900, %v2904
        %v2907 = vadd.f32 %v2901, %v2905
        %s2908 = sld [smem:[#allocation2 + $0x1ab]]
        %v2909 = vstv %s2908
        %v2910 = vmul.f32 %v2909, %v2238
        %v2911 = vmul.f32 %v2909, %v2237
        %v2912 = vadd.f32 %v2906, %v2910
        %v2913 = vadd.f32 %v2907, %v2911
        %s2914 = sld [smem:[#allocation2 + $0x1b2]]
        %v2915 = vstv %s2914
        %v2916 = vmul.f32 %v2915, %v2243
        %v2917 = vmul.f32 %v2915, %v2242
        %v2918 = vadd.f32 %v2912, %v2916
        %v2919 = vadd.f32 %v2913, %v2917
        %v2920 = vadd.f32 %v2207, %v2918
        %v2921 = vadd.f32 %v2208, %v2919
        %s2922 = sld [smem:[#allocation2 + $0x189]]
        %v2923 = vstv %s2922
        %v2924 = vmul.f32 %v2923, %v2211
        %v2925 = vmul.f32 %v2923, %v2212
        %s2926 = sld [smem:[#allocation2 + $0x190]]
        %v2927 = vstv %s2926
        %v2928 = vmul.f32 %v2927, %v2218
        %v2929 = vmul.f32 %v2927, %v2217
        %v2930 = vadd.f32 %v2924, %v2928
        %v2931 = vadd.f32 %v2925, %v2929
        %s2932 = sld [smem:[#allocation2 + $0x197]]
        %v2933 = vstv %s2932
        %v2934 = vmul.f32 %v2933, %v2223
        %v2935 = vmul.f32 %v2933, %v2222
        %v2936 = vadd.f32 %v2930, %v2934
        %v2937 = vadd.f32 %v2931, %v2935
        %s2938 = sld [smem:[#allocation2 + $0x19e]]
        %v2939 = vstv %s2938
        %v2940 = vmul.f32 %v2939, %v2228
        %v2941 = vmul.f32 %v2939, %v2227
        %v2942 = vadd.f32 %v2936, %v2940
        %v2943 = vadd.f32 %v2937, %v2941
        %s2944 = sld [smem:[#allocation2 + $0x1a5]]
        %v2945 = vstv %s2944
        %v2946 = vmul.f32 %v2945, %v2233
        %v2947 = vmul.f32 %v2945, %v2232
        %v2948 = vadd.f32 %v2942, %v2946
        %v2949 = vadd.f32 %v2943, %v2947
        %s2950 = sld [smem:[#allocation2 + $0x1ac]]
        %v2951 = vstv %s2950
        %v2952 = vmul.f32 %v2951, %v2238
        %v2953 = vmul.f32 %v2951, %v2237
        %v2954 = vadd.f32 %v2948, %v2952
        %v2955 = vadd.f32 %v2949, %v2953
        %s2956 = sld [smem:[#allocation2 + $0x1b3]]
        %v2957 = vstv %s2956
        %v2958 = vmul.f32 %v2957, %v2243
        %v2959 = vmul.f32 %v2957, %v2242
        %v2960 = vadd.f32 %v2954, %v2958
        %v2961 = vadd.f32 %v2955, %v2959
        %2962 = vrot.lane.b32.xlu0 %v2960, 127
        %v2963 = vpop.permute.xlu0 %2962
        %2964 = vrot.lane.b32.xlu0 %v2961, 127
        %v2965 = vpop.permute.xlu0 %2964
        %v2966 = vadd.f32 %v2920, %v2963
        %v2967 = vadd.f32 %v2921, %v2965
        %s2968 = sld [smem:[#allocation2 + $0x18a]]
        %v2969 = vstv %s2968
        %v2970 = vmul.f32 %v2969, %v2211
        %v2971 = vmul.f32 %v2969, %v2212
        %s2972 = sld [smem:[#allocation2 + $0x191]]
        %v2973 = vstv %s2972
        %v2974 = vmul.f32 %v2973, %v2218
        %v2975 = vmul.f32 %v2973, %v2217
        %v2976 = vadd.f32 %v2970, %v2974
        %v2977 = vadd.f32 %v2971, %v2975
        %s2978 = sld [smem:[#allocation2 + $0x198]]
        %v2979 = vstv %s2978
        %v2980 = vmul.f32 %v2979, %v2223
        %v2981 = vmul.f32 %v2979, %v2222
        %v2982 = vadd.f32 %v2976, %v2980
        %v2983 = vadd.f32 %v2977, %v2981
        %s2984 = sld [smem:[#allocation2 + $0x19f]]
        %v2985 = vstv %s2984
        %v2986 = vmul.f32 %v2985, %v2228
        %v2987 = vmul.f32 %v2985, %v2227
        %v2988 = vadd.f32 %v2982, %v2986
        %v2989 = vadd.f32 %v2983, %v2987
        %s2990 = sld [smem:[#allocation2 + $0x1a6]]
        %v2991 = vstv %s2990
        %v2992 = vmul.f32 %v2991, %v2233
        %v2993 = vmul.f32 %v2991, %v2232
        %v2994 = vadd.f32 %v2988, %v2992
        %v2995 = vadd.f32 %v2989, %v2993
        %s2996 = sld [smem:[#allocation2 + $0x1ad]]
        %v2997 = vstv %s2996
        %v2998 = vmul.f32 %v2997, %v2238
        %v2999 = vmul.f32 %v2997, %v2237
        %v3000 = vadd.f32 %v2994, %v2998
        %v3001 = vadd.f32 %v2995, %v2999
        %s3002 = sld [smem:[#allocation2 + $0x1b4]]
        %v3003 = vstv %s3002
        %v3004 = vmul.f32 %v3003, %v2243
        %v3005 = vmul.f32 %v3003, %v2242
        %v3006 = vadd.f32 %v3000, %v3004
        %v3007 = vadd.f32 %v3001, %v3005
        %3008 = vrot.lane.b32.xlu0 %v3006, 126
        %v3009 = vpop.permute.xlu0 %3008
        %3010 = vrot.lane.b32.xlu0 %v3007, 126
        %v3011 = vpop.permute.xlu0 %3010
        %v3012 = vadd.f32 %v2966, %v3009
        %v3013 = vadd.f32 %v2967, %v3011
        %s3014 = sld [smem:[#allocation2 + $0x18b]]
        %v3015 = vstv %s3014
        %v3016 = vmul.f32 %v3015, %v2211
        %v3017 = vmul.f32 %v3015, %v2212
        %s3018 = sld [smem:[#allocation2 + $0x192]]
        %v3019 = vstv %s3018
        %v3020 = vmul.f32 %v3019, %v2218
        %v3021 = vmul.f32 %v3019, %v2217
        %v3022 = vadd.f32 %v3016, %v3020
        %v3023 = vadd.f32 %v3017, %v3021
        %s3024 = sld [smem:[#allocation2 + $0x199]]
        %v3025 = vstv %s3024
        %v3026 = vmul.f32 %v3025, %v2223
        %v3027 = vmul.f32 %v3025, %v2222
        %v3028 = vadd.f32 %v3022, %v3026
        %v3029 = vadd.f32 %v3023, %v3027
        %s3030 = sld [smem:[#allocation2 + $0x1a0]]
        %v3031 = vstv %s3030
        %v3032 = vmul.f32 %v3031, %v2228
        %v3033 = vmul.f32 %v3031, %v2227
        %v3034 = vadd.f32 %v3028, %v3032
        %v3035 = vadd.f32 %v3029, %v3033
        %s3036 = sld [smem:[#allocation2 + $0x1a7]]
        %v3037 = vstv %s3036
        %v3038 = vmul.f32 %v3037, %v2233
        %v3039 = vmul.f32 %v3037, %v2232
        %v3040 = vadd.f32 %v3034, %v3038
        %v3041 = vadd.f32 %v3035, %v3039
        %s3042 = sld [smem:[#allocation2 + $0x1ae]]
        %v3043 = vstv %s3042
        %v3044 = vmul.f32 %v3043, %v2238
        %v3045 = vmul.f32 %v3043, %v2237
        %v3046 = vadd.f32 %v3040, %v3044
        %v3047 = vadd.f32 %v3041, %v3045
        %s3048 = sld [smem:[#allocation2 + $0x1b5]]
        %v3049 = vstv %s3048
        %v3050 = vmul.f32 %v3049, %v2243
        %v3051 = vmul.f32 %v3049, %v2242
        %v3052 = vadd.f32 %v3046, %v3050
        %v3053 = vadd.f32 %v3047, %v3051
        %3054 = vrot.lane.b32.xlu0 %v3052, 125
        %v3055 = vpop.permute.xlu0 %3054
        %3056 = vrot.lane.b32.xlu0 %v3053, 125
        %v3057 = vpop.permute.xlu0 %3056
        %v3058 = vadd.f32 %v3012, %v3055
        %v3059 = vadd.f32 %v3013, %v3057
        %s3060 = sld [smem:[#allocation2 + $0x18c]]
        %v3061 = vstv %s3060
        %v3062 = vmul.f32 %v3061, %v2211
        %v3063 = vmul.f32 %v3061, %v2212
        %s3064 = sld [smem:[#allocation2 + $0x193]]
        %v3065 = vstv %s3064
        %v3066 = vmul.f32 %v3065, %v2218
        %v3067 = vmul.f32 %v3065, %v2217
        %v3068 = vadd.f32 %v3062, %v3066
        %v3069 = vadd.f32 %v3063, %v3067
        %s3070 = sld [smem:[#allocation2 + $0x19a]]
        %v3071 = vstv %s3070
        %v3072 = vmul.f32 %v3071, %v2223
        %v3073 = vmul.f32 %v3071, %v2222
        %v3074 = vadd.f32 %v3068, %v3072
        %v3075 = vadd.f32 %v3069, %v3073
        %s3076 = sld [smem:[#allocation2 + $0x1a1]]
        %v3077 = vstv %s3076
        %v3078 = vmul.f32 %v3077, %v2228
        %v3079 = vmul.f32 %v3077, %v2227
        %v3080 = vadd.f32 %v3074, %v3078
        %v3081 = vadd.f32 %v3075, %v3079
        %s3082 = sld [smem:[#allocation2 + $0x1a8]]
        %v3083 = vstv %s3082
        %v3084 = vmul.f32 %v3083, %v2233
        %v3085 = vmul.f32 %v3083, %v2232
        %v3086 = vadd.f32 %v3080, %v3084
        %v3087 = vadd.f32 %v3081, %v3085
        %s3088 = sld [smem:[#allocation2 + $0x1af]]
        %v3089 = vstv %s3088
        %v3090 = vmul.f32 %v3089, %v2238
        %v3091 = vmul.f32 %v3089, %v2237
        %v3092 = vadd.f32 %v3086, %v3090
        %v3093 = vadd.f32 %v3087, %v3091
        %s3094 = sld [smem:[#allocation2 + $0x1b6]]
        %v3095 = vstv %s3094
        %v3096 = vmul.f32 %v3095, %v2243
        %v3097 = vmul.f32 %v3095, %v2242
        %v3098 = vadd.f32 %v3092, %v3096
        %v3099 = vadd.f32 %v3093, %v3097
        %3100 = vrot.lane.b32.xlu0 %v3098, 124
        %v3101 = vpop.permute.xlu0 %3100
        %3102 = vrot.lane.b32.xlu0 %v3099, 124
        %v3103 = vpop.permute.xlu0 %3102
        %v3104 = vadd.f32 %v3058, %v3101
        %v3105 = vadd.f32 %v3059, %v3103
        %s3106 = sld [smem:[#allocation2 + $0x18d]]
        %v3107 = vstv %s3106
        %v3108 = vmul.f32 %v3107, %v2211
        %v3109 = vmul.f32 %v3107, %v2212
        %s3110 = sld [smem:[#allocation2 + $0x194]]
        %v3111 = vstv %s3110
        %v3112 = vmul.f32 %v3111, %v2218
        %v3113 = vmul.f32 %v3111, %v2217
        %v3114 = vadd.f32 %v3108, %v3112
        %v3115 = vadd.f32 %v3109, %v3113
        %s3116 = sld [smem:[#allocation2 + $0x19b]]
        %v3117 = vstv %s3116
        %v3118 = vmul.f32 %v3117, %v2223
        %v3119 = vmul.f32 %v3117, %v2222
        %v3120 = vadd.f32 %v3114, %v3118
        %v3121 = vadd.f32 %v3115, %v3119
        %s3122 = sld [smem:[#allocation2 + $0x1a2]]
        %v3123 = vstv %s3122
        %v3124 = vmul.f32 %v3123, %v2228
        %v3125 = vmul.f32 %v3123, %v2227
        %v3126 = vadd.f32 %v3120, %v3124
        %v3127 = vadd.f32 %v3121, %v3125
        %s3128 = sld [smem:[#allocation2 + $0x1a9]]
        %v3129 = vstv %s3128
        %v3130 = vmul.f32 %v3129, %v2233
        %v3131 = vmul.f32 %v3129, %v2232
        %v3132 = vadd.f32 %v3126, %v3130
        %v3133 = vadd.f32 %v3127, %v3131
        %s3134 = sld [smem:[#allocation2 + $0x1b0]]
        %v3135 = vstv %s3134
        %v3136 = vmul.f32 %v3135, %v2238
        %v3137 = vmul.f32 %v3135, %v2237
        %v3138 = vadd.f32 %v3132, %v3136
        %v3139 = vadd.f32 %v3133, %v3137
        %s3140 = sld [smem:[#allocation2 + $0x1b7]]
        %v3141 = vstv %s3140
        %v3142 = vmul.f32 %v3141, %v2243
        %v3143 = vmul.f32 %v3141, %v2242
        %v3144 = vadd.f32 %v3138, %v3142
        %v3145 = vadd.f32 %v3139, %v3143
        %3146 = vrot.lane.b32.xlu0 %v3144, 123
        %v3147 = vpop.permute.xlu0 %3146
        %3148 = vrot.lane.b32.xlu0 %v3145, 123
        %v3149 = vpop.permute.xlu0 %3148
        %v3150 = vadd.f32 %v3104, %v3147
        %v3151 = vadd.f32 %v3105, %v3149
        %s3152 = sld [smem:[#allocation2 + $0x18e]]
        %v3153 = vstv %s3152
        %v3154 = vmul.f32 %v3153, %v2211
        %v3155 = vmul.f32 %v3153, %v2212
        %s3156 = sld [smem:[#allocation2 + $0x195]]
        %v3157 = vstv %s3156
        %v3158 = vmul.f32 %v3157, %v2218
        %v3159 = vmul.f32 %v3157, %v2217
        %v3160 = vadd.f32 %v3154, %v3158
        %v3161 = vadd.f32 %v3155, %v3159
        %s3162 = sld [smem:[#allocation2 + $0x19c]]
        %v3163 = vstv %s3162
        %v3164 = vmul.f32 %v3163, %v2223
        %v3165 = vmul.f32 %v3163, %v2222
        %v3166 = vadd.f32 %v3160, %v3164
        %v3167 = vadd.f32 %v3161, %v3165
        %s3168 = sld [smem:[#allocation2 + $0x1a3]]
        %v3169 = vstv %s3168
        %v3170 = vmul.f32 %v3169, %v2228
        %v3171 = vmul.f32 %v3169, %v2227
        %v3172 = vadd.f32 %v3166, %v3170
        %v3173 = vadd.f32 %v3167, %v3171
        %s3174 = sld [smem:[#allocation2 + $0x1aa]]
        %v3175 = vstv %s3174
        %v3176 = vmul.f32 %v3175, %v2233
        %v3177 = vmul.f32 %v3175, %v2232
        %v3178 = vadd.f32 %v3172, %v3176
        %v3179 = vadd.f32 %v3173, %v3177
        %s3180 = sld [smem:[#allocation2 + $0x1b1]]
        %v3181 = vstv %s3180
        %v3182 = vmul.f32 %v3181, %v2238
        %v3183 = vmul.f32 %v3181, %v2237
        %v3184 = vadd.f32 %v3178, %v3182
        %v3185 = vadd.f32 %v3179, %v3183
        %s3186 = sld [smem:[#allocation2 + $0x1b8]]
        %v3187 = vstv %s3186
        %v3188 = vmul.f32 %v3187, %v2243
        %v3189 = vmul.f32 %v3187, %v2242
        %v3190 = vadd.f32 %v3184, %v3188
        %v3191 = vadd.f32 %v3185, %v3189
        %3192 = vrot.lane.b32.xlu0 %v3190, 122
        %v3193 = vpop.permute.xlu0 %3192
        %3194 = vrot.lane.b32.xlu0 %v3191, 122
        %v3195 = vpop.permute.xlu0 %3194
        %v3196 = vadd.f32 %v3150, %v3193
        %v3197 = vadd.f32 %v3151, %v3195
        %s3198 = sld [smem:[#allocation7]]
        %v3199 = vstv %s3198
        %v3200 = vadd.f32 %v2560, %v3199
        %v3201 = vadd.f32 %v2561, %v3199
        %v3202 = vtanh.pop %v3200
        %v3203 = vtanh.pop %v3201
        %3204 = vst [vmem:[%s227] sm:$0xff] %v3202
        %3205 = vst [vmem:[%s227 + $0x8] sm:$0xff] %v3203
        %s3206 = sld [smem:[#allocation7 + $0x1]]
        %v3207 = vstv %s3206
        %v3208 = vadd.f32 %v2878, %v3207
        %v3209 = vadd.f32 %v2879, %v3207
        %v3210 = vtanh.pop %v3208
        %v3211 = vtanh.pop %v3209
        %s3212 = scalar_lea.vmem %s227, 16 [#allocation9]
        %3213 = vst [vmem:[%s3212] sm:$0xff] %v3210
        %3214 = vst [vmem:[%s3212 + $0x8] sm:$0xff] %v3211
        %s3215 = sld [smem:[#allocation7 + $0x2]]
        %v3216 = vstv %s3215
        %v3217 = vadd.f32 %v3196, %v3216
        %v3218 = vadd.f32 %v3197, %v3216
        %v3219 = vtanh.pop %v3217
        %v3220 = vtanh.pop %v3218
        %s3221 = scalar_lea.vmem %s227, 32 [#allocation9]
        %3222 = vst [vmem:[%s3221] sm:$0xff] %v3219
        %3223 = vst [vmem:[%s3221 + $0x8] sm:$0xff] %v3220
        %s3224 = sand.u32 %s112, 1
        %s3225 = scalar_lea.sflag [#allocation4], %s3224
        %s3226 = sand.u32 %s112, 1
        %s3227 = smul.addr %s3226, 48
        %s3228 = scalar_lea.vmem [#allocation9], %s3227
        // Predicated region
        $region45: #{tpu_custom_call.1} parent=31 // pred_check
          %p3229 = pneg %p122
        $region46: #{tpu_custom_call.1} parent=31 // pred_check_branch
          %3231 = sbr.rel (%p3229) target = $region48
        $region47: #{tpu_custom_call.1} parent=31 // pred_region
          #allocation11 [shape = 'u32[6]{0}', space=smem, size = 0x18, scoped, tag = 'DMA stride descriptor']
          %s3232 = smul.u32 2, %s27
          %s3234 = ssub.s32 768, 768
          %3235 = vsyncadd %s3225, %s3234
          %s3236 = smul.addr %s26, 12
          %s3237 = sadd.s32 %s3232, %s3236
          %s3238 = smul.addr %s3237, 128
          %s3239 = scalar_lea.hbm %s3, %s3238
          %s3241 = sshll.u32 1, 14
          %s3242 = sxor.u32 4294967295, %s3241
          %s3245 = sshll.u32 7, 18
          %s3246 = sxor.u32 4294967295, %s3245
          %s3247 = sand.u32 0, %s3246
          %s3249 = sor.u32 %s3247, 0
          %s3250 = sshll.u32 %s3228, 4
          %s3251 = int_to_ptr.vmem [resolvable:$true] %s3250
          %3257 = sst [smem:[#allocation11]] 256
          %s3258 = scalar_lea.smem [#allocation11], 1
          %3259 = sst [smem:[%s3258]] 512
          %s3260 = scalar_lea.smem [#allocation11], 2
          %3261 = sst [smem:[%s3260]] 2
          %s3262 = scalar_lea.smem [#allocation11], 3
          %3263 = sst [smem:[%s3262]] 128
          %s3264 = scalar_lea.smem [#allocation11], 4
          %3265 = sst [smem:[%s3264]] 128
          %s3266 = scalar_lea.smem [#allocation11], 5
          %3267 = sst [smem:[%s3266]] 8
          %3269 = dma.general %s3251, 768, %s3239, %s3225, 131072, [#allocation11], %s3249, 0
        $region48: #{tpu_custom_call.1} parent=31 // pred_fallthru
          _
      $region32: #{tpu_custom_call.1} parent=5 // pred_fallthru
        _
      %p3270 = scmp.le.s32.totalorder 2, %s17
      // Predicated region
      $region49: #{tpu_custom_call.1} parent=5 // pred_check
        %p3271 = pneg %p3270
      $region50: #{tpu_custom_call.1} parent=5 // pred_check_branch
        %3273 = sbr.rel (%p3271) target = $region52
      $region51: #{tpu_custom_call.1} parent=5 // pred_region
        %s3274 = ssub.s32 %s17, 2
        // Predicated region
        $region53: #{tpu_custom_call.1} parent=51 // pred_check
          %p3275 = pneg %p128
        $region54: #{tpu_custom_call.1} parent=51 // pred_check_branch
          %3277 = sbr.rel (%p3275) target = $region56
        $region55: #{tpu_custom_call.1} parent=51 // pred_region
          %s3278 = sand.u32 %s113, 1
          %s3279 = scalar_lea.sflag [#allocation4], %s3278
          %s3280 = sand.u32 %s113, 1
          %s3281 = smul.addr %s3280, 48
          %s3282 = scalar_lea.vmem [#allocation9], %s3281
          %3283 = dma.done %s3279, 768
        $region56: #{tpu_custom_call.1} parent=51 // pred_fallthru
          _
      $region52: #{tpu_custom_call.1} parent=5 // pred_fallthru
        _
    $region6: #{tpu_custom_call.1} parent=1 // loop_footer
      %s21 = sadd.s32 1, %s17
    $region7: #{tpu_custom_call.1} parent=1 // loop_footer_branch
      %16 = sbr.rel target = $region3
    $region8: #{tpu_custom_call.1} parent=1 // loop_exit
      _
    %3284 = vsyncpa [#allocation3], 1
    %s3285 = scalar_lea.sflag [#allocation3], 1
    %3286 = vsyncpa %s3285, 1
    %3287 = vsyncpa [#allocation4], 1
    %s3288 = scalar_lea.sflag [#allocation4], 1
    %3289 = vsyncpa %s3288, 1
    %3290 = vsyncpa [#allocation5], 1
    %s3291 = scalar_lea.sflag [#allocation5], 1
    %3292 = vsyncpa %s3291, 1
    %3293 = vsyncpa [#allocation6], 1
    %s3294 = scalar_lea.sflag [#allocation6], 1
    %3295 = vsyncpa %s3294, 1

</llo_original>
